<compile_context>
chip_gen: v6e
topology: v6e:2x2x1
jax: 0.10.0
libtpu: 0.0.40
codegen_flags: <defaults>
</compile_context>

<pallas_src>
import functools

import numpy as np
import jax
import jax.numpy as jnp
from jax import lax
from jax.experimental import pallas as pl
from jax.experimental.pallas import tpu as pltpu  # noqa: F401


# ---------------------------------------------------------------------------
# Model hyper-parameters (small, consistent with the module's forward pass).
# ---------------------------------------------------------------------------
B, S = 2, 8                 # batch, sequence length
EMBED_DIM = 32              # config.dim
HIDDEN_DIM = 64             # config.hidden_dim
N_LAYERS = 2                # config.n_layers
N_HEADS = 4                 # config.n_heads
NUM_SEQ_CLASSES = 3         # classifier1 out_features (per-element head)
NUM_CLASSES = 5             # classifier2 out_features (sequence head)
OUT_PAD = 4 * EMBED_DIM     # lane-dense slab width (= 128 at D=32)
LN_EPS = 1e-12              # DistilBERT LayerNorm eps
NEG_INF = float(np.finfo(np.float32).min)   # torch.finfo(float32).min


def _gelu(x):
    # TODO(synk): HF DistilBERT uses the exact erf-based GELU; the tanh
    # approximation is used here (erf lowering not guaranteed in Mosaic).
    c = float(np.sqrt(2.0 / np.pi))
    return 0.5 * x * (1.0 + jnp.tanh(c * (x + 0.044715 * x * x * x)))


def _layer_norm(x, g, b):           # kernel version: rsqrt -> EUP slot
    mu = jnp.mean(x, axis=-1, keepdims=True)
    var = jnp.mean((x - mu) ** 2, axis=-1, keepdims=True)
    return (x - mu) * lax.rsqrt(var + LN_EPS) * g + b


def _layer_norm_ref(x, g, b):       # reference version: plain sqrt/divide
    mu = jnp.mean(x, axis=-1, keepdims=True)
    var = jnp.mean((x - mu) ** 2, axis=-1, keepdims=True)
    return (x - mu) / jnp.sqrt(var + LN_EPS) * g + b


# ---------------------------------------------------------------------------
# Pallas kernel: full forward pass for the whole batch in one invocation.
# ---------------------------------------------------------------------------
def _dual_transformer_kernel(
    x_ref,        # (B*S, D)        fused token matrix
    bias_ref,     # (B*S, B*S)      additive mask bias (0 / f32.min, block-diag)
    hm_ref,       # (H, D)          per-head lane masks (1.0 on head-h lanes)
    attn_w_ref,   # (L+1, D, 4D)    [Q*scale | K | V | O]; slot L = classifier W
    b_slab_ref,   # (L+1, 8, 4D)    biases + LN params; slot L row 0 = cls bias
    ffn_w_ref,    # (L, D+H, H)     rows [0:D)=f1_w, rows [D:D+H)=f2_w (padded)
    out_ref,      # (B*S, 4D)       lane-dense fused logits
    *, n_layers, n_heads):
  x = x_ref[...]
  bias = bias_ref[...]
  hm = hm_ref[...]
  dim = x.shape[-1]

  for l in range(n_layers):          # static (unrolled) layer loop
    w = attn_w_ref[l]                # (D, 4D)
    bl = b_slab_ref[l]               # (8, 4D)

    # Fused QKV projection: one (B*S, D) @ (D, 3D) matmul + one bias add.
    # The 1/sqrt(dh) attention scale is folded into the Q columns/bias.
    qkv = jnp.dot(x, w[:, :3 * dim],
                  preferred_element_type=jnp.float32) + bl[0:1, :3 * dim]
    q = qkv[:, :dim]
    k = qkv[:, dim:2 * dim]
    v = qkv[:, 2 * dim:3 * dim]

    # Heads stay on the lane axis: per head, lane-mask Q (and V); the score
    # contraction over D lanes then only picks up head h's dh lanes.  Cross
    # batch entries are killed by the additive -inf in `bias`, so the fused
    # (B*S, B*S) score matrix never mixes batches.
    ctx = None
    for h in range(n_heads):
      hm_h = hm[h:h + 1, :]                                   # (1, D)
      s = lax.dot_general(q * hm_h, k, (((1,), (1,)), ((), ())),
                          preferred_element_type=jnp.float32)  # (BS, BS)
      s = s + bias
      s = s - jnp.max(s, axis=-1, keepdims=True)
      p = jnp.exp(s)
      p = p * pl.reciprocal(jnp.sum(p, axis=-1, keepdims=True), approx=True)
      # attention_dropout: identity in inference mode
      c = jnp.dot(p, v * hm_h, preferred_element_type=jnp.float32)  # (BS, D)
      ctx = c if ctx is None else ctx + c   # lands in head-h lanes only

    # Output projection + sa_layer_norm.
    sa = jnp.dot(ctx, w[:, 3 * dim:],
                 preferred_element_type=jnp.float32) + bl[0:1, 3 * dim:]
    x = _layer_norm(sa + x, bl[1:2, :dim], bl[2:3, :dim])

    # FFN + output_layer_norm (FFN dropout: identity in inference mode).
    fw = ffn_w_ref[l]                 # (D+H, H)
    hid = fw.shape[-1]
    hmid = _gelu(jnp.dot(x, fw[:dim, :],
                         preferred_element_type=jnp.float32) + bl[3:4, :hid])
    ffn = jnp.dot(hmid, fw[dim:, :dim],
                  preferred_element_type=jnp.float32) + bl[4:5, :dim]
    x = _layer_norm(ffn + x, bl[5:6, :dim], bl[6:7, :dim])

  # Both classifier heads fused into one lane-dense (D, 4D) matmul (columns
  # [0:C1) = classifier1, [C1:C1+C2) = classifier2, rest zero) -> a single
  # unmasked full-lane store.
  cw = attn_w_ref[n_layers]
  cb = b_slab_ref[n_layers]
  out_ref[...] = (jnp.dot(x, cw, preferred_element_type=jnp.float32)
                  + cb[0:1, :])


# ---------------------------------------------------------------------------
# One-time weight preparation: scale-fold, QKV/O fusion, slab packing.
# ---------------------------------------------------------------------------
def prepare_params(params, *, n_heads=N_HEADS, out_pad=OUT_PAD):
  L, D, _ = params["q_w"].shape
  H = params["f1_w"].shape[-1]
  dh = D // n_heads
  scale = jnp.float32(1.0 / np.sqrt(dh))
  assert 4 * D == out_pad and H >= D

  # Attention weight slab (L+1, D, 4D): [Q*scale | K | V | O]; slot L holds the
  # fused, zero-padded classifier weight.
  w_layers = jnp.concatenate(
      [params["q_w"] * scale, params["k_w"], params["v_w"], params["o_w"]],
      axis=2)
  c1, c2 = params["c1_w"], params["c2_w"]
  ncls = c1.shape[1] + c2.shape[1]
  assert ncls <= out_pad
  cls_w = jnp.concatenate(
      [c1, c2, jnp.zeros((D, out_pad - ncls), jnp.float32)], axis=1)
  attn_w = jnp.concatenate([w_layers, cls_w[None]], axis=0)

  # Bias / LN slab (L+1, 8, 4D).
  def pad_lanes(a):
    return jnp.pad(a, ((0, 0), (0, 0), (0, out_pad - a.shape[-1])))
  rows = [
      jnp.concatenate([params["q_b"] * scale, params["k_b"], params["v_b"],
                       params["o_b"]], axis=2),                # row 0
      pad_lanes(params["ln1_g"]), pad_lanes(params["ln1_b"]),  # rows 1, 2
      pad_lanes(params["f1_b"]), pad_lanes(params["f2_b"]),    # rows 3, 4
      pad_lanes(params["ln2_g"]), pad_lanes(params["ln2_b"]),  # rows 5, 6
      jnp.zeros((L, 1, out_pad), jnp.float32),                 # row 7
  ]
  b_layers = jnp.concatenate(rows, axis=1)                     # (L, 8, 4D)
  cls_b = jnp.concatenate([params["c1_b"], params["c2_b"]], axis=1)
  cls_b = jnp.pad(cls_b, ((0, 0), (0, out_pad - cls_b.shape[-1])))
  cls_b = jnp.concatenate([cls_b, jnp.zeros((7, out_pad), jnp.float32)], axis=0)
  b_slab = jnp.concatenate([b_layers, cls_b[None]], axis=0)    # (L+1, 8, 4D)

  # FFN weight slab (L, D+H, H): rows [0:D) = f1_w, rows [D:D+H) = f2_w padded.
  f2_pad = jnp.pad(params["f2_w"], ((0, 0), (0, 0), (0, H - D)))
  ffn_w = jnp.concatenate([params["f1_w"], f2_pad], axis=1)

  # Per-head lane masks (n_heads, D).
  lane = np.arange(D)
  head_mask = np.stack(
      [((lane >= h * dh) & (lane < (h + 1) * dh)).astype(np.float32)
       for h in range(n_heads)], axis=0)

  return {"attn_w": attn_w, "b_slab": b_slab, "ffn_w": ffn_w,
          "head_mask": jnp.asarray(head_mask)}


# ---------------------------------------------------------------------------
# Wrapper: single pallas_call, no grid, everything VMEM-resident.
# ---------------------------------------------------------------------------
def dual_transformer_v2(x, mask, prepared, *,
                        num_seq_classes=NUM_SEQ_CLASSES, num_classes=NUM_CLASSES):
  """Forward of DualTransformerV2.  x: (B, S, D), mask: (B, S) (1=attend)."""
  b, s, d = x.shape
  x2d = x.astype(jnp.float32).reshape(b * s, d)

  # Additive attention-mask bias built with plain JAX outside the kernel:
  # 0 where (same batch AND key attended), float32.min otherwise (this also
  # carries the cross-batch -inf for the fused (B*S, B*S) score matrix).
  batch_ids = jnp.repeat(jnp.arange(b), s)
  same_batch = batch_ids[:, None] == batch_ids[None, :]
  key_ok = (mask.reshape(b * s) != 0)[None, :]
  attn_bias = jnp.where(same_batch & key_ok, 0.0, NEG_INF).astype(jnp.float32)

  kernel = functools.partial(_dual_transformer_kernel,
                             n_layers=N_LAYERS, n_heads=N_HEADS)

  # Single invocation: no grid, whole arrays VMEM-resident (<< VMEM on all
  # generations at these shapes), lane-dense (B*S, 128) f32 output slab.
  out = pl.pallas_call(
      kernel,
      out_shape=jax.ShapeDtypeStruct((b * s, OUT_PAD), jnp.float32),
  )(x2d, attn_bias, prepared["head_mask"], prepared["attn_w"],
    prepared["b_slab"], prepared["ffn_w"])

  out = out.reshape(b, s, OUT_PAD)
  out1 = out[:, :, :num_seq_classes]                       # classifier1, all tokens
  out2 = out[:, 0, num_seq_classes:num_seq_classes + num_classes]  # classifier2, token 0
  if num_seq_classes == 1:          # mirrors `if self.classifier1.out_features == 1`
    out1 = out1[:, :, 0]
  return out1, out2


# ---------------------------------------------------------------------------
# Deterministic parameter init (shapes match the PyTorch module's __init__).
# ---------------------------------------------------------------------------
def init_params(key):
  ks = jax.random.split(key, 16)

  def normal(k, shape, scl=0.05):
    return (scl * jax.random.normal(k, shape)).astype(jnp.float32)

  D, H, L = EMBED_DIM, HIDDEN_DIM, N_LAYERS
  return {
      "q_w": normal(ks[0], (L, D, D)),  "q_b": normal(ks[1], (L, 1, D)),
      "k_w": normal(ks[2], (L, D, D)),  "k_b": normal(ks[3], (L, 1, D)),
      "v_w": normal(ks[4], (L, D, D)),  "v_b": normal(ks[5], (L, 1, D)),
      "o_w": normal(ks[6], (L, D, D)),  "o_b": normal(ks[7], (L, 1, D)),
      "ln1_g": jnp.ones((L, 1, D), jnp.float32),
      "ln1_b": jnp.zeros((L, 1, D), jnp.float32),
      "f1_w": normal(ks[8], (L, D, H)),  "f1_b": normal(ks[9], (L, 1, H)),
      "f2_w": normal(ks[10], (L, H, D)), "f2_b": normal(ks[11], (L, 1, D)),
      "ln2_g": jnp.ones((L, 1, D), jnp.float32),
      "ln2_b": jnp.zeros((L, 1, D), jnp.float32),
      "c1_w": normal(ks[12], (D, NUM_SEQ_CLASSES)),
      "c1_b": normal(ks[13], (1, NUM_SEQ_CLASSES)),
      "c2_w": normal(ks[14], (D, NUM_CLASSES)),
      "c2_b": normal(ks[15], (1, NUM_CLASSES)),
  }


# ---------------------------------------------------------------------------
# Pure-JAX reference (faithful to the HF DistilBERT-style forward).
# ---------------------------------------------------------------------------
def reference_forward(x, mask, params):
  x = x.astype(jnp.float32)
  bsz, slen, dim = x.shape
  dh = dim // N_HEADS
  for l in range(N_LAYERS):
    q = x @ params["q_w"][l] + params["q_b"][l]
    k = x @ params["k_w"][l] + params["k_b"][l]
    v = x @ params["v_w"][l] + params["v_b"][l]

    def split(z):
      return z.reshape(bsz, slen, N_HEADS, dh).transpose(0, 2, 1, 3)

    qh, kh, vh = split(q) / np.sqrt(dh), split(k), split(v)
    scores = jnp.einsum("bhqd,bhkd->bhqk", qh, kh)
    m = (mask.astype(jnp.float32) == 0.0)[:, None, None, :]
    scores = jnp.where(m, NEG_INF, scores)
    w_attn = jax.nn.softmax(scores, axis=-1)
    ctx = jnp.einsum("bhqk,bhkd->bhqd", w_attn, vh)
    ctx = ctx.transpose(0, 2, 1, 3).reshape(bsz, slen, dim)
    sa = ctx @ params["o_w"][l] + params["o_b"][l]
    x = _layer_norm_ref(sa + x, params["ln1_g"][l], params["ln1_b"][l])
    ffn = _gelu(x @ params["f1_w"][l] + params["f1_b"][l])
    ffn = ffn @ params["f2_w"][l] + params["f2_b"][l]
    x = _layer_norm_ref(ffn + x, params["ln2_g"][l], params["ln2_b"][l])

  out1 = x @ params["c1_w"] + params["c1_b"]
  if NUM_SEQ_CLASSES == 1:
    out1 = out1[:, :, 0]
  out2 = x[:, 0] @ params["c2_w"] + params["c2_b"][0]
  return out1, out2


if __name__ == "__main__":
  key = jax.random.PRNGKey(0)
  kx, kp = jax.random.split(key)
  x = jax.random.normal(kx, (B, S, EMBED_DIM), dtype=jnp.float32)
  # DistilBERT-style attention mask (1 = attend, 0 = masked); mask out the
  # last two positions of the second sequence.
  mask = jnp.ones((B, S), dtype=jnp.float32)
  mask = mask.at[1, -2:].set(0.0)
  params = init_params(kp)
  prepared = prepare_params(params)   # one-time slab packing + scale folding

  out1, out2 = jax.block_until_ready(dual_transformer_v2(x, mask, prepared))
  ref1, ref2 = reference_forward(x, mask, params)

  assert out1.shape == (B, S, NUM_SEQ_CLASSES)
  assert out2.shape == (B, NUM_CLASSES)
  np.testing.assert_allclose(np.asarray(out1), np.asarray(ref1),
                             rtol=2e-3, atol=2e-3)
  np.testing.assert_allclose(np.asarray(out2), np.asarray(ref2),
                             rtol=2e-3, atol=2e-3)
  print("KERNEL_OK")
</pallas_src>

<mosaic_0001>
module attributes {stable_mosaic.version = 11 : i64} {
  func.func @_dual_transformer_kernel(%arg0: memref<16x32xf32, #tpu.memory_space<vmem>>, %arg1: memref<16x16xf32, #tpu.memory_space<vmem>>, %arg2: memref<4x32xf32, #tpu.memory_space<vmem>>, %arg3: memref<3x32x128xf32, #tpu.memory_space<vmem>>, %arg4: memref<3x8x128xf32, #tpu.memory_space<vmem>>, %arg5: memref<2x96x64xf32, #tpu.memory_space<vmem>>, %arg6: memref<16x128xf32, #tpu.memory_space<vmem>>) attributes {dimension_semantics = [], scalar_prefetch = 0 : i64, scratch_operands = 0 : i64, tpu.core_type = #tpu.core_type<tc>} {
    %c0 = arith.constant 0 : index
    %c0_0 = arith.constant 0 : index
    %0 = vector.load %arg0[%c0, %c0_0] : memref<16x32xf32, #tpu.memory_space<vmem>>, vector<16x32xf32>
    %c0_1 = arith.constant 0 : index
    %c0_2 = arith.constant 0 : index
    %1 = vector.load %arg1[%c0_1, %c0_2] : memref<16x16xf32, #tpu.memory_space<vmem>>, vector<16x16xf32>
    %c0_3 = arith.constant 0 : index
    %c0_4 = arith.constant 0 : index
    %2 = vector.load %arg2[%c0_3, %c0_4] : memref<4x32xf32, #tpu.memory_space<vmem>>, vector<4x32xf32>
    %c0_5 = arith.constant 0 : index
    %c0_6 = arith.constant 0 : index
    %c0_7 = arith.constant 0 : index
    %3 = vector.load %arg3[%c0_5, %c0_6, %c0_7] : memref<3x32x128xf32, #tpu.memory_space<vmem>>, vector<1x32x128xf32>
    %4 = vector.shape_cast %3 : vector<1x32x128xf32> to vector<32x128xf32>
    %c0_8 = arith.constant 0 : index
    %c0_9 = arith.constant 0 : index
    %c0_10 = arith.constant 0 : index
    %5 = vector.load %arg4[%c0_8, %c0_9, %c0_10] : memref<3x8x128xf32, #tpu.memory_space<vmem>>, vector<1x8x128xf32>
    %6 = vector.shape_cast %5 : vector<1x8x128xf32> to vector<8x128xf32>
    %7 = vector.extract_strided_slice %4 {offsets = [0, 0], sizes = [32, 96], strides = [1, 1]} : vector<32x128xf32> to vector<32x96xf32>
    %cst = arith.constant dense<0.000000e+00> : vector<16x96xf32>
    %8 = tpu.matmul %0, %7, %cst {dimension_numbers = #tpu.dot_dimension_numbers<[1], [0], [0], [1], [0, 0, 1, 1], [], []>} : vector<16x32xf32>, vector<32x96xf32>, vector<16x96xf32> -> vector<16x96xf32>
    %9 = vector.extract_strided_slice %6 {offsets = [0, 0], sizes = [1, 96], strides = [1, 1]} : vector<8x128xf32> to vector<1x96xf32>
    %10 = vector.broadcast %9 : vector<1x96xf32> to vector<16x96xf32>
    %11 = arith.addf %8, %10 : vector<16x96xf32>
    %12 = vector.extract_strided_slice %11 {offsets = [0, 0], sizes = [16, 32], strides = [1, 1]} : vector<16x96xf32> to vector<16x32xf32>
    %13 = vector.extract_strided_slice %11 {offsets = [0, 32], sizes = [16, 32], strides = [1, 1]} : vector<16x96xf32> to vector<16x32xf32>
    %14 = vector.extract_strided_slice %11 {offsets = [0, 64], sizes = [16, 32], strides = [1, 1]} : vector<16x96xf32> to vector<16x32xf32>
    %15 = vector.extract_strided_slice %2 {offsets = [0, 0], sizes = [1, 32], strides = [1, 1]} : vector<4x32xf32> to vector<1x32xf32>
    %16 = vector.broadcast %15 : vector<1x32xf32> to vector<16x32xf32>
    %17 = arith.mulf %12, %16 : vector<16x32xf32>
    %cst_11 = arith.constant dense<0.000000e+00> : vector<16x16xf32>
    %18 = tpu.matmul %17, %13, %cst_11 {dimension_numbers = #tpu.dot_dimension_numbers<[1], [1], [0], [0], [0, 0, 1, 0], [], []>} : vector<16x32xf32>, vector<16x32xf32>, vector<16x16xf32> -> vector<16x16xf32>
    %19 = arith.addf %18, %1 : vector<16x16xf32>
    %cst_12 = arith.constant dense<0xFF800000> : vector<16xf32>
    %20 = vector.multi_reduction <maximumf>, %19, %cst_12 [1] : vector<16x16xf32> to vector<16xf32>
    %21 = vector.shape_cast %20 : vector<16xf32> to vector<16x1xf32>
    %22 = vector.broadcast %21 : vector<16x1xf32> to vector<16x16xf32>
    %23 = arith.subf %19, %22 : vector<16x16xf32>
    %24 = math.exp %23 : vector<16x16xf32>
    %cst_13 = arith.constant dense<0.000000e+00> : vector<16xf32>
    %25 = vector.multi_reduction <add>, %24, %cst_13 [1] : vector<16x16xf32> to vector<16xf32>
    %26 = vector.shape_cast %25 : vector<16xf32> to vector<16x1xf32>
    %27 = tpu.reciprocal %26 {approx = true} : vector<16x1xf32> -> vector<16x1xf32>
    %28 = vector.broadcast %27 : vector<16x1xf32> to vector<16x16xf32>
    %29 = arith.mulf %24, %28 : vector<16x16xf32>
    %30 = vector.broadcast %15 : vector<1x32xf32> to vector<16x32xf32>
    %31 = arith.mulf %14, %30 : vector<16x32xf32>
    %cst_14 = arith.constant dense<0.000000e+00> : vector<16x32xf32>
    %32 = tpu.matmul %29, %31, %cst_14 {dimension_numbers = #tpu.dot_dimension_numbers<[1], [0], [0], [1], [0, 0, 1, 1], [], []>} : vector<16x16xf32>, vector<16x32xf32>, vector<16x32xf32> -> vector<16x32xf32>
    %33 = vector.extract_strided_slice %2 {offsets = [1, 0], sizes = [1, 32], strides = [1, 1]} : vector<4x32xf32> to vector<1x32xf32>
    %34 = vector.broadcast %33 : vector<1x32xf32> to vector<16x32xf32>
    %35 = arith.mulf %12, %34 : vector<16x32xf32>
    %cst_15 = arith.constant dense<0.000000e+00> : vector<16x16xf32>
    %36 = tpu.matmul %35, %13, %cst_15 {dimension_numbers = #tpu.dot_dimension_numbers<[1], [1], [0], [0], [0, 0, 1, 0], [], []>} : vector<16x32xf32>, vector<16x32xf32>, vector<16x16xf32> -> vector<16x16xf32>
    %37 = arith.addf %36, %1 : vector<16x16xf32>
    %cst_16 = arith.constant dense<0xFF800000> : vector<16xf32>
    %38 = vector.multi_reduction <maximumf>, %37, %cst_16 [1] : vector<16x16xf32> to vector<16xf32>
    %39 = vector.shape_cast %38 : vector<16xf32> to vector<16x1xf32>
    %40 = vector.broadcast %39 : vector<16x1xf32> to vector<16x16xf32>
    %41 = arith.subf %37, %40 : vector<16x16xf32>
    %42 = math.exp %41 : vector<16x16xf32>
    %cst_17 = arith.constant dense<0.000000e+00> : vector<16xf32>
    %43 = vector.multi_reduction <add>, %42, %cst_17 [1] : vector<16x16xf32> to vector<16xf32>
    %44 = vector.shape_cast %43 : vector<16xf32> to vector<16x1xf32>
    %45 = tpu.reciprocal %44 {approx = true} : vector<16x1xf32> -> vector<16x1xf32>
    %46 = vector.broadcast %45 : vector<16x1xf32> to vector<16x16xf32>
    %47 = arith.mulf %42, %46 : vector<16x16xf32>
    %48 = vector.broadcast %33 : vector<1x32xf32> to vector<16x32xf32>
    %49 = arith.mulf %14, %48 : vector<16x32xf32>
    %cst_18 = arith.constant dense<0.000000e+00> : vector<16x32xf32>
    %50 = tpu.matmul %47, %49, %cst_18 {dimension_numbers = #tpu.dot_dimension_numbers<[1], [0], [0], [1], [0, 0, 1, 1], [], []>} : vector<16x16xf32>, vector<16x32xf32>, vector<16x32xf32> -> vector<16x32xf32>
    %51 = arith.addf %32, %50 : vector<16x32xf32>
    %52 = vector.extract_strided_slice %2 {offsets = [2, 0], sizes = [1, 32], strides = [1, 1]} : vector<4x32xf32> to vector<1x32xf32>
    %53 = vector.broadcast %52 : vector<1x32xf32> to vector<16x32xf32>
    %54 = arith.mulf %12, %53 : vector<16x32xf32>
    %cst_19 = arith.constant dense<0.000000e+00> : vector<16x16xf32>
    %55 = tpu.matmul %54, %13, %cst_19 {dimension_numbers = #tpu.dot_dimension_numbers<[1], [1], [0], [0], [0, 0, 1, 0], [], []>} : vector<16x32xf32>, vector<16x32xf32>, vector<16x16xf32> -> vector<16x16xf32>
    %56 = arith.addf %55, %1 : vector<16x16xf32>
    %cst_20 = arith.constant dense<0xFF800000> : vector<16xf32>
    %57 = vector.multi_reduction <maximumf>, %56, %cst_20 [1] : vector<16x16xf32> to vector<16xf32>
    %58 = vector.shape_cast %57 : vector<16xf32> to vector<16x1xf32>
    %59 = vector.broadcast %58 : vector<16x1xf32> to vector<16x16xf32>
    %60 = arith.subf %56, %59 : vector<16x16xf32>
    %61 = math.exp %60 : vector<16x16xf32>
    %cst_21 = arith.constant dense<0.000000e+00> : vector<16xf32>
    %62 = vector.multi_reduction <add>, %61, %cst_21 [1] : vector<16x16xf32> to vector<16xf32>
    %63 = vector.shape_cast %62 : vector<16xf32> to vector<16x1xf32>
    %64 = tpu.reciprocal %63 {approx = true} : vector<16x1xf32> -> vector<16x1xf32>
    %65 = vector.broadcast %64 : vector<16x1xf32> to vector<16x16xf32>
    %66 = arith.mulf %61, %65 : vector<16x16xf32>
    %67 = vector.broadcast %52 : vector<1x32xf32> to vector<16x32xf32>
    %68 = arith.mulf %14, %67 : vector<16x32xf32>
    %cst_22 = arith.constant dense<0.000000e+00> : vector<16x32xf32>
    %69 = tpu.matmul %66, %68, %cst_22 {dimension_numbers = #tpu.dot_dimension_numbers<[1], [0], [0], [1], [0, 0, 1, 1], [], []>} : vector<16x16xf32>, vector<16x32xf32>, vector<16x32xf32> -> vector<16x32xf32>
    %70 = arith.addf %51, %69 : vector<16x32xf32>
    %71 = vector.extract_strided_slice %2 {offsets = [3, 0], sizes = [1, 32], strides = [1, 1]} : vector<4x32xf32> to vector<1x32xf32>
    %72 = vector.broadcast %71 : vector<1x32xf32> to vector<16x32xf32>
    %73 = arith.mulf %12, %72 : vector<16x32xf32>
    %cst_23 = arith.constant dense<0.000000e+00> : vector<16x16xf32>
    %74 = tpu.matmul %73, %13, %cst_23 {dimension_numbers = #tpu.dot_dimension_numbers<[1], [1], [0], [0], [0, 0, 1, 0], [], []>} : vector<16x32xf32>, vector<16x32xf32>, vector<16x16xf32> -> vector<16x16xf32>
    %75 = arith.addf %74, %1 : vector<16x16xf32>
    %cst_24 = arith.constant dense<0xFF800000> : vector<16xf32>
    %76 = vector.multi_reduction <maximumf>, %75, %cst_24 [1] : vector<16x16xf32> to vector<16xf32>
    %77 = vector.shape_cast %76 : vector<16xf32> to vector<16x1xf32>
    %78 = vector.broadcast %77 : vector<16x1xf32> to vector<16x16xf32>
    %79 = arith.subf %75, %78 : vector<16x16xf32>
    %80 = math.exp %79 : vector<16x16xf32>
    %cst_25 = arith.constant dense<0.000000e+00> : vector<16xf32>
    %81 = vector.multi_reduction <add>, %80, %cst_25 [1] : vector<16x16xf32> to vector<16xf32>
    %82 = vector.shape_cast %81 : vector<16xf32> to vector<16x1xf32>
    %83 = tpu.reciprocal %82 {approx = true} : vector<16x1xf32> -> vector<16x1xf32>
    %84 = vector.broadcast %83 : vector<16x1xf32> to vector<16x16xf32>
    %85 = arith.mulf %80, %84 : vector<16x16xf32>
    %86 = vector.broadcast %71 : vector<1x32xf32> to vector<16x32xf32>
    %87 = arith.mulf %14, %86 : vector<16x32xf32>
    %cst_26 = arith.constant dense<0.000000e+00> : vector<16x32xf32>
    %88 = tpu.matmul %85, %87, %cst_26 {dimension_numbers = #tpu.dot_dimension_numbers<[1], [0], [0], [1], [0, 0, 1, 1], [], []>} : vector<16x16xf32>, vector<16x32xf32>, vector<16x32xf32> -> vector<16x32xf32>
    %89 = arith.addf %70, %88 : vector<16x32xf32>
    %90 = vector.extract_strided_slice %4 {offsets = [0, 96], sizes = [32, 32], strides = [1, 1]} : vector<32x128xf32> to vector<32x32xf32>
    %cst_27 = arith.constant dense<0.000000e+00> : vector<16x32xf32>
    %91 = tpu.matmul %89, %90, %cst_27 {dimension_numbers = #tpu.dot_dimension_numbers<[1], [0], [0], [1], [0, 0, 1, 1], [], []>} : vector<16x32xf32>, vector<32x32xf32>, vector<16x32xf32> -> vector<16x32xf32>
    %92 = vector.extract_strided_slice %6 {offsets = [0, 96], sizes = [1, 32], strides = [1, 1]} : vector<8x128xf32> to vector<1x32xf32>
    %93 = vector.broadcast %92 : vector<1x32xf32> to vector<16x32xf32>
    %94 = arith.addf %91, %93 : vector<16x32xf32>
    %95 = arith.addf %94, %0 : vector<16x32xf32>
    %96 = vector.extract_strided_slice %6 {offsets = [1, 0], sizes = [1, 32], strides = [1, 1]} : vector<8x128xf32> to vector<1x32xf32>
    %97 = vector.extract_strided_slice %6 {offsets = [2, 0], sizes = [1, 32], strides = [1, 1]} : vector<8x128xf32> to vector<1x32xf32>
    %cst_28 = arith.constant dense<0.000000e+00> : vector<16xf32>
    %98 = vector.multi_reduction <add>, %95, %cst_28 [1] : vector<16x32xf32> to vector<16xf32>
    %99 = vector.shape_cast %98 : vector<16xf32> to vector<16x1xf32>
    %cst_29 = arith.constant 3.200000e+01 : f32
    %100 = vector.broadcast %cst_29 : f32 to vector<16x1xf32>
    %101 = arith.divf %99, %100 : vector<16x1xf32>
    %102 = vector.broadcast %101 : vector<16x1xf32> to vector<16x32xf32>
    %103 = arith.subf %95, %102 : vector<16x32xf32>
    %104 = arith.mulf %103, %103 : vector<16x32xf32>
    %cst_30 = arith.constant dense<0.000000e+00> : vector<16xf32>
    %105 = vector.multi_reduction <add>, %104, %cst_30 [1] : vector<16x32xf32> to vector<16xf32>
    %106 = vector.shape_cast %105 : vector<16xf32> to vector<16x1xf32>
    %cst_31 = arith.constant 3.200000e+01 : f32
    %107 = vector.broadcast %cst_31 : f32 to vector<16x1xf32>
    %108 = arith.divf %106, %107 : vector<16x1xf32>
    %109 = vector.broadcast %101 : vector<16x1xf32> to vector<16x32xf32>
    %110 = arith.subf %95, %109 : vector<16x32xf32>
    %cst_32 = arith.constant 9.99999996E-13 : f32
    %111 = vector.broadcast %cst_32 : f32 to vector<16x1xf32>
    %112 = arith.addf %108, %111 : vector<16x1xf32>
    %113 = math.rsqrt %112 : vector<16x1xf32>
    %114 = vector.broadcast %113 : vector<16x1xf32> to vector<16x32xf32>
    %115 = arith.mulf %110, %114 : vector<16x32xf32>
    %116 = vector.broadcast %96 : vector<1x32xf32> to vector<16x32xf32>
    %117 = arith.mulf %115, %116 : vector<16x32xf32>
    %118 = vector.broadcast %97 : vector<1x32xf32> to vector<16x32xf32>
    %119 = arith.addf %117, %118 : vector<16x32xf32>
    %c0_33 = arith.constant 0 : index
    %c0_34 = arith.constant 0 : index
    %c0_35 = arith.constant 0 : index
    %120 = vector.load %arg5[%c0_33, %c0_34, %c0_35] : memref<2x96x64xf32, #tpu.memory_space<vmem>>, vector<1x96x64xf32>
    %121 = vector.shape_cast %120 : vector<1x96x64xf32> to vector<96x64xf32>
    %122 = vector.extract_strided_slice %121 {offsets = [0, 0], sizes = [32, 64], strides = [1, 1]} : vector<96x64xf32> to vector<32x64xf32>
    %cst_36 = arith.constant dense<0.000000e+00> : vector<16x64xf32>
    %123 = tpu.matmul %119, %122, %cst_36 {dimension_numbers = #tpu.dot_dimension_numbers<[1], [0], [0], [1], [0, 0, 1, 1], [], []>} : vector<16x32xf32>, vector<32x64xf32>, vector<16x64xf32> -> vector<16x64xf32>
    %124 = vector.extract_strided_slice %6 {offsets = [3, 0], sizes = [1, 64], strides = [1, 1]} : vector<8x128xf32> to vector<1x64xf32>
    %125 = vector.broadcast %124 : vector<1x64xf32> to vector<16x64xf32>
    %126 = arith.addf %123, %125 : vector<16x64xf32>
    %cst_37 = arith.constant 5.000000e-01 : f32
    %127 = vector.broadcast %cst_37 : f32 to vector<16x64xf32>
    %128 = arith.mulf %127, %126 : vector<16x64xf32>
    %cst_38 = arith.constant 4.471500e-02 : f32
    %129 = vector.broadcast %cst_38 : f32 to vector<16x64xf32>
    %130 = arith.mulf %129, %126 : vector<16x64xf32>
    %131 = arith.mulf %130, %126 : vector<16x64xf32>
    %132 = arith.mulf %131, %126 : vector<16x64xf32>
    %133 = arith.addf %126, %132 : vector<16x64xf32>
    %cst_39 = arith.constant 0.797884583 : f32
    %134 = vector.broadcast %cst_39 : f32 to vector<16x64xf32>
    %135 = arith.mulf %134, %133 : vector<16x64xf32>
    %136 = math.tanh %135 : vector<16x64xf32>
    %cst_40 = arith.constant 1.000000e+00 : f32
    %137 = vector.broadcast %cst_40 : f32 to vector<16x64xf32>
    %138 = arith.addf %137, %136 : vector<16x64xf32>
    %139 = arith.mulf %128, %138 : vector<16x64xf32>
    %140 = vector.extract_strided_slice %121 {offsets = [32, 0], sizes = [64, 32], strides = [1, 1]} : vector<96x64xf32> to vector<64x32xf32>
    %cst_41 = arith.constant dense<0.000000e+00> : vector<16x32xf32>
    %141 = tpu.matmul %139, %140, %cst_41 {dimension_numbers = #tpu.dot_dimension_numbers<[1], [0], [0], [1], [0, 0, 1, 1], [], []>} : vector<16x64xf32>, vector<64x32xf32>, vector<16x32xf32> -> vector<16x32xf32>
    %142 = vector.extract_strided_slice %6 {offsets = [4, 0], sizes = [1, 32], strides = [1, 1]} : vector<8x128xf32> to vector<1x32xf32>
    %143 = vector.broadcast %142 : vector<1x32xf32> to vector<16x32xf32>
    %144 = arith.addf %141, %143 : vector<16x32xf32>
    %145 = arith.addf %144, %119 : vector<16x32xf32>
    %146 = vector.extract_strided_slice %6 {offsets = [5, 0], sizes = [1, 32], strides = [1, 1]} : vector<8x128xf32> to vector<1x32xf32>
    %147 = vector.extract_strided_slice %6 {offsets = [6, 0], sizes = [1, 32], strides = [1, 1]} : vector<8x128xf32> to vector<1x32xf32>
    %cst_42 = arith.constant dense<0.000000e+00> : vector<16xf32>
    %148 = vector.multi_reduction <add>, %145, %cst_42 [1] : vector<16x32xf32> to vector<16xf32>
    %149 = vector.shape_cast %148 : vector<16xf32> to vector<16x1xf32>
    %cst_43 = arith.constant 3.200000e+01 : f32
    %150 = vector.broadcast %cst_43 : f32 to vector<16x1xf32>
    %151 = arith.divf %149, %150 : vector<16x1xf32>
    %152 = vector.broadcast %151 : vector<16x1xf32> to vector<16x32xf32>
    %153 = arith.subf %145, %152 : vector<16x32xf32>
    %154 = arith.mulf %153, %153 : vector<16x32xf32>
    %cst_44 = arith.constant dense<0.000000e+00> : vector<16xf32>
    %155 = vector.multi_reduction <add>, %154, %cst_44 [1] : vector<16x32xf32> to vector<16xf32>
    %156 = vector.shape_cast %155 : vector<16xf32> to vector<16x1xf32>
    %cst_45 = arith.constant 3.200000e+01 : f32
    %157 = vector.broadcast %cst_45 : f32 to vector<16x1xf32>
    %158 = arith.divf %156, %157 : vector<16x1xf32>
    %159 = vector.broadcast %151 : vector<16x1xf32> to vector<16x32xf32>
    %160 = arith.subf %145, %159 : vector<16x32xf32>
    %cst_46 = arith.constant 9.99999996E-13 : f32
    %161 = vector.broadcast %cst_46 : f32 to vector<16x1xf32>
    %162 = arith.addf %158, %161 : vector<16x1xf32>
    %163 = math.rsqrt %162 : vector<16x1xf32>
    %164 = vector.broadcast %163 : vector<16x1xf32> to vector<16x32xf32>
    %165 = arith.mulf %160, %164 : vector<16x32xf32>
    %166 = vector.broadcast %146 : vector<1x32xf32> to vector<16x32xf32>
    %167 = arith.mulf %165, %166 : vector<16x32xf32>
    %168 = vector.broadcast %147 : vector<1x32xf32> to vector<16x32xf32>
    %169 = arith.addf %167, %168 : vector<16x32xf32>
    %c1 = arith.constant 1 : index
    %c0_47 = arith.constant 0 : index
    %c0_48 = arith.constant 0 : index
    %170 = vector.load %arg3[%c1, %c0_47, %c0_48] : memref<3x32x128xf32, #tpu.memory_space<vmem>>, vector<1x32x128xf32>
    %171 = vector.shape_cast %170 : vector<1x32x128xf32> to vector<32x128xf32>
    %c1_49 = arith.constant 1 : index
    %c0_50 = arith.constant 0 : index
    %c0_51 = arith.constant 0 : index
    %172 = vector.load %arg4[%c1_49, %c0_50, %c0_51] : memref<3x8x128xf32, #tpu.memory_space<vmem>>, vector<1x8x128xf32>
    %173 = vector.shape_cast %172 : vector<1x8x128xf32> to vector<8x128xf32>
    %174 = vector.extract_strided_slice %171 {offsets = [0, 0], sizes = [32, 96], strides = [1, 1]} : vector<32x128xf32> to vector<32x96xf32>
    %cst_52 = arith.constant dense<0.000000e+00> : vector<16x96xf32>
    %175 = tpu.matmul %169, %174, %cst_52 {dimension_numbers = #tpu.dot_dimension_numbers<[1], [0], [0], [1], [0, 0, 1, 1], [], []>} : vector<16x32xf32>, vector<32x96xf32>, vector<16x96xf32> -> vector<16x96xf32>
    %176 = vector.extract_strided_slice %173 {offsets = [0, 0], sizes = [1, 96], strides = [1, 1]} : vector<8x128xf32> to vector<1x96xf32>
    %177 = vector.broadcast %176 : vector<1x96xf32> to vector<16x96xf32>
    %178 = arith.addf %175, %177 : vector<16x96xf32>
    %179 = vector.extract_strided_slice %178 {offsets = [0, 0], sizes = [16, 32], strides = [1, 1]} : vector<16x96xf32> to vector<16x32xf32>
    %180 = vector.extract_strided_slice %178 {offsets = [0, 32], sizes = [16, 32], strides = [1, 1]} : vector<16x96xf32> to vector<16x32xf32>
    %181 = vector.extract_strided_slice %178 {offsets = [0, 64], sizes = [16, 32], strides = [1, 1]} : vector<16x96xf32> to vector<16x32xf32>
    %182 = vector.extract_strided_slice %2 {offsets = [0, 0], sizes = [1, 32], strides = [1, 1]} : vector<4x32xf32> to vector<1x32xf32>
    %183 = vector.broadcast %182 : vector<1x32xf32> to vector<16x32xf32>
    %184 = arith.mulf %179, %183 : vector<16x32xf32>
    %cst_53 = arith.constant dense<0.000000e+00> : vector<16x16xf32>
    %185 = tpu.matmul %184, %180, %cst_53 {dimension_numbers = #tpu.dot_dimension_numbers<[1], [1], [0], [0], [0, 0, 1, 0], [], []>} : vector<16x32xf32>, vector<16x32xf32>, vector<16x16xf32> -> vector<16x16xf32>
    %186 = arith.addf %185, %1 : vector<16x16xf32>
    %cst_54 = arith.constant dense<0xFF800000> : vector<16xf32>
    %187 = vector.multi_reduction <maximumf>, %186, %cst_54 [1] : vector<16x16xf32> to vector<16xf32>
    %188 = vector.shape_cast %187 : vector<16xf32> to vector<16x1xf32>
    %189 = vector.broadcast %188 : vector<16x1xf32> to vector<16x16xf32>
    %190 = arith.subf %186, %189 : vector<16x16xf32>
    %191 = math.exp %190 : vector<16x16xf32>
    %cst_55 = arith.constant dense<0.000000e+00> : vector<16xf32>
    %192 = vector.multi_reduction <add>, %191, %cst_55 [1] : vector<16x16xf32> to vector<16xf32>
    %193 = vector.shape_cast %192 : vector<16xf32> to vector<16x1xf32>
    %194 = tpu.reciprocal %193 {approx = true} : vector<16x1xf32> -> vector<16x1xf32>
    %195 = vector.broadcast %194 : vector<16x1xf32> to vector<16x16xf32>
    %196 = arith.mulf %191, %195 : vector<16x16xf32>
    %197 = vector.broadcast %182 : vector<1x32xf32> to vector<16x32xf32>
    %198 = arith.mulf %181, %197 : vector<16x32xf32>
    %cst_56 = arith.constant dense<0.000000e+00> : vector<16x32xf32>
    %199 = tpu.matmul %196, %198, %cst_56 {dimension_numbers = #tpu.dot_dimension_numbers<[1], [0], [0], [1], [0, 0, 1, 1], [], []>} : vector<16x16xf32>, vector<16x32xf32>, vector<16x32xf32> -> vector<16x32xf32>
    %200 = vector.extract_strided_slice %2 {offsets = [1, 0], sizes = [1, 32], strides = [1, 1]} : vector<4x32xf32> to vector<1x32xf32>
    %201 = vector.broadcast %200 : vector<1x32xf32> to vector<16x32xf32>
    %202 = arith.mulf %179, %201 : vector<16x32xf32>
    %cst_57 = arith.constant dense<0.000000e+00> : vector<16x16xf32>
    %203 = tpu.matmul %202, %180, %cst_57 {dimension_numbers = #tpu.dot_dimension_numbers<[1], [1], [0], [0], [0, 0, 1, 0], [], []>} : vector<16x32xf32>, vector<16x32xf32>, vector<16x16xf32> -> vector<16x16xf32>
    %204 = arith.addf %203, %1 : vector<16x16xf32>
    %cst_58 = arith.constant dense<0xFF800000> : vector<16xf32>
    %205 = vector.multi_reduction <maximumf>, %204, %cst_58 [1] : vector<16x16xf32> to vector<16xf32>
    %206 = vector.shape_cast %205 : vector<16xf32> to vector<16x1xf32>
    %207 = vector.broadcast %206 : vector<16x1xf32> to vector<16x16xf32>
    %208 = arith.subf %204, %207 : vector<16x16xf32>
    %209 = math.exp %208 : vector<16x16xf32>
    %cst_59 = arith.constant dense<0.000000e+00> : vector<16xf32>
    %210 = vector.multi_reduction <add>, %209, %cst_59 [1] : vector<16x16xf32> to vector<16xf32>
    %211 = vector.shape_cast %210 : vector<16xf32> to vector<16x1xf32>
    %212 = tpu.reciprocal %211 {approx = true} : vector<16x1xf32> -> vector<16x1xf32>
    %213 = vector.broadcast %212 : vector<16x1xf32> to vector<16x16xf32>
    %214 = arith.mulf %209, %213 : vector<16x16xf32>
    %215 = vector.broadcast %200 : vector<1x32xf32> to vector<16x32xf32>
    %216 = arith.mulf %181, %215 : vector<16x32xf32>
    %cst_60 = arith.constant dense<0.000000e+00> : vector<16x32xf32>
    %217 = tpu.matmul %214, %216, %cst_60 {dimension_numbers = #tpu.dot_dimension_numbers<[1], [0], [0], [1], [0, 0, 1, 1], [], []>} : vector<16x16xf32>, vector<16x32xf32>, vector<16x32xf32> -> vector<16x32xf32>
    %218 = arith.addf %199, %217 : vector<16x32xf32>
    %219 = vector.extract_strided_slice %2 {offsets = [2, 0], sizes = [1, 32], strides = [1, 1]} : vector<4x32xf32> to vector<1x32xf32>
    %220 = vector.broadcast %219 : vector<1x32xf32> to vector<16x32xf32>
    %221 = arith.mulf %179, %220 : vector<16x32xf32>
    %cst_61 = arith.constant dense<0.000000e+00> : vector<16x16xf32>
    %222 = tpu.matmul %221, %180, %cst_61 {dimension_numbers = #tpu.dot_dimension_numbers<[1], [1], [0], [0], [0, 0, 1, 0], [], []>} : vector<16x32xf32>, vector<16x32xf32>, vector<16x16xf32> -> vector<16x16xf32>
    %223 = arith.addf %222, %1 : vector<16x16xf32>
    %cst_62 = arith.constant dense<0xFF800000> : vector<16xf32>
    %224 = vector.multi_reduction <maximumf>, %223, %cst_62 [1] : vector<16x16xf32> to vector<16xf32>
    %225 = vector.shape_cast %224 : vector<16xf32> to vector<16x1xf32>
    %226 = vector.broadcast %225 : vector<16x1xf32> to vector<16x16xf32>
    %227 = arith.subf %223, %226 : vector<16x16xf32>
    %228 = math.exp %227 : vector<16x16xf32>
    %cst_63 = arith.constant dense<0.000000e+00> : vector<16xf32>
    %229 = vector.multi_reduction <add>, %228, %cst_63 [1] : vector<16x16xf32> to vector<16xf32>
    %230 = vector.shape_cast %229 : vector<16xf32> to vector<16x1xf32>
    %231 = tpu.reciprocal %230 {approx = true} : vector<16x1xf32> -> vector<16x1xf32>
    %232 = vector.broadcast %231 : vector<16x1xf32> to vector<16x16xf32>
    %233 = arith.mulf %228, %232 : vector<16x16xf32>
    %234 = vector.broadcast %219 : vector<1x32xf32> to vector<16x32xf32>
    %235 = arith.mulf %181, %234 : vector<16x32xf32>
    %cst_64 = arith.constant dense<0.000000e+00> : vector<16x32xf32>
    %236 = tpu.matmul %233, %235, %cst_64 {dimension_numbers = #tpu.dot_dimension_numbers<[1], [0], [0], [1], [0, 0, 1, 1], [], []>} : vector<16x16xf32>, vector<16x32xf32>, vector<16x32xf32> -> vector<16x32xf32>
    %237 = arith.addf %218, %236 : vector<16x32xf32>
    %238 = vector.extract_strided_slice %2 {offsets = [3, 0], sizes = [1, 32], strides = [1, 1]} : vector<4x32xf32> to vector<1x32xf32>
    %239 = vector.broadcast %238 : vector<1x32xf32> to vector<16x32xf32>
    %240 = arith.mulf %179, %239 : vector<16x32xf32>
    %cst_65 = arith.constant dense<0.000000e+00> : vector<16x16xf32>
    %241 = tpu.matmul %240, %180, %cst_65 {dimension_numbers = #tpu.dot_dimension_numbers<[1], [1], [0], [0], [0, 0, 1, 0], [], []>} : vector<16x32xf32>, vector<16x32xf32>, vector<16x16xf32> -> vector<16x16xf32>
    %242 = arith.addf %241, %1 : vector<16x16xf32>
    %cst_66 = arith.constant dense<0xFF800000> : vector<16xf32>
    %243 = vector.multi_reduction <maximumf>, %242, %cst_66 [1] : vector<16x16xf32> to vector<16xf32>
    %244 = vector.shape_cast %243 : vector<16xf32> to vector<16x1xf32>
    %245 = vector.broadcast %244 : vector<16x1xf32> to vector<16x16xf32>
    %246 = arith.subf %242, %245 : vector<16x16xf32>
    %247 = math.exp %246 : vector<16x16xf32>
    %cst_67 = arith.constant dense<0.000000e+00> : vector<16xf32>
    %248 = vector.multi_reduction <add>, %247, %cst_67 [1] : vector<16x16xf32> to vector<16xf32>
    %249 = vector.shape_cast %248 : vector<16xf32> to vector<16x1xf32>
    %250 = tpu.reciprocal %249 {approx = true} : vector<16x1xf32> -> vector<16x1xf32>
    %251 = vector.broadcast %250 : vector<16x1xf32> to vector<16x16xf32>
    %252 = arith.mulf %247, %251 : vector<16x16xf32>
    %253 = vector.broadcast %238 : vector<1x32xf32> to vector<16x32xf32>
    %254 = arith.mulf %181, %253 : vector<16x32xf32>
    %cst_68 = arith.constant dense<0.000000e+00> : vector<16x32xf32>
    %255 = tpu.matmul %252, %254, %cst_68 {dimension_numbers = #tpu.dot_dimension_numbers<[1], [0], [0], [1], [0, 0, 1, 1], [], []>} : vector<16x16xf32>, vector<16x32xf32>, vector<16x32xf32> -> vector<16x32xf32>
    %256 = arith.addf %237, %255 : vector<16x32xf32>
    %257 = vector.extract_strided_slice %171 {offsets = [0, 96], sizes = [32, 32], strides = [1, 1]} : vector<32x128xf32> to vector<32x32xf32>
    %cst_69 = arith.constant dense<0.000000e+00> : vector<16x32xf32>
    %258 = tpu.matmul %256, %257, %cst_69 {dimension_numbers = #tpu.dot_dimension_numbers<[1], [0], [0], [1], [0, 0, 1, 1], [], []>} : vector<16x32xf32>, vector<32x32xf32>, vector<16x32xf32> -> vector<16x32xf32>
    %259 = vector.extract_strided_slice %173 {offsets = [0, 96], sizes = [1, 32], strides = [1, 1]} : vector<8x128xf32> to vector<1x32xf32>
    %260 = vector.broadcast %259 : vector<1x32xf32> to vector<16x32xf32>
    %261 = arith.addf %258, %260 : vector<16x32xf32>
    %262 = arith.addf %261, %169 : vector<16x32xf32>
    %263 = vector.extract_strided_slice %173 {offsets = [1, 0], sizes = [1, 32], strides = [1, 1]} : vector<8x128xf32> to vector<1x32xf32>
    %264 = vector.extract_strided_slice %173 {offsets = [2, 0], sizes = [1, 32], strides = [1, 1]} : vector<8x128xf32> to vector<1x32xf32>
    %cst_70 = arith.constant dense<0.000000e+00> : vector<16xf32>
    %265 = vector.multi_reduction <add>, %262, %cst_70 [1] : vector<16x32xf32> to vector<16xf32>
    %266 = vector.shape_cast %265 : vector<16xf32> to vector<16x1xf32>
    %cst_71 = arith.constant 3.200000e+01 : f32
    %267 = vector.broadcast %cst_71 : f32 to vector<16x1xf32>
    %268 = arith.divf %266, %267 : vector<16x1xf32>
    %269 = vector.broadcast %268 : vector<16x1xf32> to vector<16x32xf32>
    %270 = arith.subf %262, %269 : vector<16x32xf32>
    %271 = arith.mulf %270, %270 : vector<16x32xf32>
    %cst_72 = arith.constant dense<0.000000e+00> : vector<16xf32>
    %272 = vector.multi_reduction <add>, %271, %cst_72 [1] : vector<16x32xf32> to vector<16xf32>
    %273 = vector.shape_cast %272 : vector<16xf32> to vector<16x1xf32>
    %cst_73 = arith.constant 3.200000e+01 : f32
    %274 = vector.broadcast %cst_73 : f32 to vector<16x1xf32>
    %275 = arith.divf %273, %274 : vector<16x1xf32>
    %276 = vector.broadcast %268 : vector<16x1xf32> to vector<16x32xf32>
    %277 = arith.subf %262, %276 : vector<16x32xf32>
    %cst_74 = arith.constant 9.99999996E-13 : f32
    %278 = vector.broadcast %cst_74 : f32 to vector<16x1xf32>
    %279 = arith.addf %275, %278 : vector<16x1xf32>
    %280 = math.rsqrt %279 : vector<16x1xf32>
    %281 = vector.broadcast %280 : vector<16x1xf32> to vector<16x32xf32>
    %282 = arith.mulf %277, %281 : vector<16x32xf32>
    %283 = vector.broadcast %263 : vector<1x32xf32> to vector<16x32xf32>
    %284 = arith.mulf %282, %283 : vector<16x32xf32>
    %285 = vector.broadcast %264 : vector<1x32xf32> to vector<16x32xf32>
    %286 = arith.addf %284, %285 : vector<16x32xf32>
    %c1_75 = arith.constant 1 : index
    %c0_76 = arith.constant 0 : index
    %c0_77 = arith.constant 0 : index
    %287 = vector.load %arg5[%c1_75, %c0_76, %c0_77] : memref<2x96x64xf32, #tpu.memory_space<vmem>>, vector<1x96x64xf32>
    %288 = vector.shape_cast %287 : vector<1x96x64xf32> to vector<96x64xf32>
    %289 = vector.extract_strided_slice %288 {offsets = [0, 0], sizes = [32, 64], strides = [1, 1]} : vector<96x64xf32> to vector<32x64xf32>
    %cst_78 = arith.constant dense<0.000000e+00> : vector<16x64xf32>
    %290 = tpu.matmul %286, %289, %cst_78 {dimension_numbers = #tpu.dot_dimension_numbers<[1], [0], [0], [1], [0, 0, 1, 1], [], []>} : vector<16x32xf32>, vector<32x64xf32>, vector<16x64xf32> -> vector<16x64xf32>
    %291 = vector.extract_strided_slice %173 {offsets = [3, 0], sizes = [1, 64], strides = [1, 1]} : vector<8x128xf32> to vector<1x64xf32>
    %292 = vector.broadcast %291 : vector<1x64xf32> to vector<16x64xf32>
    %293 = arith.addf %290, %292 : vector<16x64xf32>
    %cst_79 = arith.constant 5.000000e-01 : f32
    %294 = vector.broadcast %cst_79 : f32 to vector<16x64xf32>
    %295 = arith.mulf %294, %293 : vector<16x64xf32>
    %cst_80 = arith.constant 4.471500e-02 : f32
    %296 = vector.broadcast %cst_80 : f32 to vector<16x64xf32>
    %297 = arith.mulf %296, %293 : vector<16x64xf32>
    %298 = arith.mulf %297, %293 : vector<16x64xf32>
    %299 = arith.mulf %298, %293 : vector<16x64xf32>
    %300 = arith.addf %293, %299 : vector<16x64xf32>
    %cst_81 = arith.constant 0.797884583 : f32
    %301 = vector.broadcast %cst_81 : f32 to vector<16x64xf32>
    %302 = arith.mulf %301, %300 : vector<16x64xf32>
    %303 = math.tanh %302 : vector<16x64xf32>
    %cst_82 = arith.constant 1.000000e+00 : f32
    %304 = vector.broadcast %cst_82 : f32 to vector<16x64xf32>
    %305 = arith.addf %304, %303 : vector<16x64xf32>
    %306 = arith.mulf %295, %305 : vector<16x64xf32>
    %307 = vector.extract_strided_slice %288 {offsets = [32, 0], sizes = [64, 32], strides = [1, 1]} : vector<96x64xf32> to vector<64x32xf32>
    %cst_83 = arith.constant dense<0.000000e+00> : vector<16x32xf32>
    %308 = tpu.matmul %306, %307, %cst_83 {dimension_numbers = #tpu.dot_dimension_numbers<[1], [0], [0], [1], [0, 0, 1, 1], [], []>} : vector<16x64xf32>, vector<64x32xf32>, vector<16x32xf32> -> vector<16x32xf32>
    %309 = vector.extract_strided_slice %173 {offsets = [4, 0], sizes = [1, 32], strides = [1, 1]} : vector<8x128xf32> to vector<1x32xf32>
    %310 = vector.broadcast %309 : vector<1x32xf32> to vector<16x32xf32>
    %311 = arith.addf %308, %310 : vector<16x32xf32>
    %312 = arith.addf %311, %286 : vector<16x32xf32>
    %313 = vector.extract_strided_slice %173 {offsets = [5, 0], sizes = [1, 32], strides = [1, 1]} : vector<8x128xf32> to vector<1x32xf32>
    %314 = vector.extract_strided_slice %173 {offsets = [6, 0], sizes = [1, 32], strides = [1, 1]} : vector<8x128xf32> to vector<1x32xf32>
    %cst_84 = arith.constant dense<0.000000e+00> : vector<16xf32>
    %315 = vector.multi_reduction <add>, %312, %cst_84 [1] : vector<16x32xf32> to vector<16xf32>
    %316 = vector.shape_cast %315 : vector<16xf32> to vector<16x1xf32>
    %cst_85 = arith.constant 3.200000e+01 : f32
    %317 = vector.broadcast %cst_85 : f32 to vector<16x1xf32>
    %318 = arith.divf %316, %317 : vector<16x1xf32>
    %319 = vector.broadcast %318 : vector<16x1xf32> to vector<16x32xf32>
    %320 = arith.subf %312, %319 : vector<16x32xf32>
    %321 = arith.mulf %320, %320 : vector<16x32xf32>
    %cst_86 = arith.constant dense<0.000000e+00> : vector<16xf32>
    %322 = vector.multi_reduction <add>, %321, %cst_86 [1] : vector<16x32xf32> to vector<16xf32>
    %323 = vector.shape_cast %322 : vector<16xf32> to vector<16x1xf32>
    %cst_87 = arith.constant 3.200000e+01 : f32
    %324 = vector.broadcast %cst_87 : f32 to vector<16x1xf32>
    %325 = arith.divf %323, %324 : vector<16x1xf32>
    %326 = vector.broadcast %318 : vector<16x1xf32> to vector<16x32xf32>
    %327 = arith.subf %312, %326 : vector<16x32xf32>
    %cst_88 = arith.constant 9.99999996E-13 : f32
    %328 = vector.broadcast %cst_88 : f32 to vector<16x1xf32>
    %329 = arith.addf %325, %328 : vector<16x1xf32>
    %330 = math.rsqrt %329 : vector<16x1xf32>
    %331 = vector.broadcast %330 : vector<16x1xf32> to vector<16x32xf32>
    %332 = arith.mulf %327, %331 : vector<16x32xf32>
    %333 = vector.broadcast %313 : vector<1x32xf32> to vector<16x32xf32>
    %334 = arith.mulf %332, %333 : vector<16x32xf32>
    %335 = vector.broadcast %314 : vector<1x32xf32> to vector<16x32xf32>
    %336 = arith.addf %334, %335 : vector<16x32xf32>
    %c2 = arith.constant 2 : index
    %c0_89 = arith.constant 0 : index
    %c0_90 = arith.constant 0 : index
    %337 = vector.load %arg3[%c2, %c0_89, %c0_90] : memref<3x32x128xf32, #tpu.memory_space<vmem>>, vector<1x32x128xf32>
    %338 = vector.shape_cast %337 : vector<1x32x128xf32> to vector<32x128xf32>
    %c2_91 = arith.constant 2 : index
    %c0_92 = arith.constant 0 : index
    %c0_93 = arith.constant 0 : index
    %339 = vector.load %arg4[%c2_91, %c0_92, %c0_93] : memref<3x8x128xf32, #tpu.memory_space<vmem>>, vector<1x8x128xf32>
    %340 = vector.shape_cast %339 : vector<1x8x128xf32> to vector<8x128xf32>
    %cst_94 = arith.constant dense<0.000000e+00> : vector<16x128xf32>
    %341 = tpu.matmul %336, %338, %cst_94 {dimension_numbers = #tpu.dot_dimension_numbers<[1], [0], [0], [1], [0, 0, 1, 1], [], []>} : vector<16x32xf32>, vector<32x128xf32>, vector<16x128xf32> -> vector<16x128xf32>
    %342 = vector.extract_strided_slice %340 {offsets = [0, 0], sizes = [1, 128], strides = [1, 1]} : vector<8x128xf32> to vector<1x128xf32>
    %343 = vector.broadcast %342 : vector<1x128xf32> to vector<16x128xf32>
    %344 = arith.addf %341, %343 : vector<16x128xf32>
    %c0_95 = arith.constant 0 : index
    %c0_96 = arith.constant 0 : index
    %345 = vector.load %arg6[%c0_95, %c0_96] : memref<16x128xf32, #tpu.memory_space<vmem>>, vector<16x128xf32>
    tpu.vector_store %arg6[%c0_95, %c0_96], %344 {strides = array<i32>} : memref<16x128xf32, #tpu.memory_space<vmem>>, vector<16x128xf32>,
    return
  }
}

</mosaic_0001>

<llo_original>
// kernel: tpu_custom_call.1
$region0: #{tpu_custom_call.1}
  #allocation0 [shape = 'u32[]', space=smem, size = 0x4, offset = 0x4, fixed_abs, tag = 'smem constant byte address 0x4 - core index']
  #allocation1 [shape = 'u32[144,128]{1,0:T(1,128)}', space=vmem, size = 0x12000, scoped, tag = 'internal scratch']
  %s0 = inlined_call_operand.vmem [shape: f32[16,32], index: 0, kind: input, shape index: {}]
  %s1 = inlined_call_operand.vmem [shape: f32[16,16], index: 1, kind: input, shape index: {}]
  %s2 = inlined_call_operand.vmem [shape: f32[4,32], index: 2, kind: input, shape index: {}]
  %s3 = inlined_call_operand.vmem [shape: f32[3,32,128], index: 3, kind: input, shape index: {}]
  %s4 = inlined_call_operand.vmem [shape: f32[3,8,128], index: 4, kind: input, shape index: {}]
  %s5 = inlined_call_operand.vmem [shape: f32[2,96,64], index: 5, kind: input, shape index: {}]
  %s6 = inlined_call_operand.hbm [shape: f32[16,128], index: 6, kind: output, shape index: {}]
  %s7 = sld [smem:[#allocation0]]
  $region34: #{tpu_custom_call.1} parent=0
    _
  %s9 = ssub.s32 1, %s7
  %s10 = scalar_select 0, %s9, %s7
  $region1: #{tpu_custom_call.1} parent=0
    #allocation2 [shape = 'u8[8192]{0}', space=vmem, size = 0x2000, scoped, tag = 'output window, operand 0, single buffered']
    #allocation3 [shape = 's32[1]{0}', space=sflag, size = 0x4, scoped, tag = 'scoped memory for tpu_custom_call.1']
    %11 = vsyncpa [#allocation3], 0
    // Predicated region
    $region2: #{tpu_custom_call.1} parent=1 // pred_check
      _
    $region3: #{tpu_custom_call.1} parent=1 // pred_check_branch
      %13 = sbr.rel (0) target = $region5
    $region4: #{tpu_custom_call.1} parent=1 // pred_region
      _
    $region5: #{tpu_custom_call.1} parent=1 // pred_fallthru
      _
    // Predicated region
    $region6: #{tpu_custom_call.1} parent=1 // pred_check
      _
    $region7: #{tpu_custom_call.1} parent=1 // pred_check_branch
      %15 = sbr.rel (0) target = $region9
    $region8: #{tpu_custom_call.1} parent=1 // pred_region
      _
    $region9: #{tpu_custom_call.1} parent=1 // pred_fallthru
      _
    // Predicated region
    $region10: #{tpu_custom_call.1} parent=1 // pred_check
      _
    $region11: #{tpu_custom_call.1} parent=1 // pred_check_branch
      %17 = sbr.rel (0) target = $region13
    $region12: #{tpu_custom_call.1} parent=1 // pred_region
      _
    $region13: #{tpu_custom_call.1} parent=1 // pred_fallthru
      _
    // Predicated region
    $region14: #{tpu_custom_call.1} parent=1 // pred_check
      _
    $region15: #{tpu_custom_call.1} parent=1 // pred_check_branch
      %19 = sbr.rel (0) target = $region17
    $region16: #{tpu_custom_call.1} parent=1 // pred_region
      _
    $region17: #{tpu_custom_call.1} parent=1 // pred_fallthru
      _
    // Predicated region
    $region18: #{tpu_custom_call.1} parent=1 // pred_check
      _
    $region19: #{tpu_custom_call.1} parent=1 // pred_check_branch
      %21 = sbr.rel (0) target = $region21
    $region20: #{tpu_custom_call.1} parent=1 // pred_region
      _
    $region21: #{tpu_custom_call.1} parent=1 // pred_fallthru
      _
    // Predicated region
    $region22: #{tpu_custom_call.1} parent=1 // pred_check
      _
    $region23: #{tpu_custom_call.1} parent=1 // pred_check_branch
      %23 = sbr.rel (0) target = $region25
    $region24: #{tpu_custom_call.1} parent=1 // pred_region
      _
    $region25: #{tpu_custom_call.1} parent=1 // pred_fallthru
      _
    %v24 = vld [vmem:[%s0] sm:$0xff]
    %v25 = vld [vmem:[%s0 + $0x8] sm:$0xff]
    %v26 = vld [vmem:[%s1] sm:$0xff]
    %v27 = vld [vmem:[%s1 + $0x8] sm:$0xff]
    %v28 = vld [vmem:[%s2] sm:$0xf]
    %v29 = vld [vmem:[%s3] sm:$0xff]
    %v30 = vld [vmem:[%s3 + $0x8] sm:$0xff]
    %v31 = vld [vmem:[%s3 + $0x10] sm:$0xff]
    %v32 = vld [vmem:[%s3 + $0x18] sm:$0xff]
    %v33 = vld [vmem:[%s4] sm:$0xff]
    %v34 = vlaneseq
    %v35 = vshrl.u32 %v34, 7
    %v36 = vsub.s32 0, %v35
    %v37 = vrot.slane %v33, %v36
    %vm38 = vcmask 261120
    %v40 = vsel %vm38, %v24, 0
    %v43 = vsel %vm38, %v25, 0
    %45 = vmatprep.subr.mxu0 0.0
    %46 = vmatpush1.msra.mxu0 0.0
    %47 = vmatprep.subr.mxu0 0.0
    %48 = vmatpush1.msra.mxu0 0.0
    %49 = vmatprep.subr.mxu0 0.0
    %50 = vmatpush1.msra.mxu0 0.0
    %51 = vmatprep.subr.mxu0 0.0
    %52 = vmatpush1.msra.mxu0 0.0
    %53 = vmatprep.subr.mxu0 0.0
    %54 = vmatpush1.msra.mxu0 0.0
    %55 = vmatprep.subr.mxu0 0.0
    %56 = vmatpush1.msra.mxu0 0.0
    %57 = vmatprep.subr.mxu0 0.0
    %58 = vmatpush1.msra.mxu0 0.0
    %59 = vmatprep.subr.mxu0 0.0
    %60 = vmatpush1.msra.mxu0 0.0
    %61 = vmatprep.subr.mxu0 0.0
    %62 = vmatpush1.msra.mxu0 0.0
    %63 = vmatprep.subr.mxu0 0.0
    %64 = vmatpush1.msra.mxu0 0.0
    %65 = vmatprep.subr.mxu0 0.0
    %66 = vmatpush1.msra.mxu0 0.0
    %67 = vmatprep.subr.mxu0 0.0
    %68 = vmatpush1.msra.mxu0 0.0
    %69 = vmatprep.subr.mxu0 0.0
    %70 = vmatpush1.msra.mxu0 %v32
    %71 = vmatprep.subr.mxu0 0.0
    %72 = vmatpush1.msra.mxu0 %v31
    %73 = vmatprep.subr.mxu0 0.0
    %74 = vmatpush1.msra.mxu0 %v30
    %75 = vmatprep.subr.mxu0 0.0
    %76 = vmatpush1.msra.mxu0 %v29
    %77 = vmatprep.subr.mxu0 0.0
    %78 = vmatpush2.msra.mxu0 0.0
    %79 = vmatprep.subr.mxu0 0.0
    %80 = vmatpush2.msra.mxu0 0.0
    %81 = vmatprep.subr.mxu0 0.0
    %82 = vmatpush2.msra.mxu0 0.0
    %83 = vmatprep.subr.mxu0 0.0
    %84 = vmatpush2.msra.mxu0 0.0
    %85 = vmatprep.subr.mxu0 0.0
    %86 = vmatpush2.msra.mxu0 0.0
    %87 = vmatprep.subr.mxu0 0.0
    %88 = vmatpush2.msra.mxu0 0.0
    %89 = vmatprep.subr.mxu0 0.0
    %90 = vmatpush2.msra.mxu0 0.0
    %91 = vmatprep.subr.mxu0 0.0
    %92 = vmatpush2.msra.mxu0 0.0
    %93 = vmatprep.subr.mxu0 0.0
    %94 = vmatpush2.msra.mxu0 0.0
    %95 = vmatprep.subr.mxu0 0.0
    %96 = vmatpush2.msra.mxu0 0.0
    %97 = vmatprep.subr.mxu0 0.0
    %98 = vmatpush2.msra.mxu0 0.0
    %99 = vmatprep.subr.mxu0 0.0
    %100 = vmatpush2.msra.mxu0 0.0
    %101 = vmatprep.subr.mxu0 0.0
    %102 = vmatpush2.msra.mxu0 0.0
    %103 = vmatprep.subr.mxu0 0.0
    %104 = vmatpush2.msra.mxu0 0.0
    %105 = vmatprep.subr.mxu0 0.0
    %106 = vmatpush2.msra.mxu0 0.0
    %107 = vmatprep.subr.mxu0 0.0
    %108 = vmatpush2.msra.mxu0 0.0
    %109 = vmatprep.mubr.f32.mxu0 0.0
    %110 = vmatmul.mubr.f32.gmra.mxu0 %v40
    %v111 = vpop.f32.mrf.mxu0
    %v112 = vadd.f32 %v37, %v111
    %v113 = vpop.f32.mrf.mxu0
    %114 = vmatprep.mubr.f32.mxu0 0.0
    %115 = vmatmul.mubr.f32.gmra.mxu0 %v43
    %v116 = vpop.f32.mrf.mxu0
    %v117 = vadd.f32 %v37, %v116
    %v118 = vpop.f32.mrf.mxu0
    %119 = vdwg.mxu0
    %v120 = vlaneseq
    %v121 = vshrl.u32 %v120, 7
    %v122 = vsub.s32 0, %v121
    %v123 = vrot.slane %v28, %v122
    %v124 = vmul.f32 %v112, %v123
    %v125 = vmul.f32 %v117, %v123
    %128 = vrot.lane.b32.xlu0 %v112, 96
    %v129 = vpop.permute.xlu0 %128
    %130 = vrot.lane.b32.xlu0 %v117, 96
    %v131 = vpop.permute.xlu0 %130
    %v133 = vsel %vm38, %v124, 0
    %v136 = vsel %vm38, %v125, 0
    %v138 = vsel %vm38, %v129, 0
    %v140 = vsel %vm38, %v131, 0
    %142 = vmatprep.subr.mxu0 0.0
    %143 = vmatpush1.xpose.msra.mxu0 0.0
    %144 = vmatprep.subr.mxu0 0.0
    %145 = vmatpush1.xpose.msra.mxu0 0.0
    %146 = vmatprep.subr.mxu0 0.0
    %147 = vmatpush1.xpose.msra.mxu0 0.0
    %148 = vmatprep.subr.mxu0 0.0
    %149 = vmatpush1.xpose.msra.mxu0 0.0
    %150 = vmatprep.subr.mxu0 0.0
    %151 = vmatpush1.xpose.msra.mxu0 0.0
    %152 = vmatprep.subr.mxu0 0.0
    %153 = vmatpush1.xpose.msra.mxu0 0.0
    %154 = vmatprep.subr.mxu0 0.0
    %155 = vmatpush1.xpose.msra.mxu0 0.0
    %156 = vmatprep.subr.mxu0 0.0
    %157 = vmatpush1.xpose.msra.mxu0 0.0
    %158 = vmatprep.subr.mxu0 0.0
    %159 = vmatpush1.xpose.msra.mxu0 0.0
    %160 = vmatprep.subr.mxu0 0.0
    %161 = vmatpush1.xpose.msra.mxu0 0.0
    %162 = vmatprep.subr.mxu0 0.0
    %163 = vmatpush1.xpose.msra.mxu0 0.0
    %164 = vmatprep.subr.mxu0 0.0
    %165 = vmatpush1.xpose.msra.mxu0 0.0
    %166 = vmatprep.subr.mxu0 0.0
    %167 = vmatpush1.xpose.msra.mxu0 0.0
    %168 = vmatprep.subr.mxu0 0.0
    %169 = vmatpush1.xpose.msra.mxu0 0.0
    %170 = vmatprep.subr.mxu0 0.0
    %171 = vmatpush1.xpose.msra.mxu0 %v140
    %172 = vmatprep.subr.mxu0 0.0
    %173 = vmatpush1.xpose.msra.mxu0 %v138
    %174 = vmatprep.subr.mxu0 0.0
    %175 = vmatpush2.xpose.msra.mxu0 0.0
    %176 = vmatprep.subr.mxu0 0.0
    %177 = vmatpush2.xpose.msra.mxu0 0.0
    %178 = vmatprep.subr.mxu0 0.0
    %179 = vmatpush2.xpose.msra.mxu0 0.0
    %180 = vmatprep.subr.mxu0 0.0
    %181 = vmatpush2.xpose.msra.mxu0 0.0
    %182 = vmatprep.subr.mxu0 0.0
    %183 = vmatpush2.xpose.msra.mxu0 0.0
    %184 = vmatprep.subr.mxu0 0.0
    %185 = vmatpush2.xpose.msra.mxu0 0.0
    %186 = vmatprep.subr.mxu0 0.0
    %187 = vmatpush2.xpose.msra.mxu0 0.0
    %188 = vmatprep.subr.mxu0 0.0
    %189 = vmatpush2.xpose.msra.mxu0 0.0
    %190 = vmatprep.subr.mxu0 0.0
    %191 = vmatpush2.xpose.msra.mxu0 0.0
    %192 = vmatprep.subr.mxu0 0.0
    %193 = vmatpush2.xpose.msra.mxu0 0.0
    %194 = vmatprep.subr.mxu0 0.0
    %195 = vmatpush2.xpose.msra.mxu0 0.0
    %196 = vmatprep.subr.mxu0 0.0
    %197 = vmatpush2.xpose.msra.mxu0 0.0
    %198 = vmatprep.subr.mxu0 0.0
    %199 = vmatpush2.xpose.msra.mxu0 0.0
    %200 = vmatprep.subr.mxu0 0.0
    %201 = vmatpush2.xpose.msra.mxu0 0.0
    %202 = vmatprep.subr.mxu0 0.0
    %203 = vmatpush2.xpose.msra.mxu0 0.0
    %204 = vmatprep.subr.mxu0 0.0
    %205 = vmatpush2.xpose.msra.mxu0 0.0
    %206 = vmatprep.mubr.f32.mxu0 0.0
    %207 = vmatmul.mubr.f32.gmra.mxu0 %v133
    %v208 = vpop.f32.mrf.mxu0
    %v209 = vadd.f32 %v26, %v208
    %v210 = vpop.f32.mrf.mxu0
    %211 = vmatprep.mubr.f32.mxu0 0.0
    %212 = vmatmul.mubr.f32.gmra.mxu0 %v136
    %v213 = vpop.f32.mrf.mxu0
    %v214 = vadd.f32 %v27, %v213
    %v215 = vpop.f32.mrf.mxu0
    %216 = vdwg.mxu0
    %vm217 = vcmask 130048
    %v218 = vsel %vm217, %v209, -inf
    %219 = vmax.xlane.f32.xlu0 %v218
    %v220 = vpop.xlane.xlu0 %219
    %v221 = vsel %vm217, %v214, -inf
    %222 = vmax.xlane.f32.xlu0 %v221
    %v223 = vpop.xlane.xlu0 %222
    %v224 = vsub.f32 %v209, %v220
    %v225 = vsub.f32 %v214, %v223
    %v226 = vmul.f32 %v224, 1.442695
    %v227 = vpow.pop %v226
    %v228 = vmul.f32 %v225, 1.442695
    %v229 = vpow.pop %v228
    %v230 = vsel %vm217, %v227, 0.0
    %231 = vadd.xlane.f32.xlu0 %v230
    %v232 = vpop.xlane.xlu0 %231
    %v233 = vsel %vm217, %v229, 0.0
    %234 = vadd.xlane.f32.xlu0 %v233
    %v235 = vpop.xlane.xlu0 %234
    %v236 = vrcp.pop %v232
    %v237 = vrcp.pop %v235
    %v238 = vmul.f32 %v227, %v236
    %v239 = vmul.f32 %v229, %v237
    %241 = vrot.lane.b32.xlu0 %v123, 64
    %v242 = vpop.permute.xlu0 %241
    %v244 = vmul.f32 %v112, %v242
    %v245 = vmul.f32 %v117, %v242
    %v246 = vlaneseq
    %v247 = vshrl.u32 %v246, 7
    %v248 = vsub.s32 1, %v247
    %v249 = vrot.slane %v28, %v248
    %v250 = vmul.f32 %v112, %v249
    %v251 = vmul.f32 %v117, %v249
    %v253 = vsel %vm38, %v250, 0
    %v256 = vsel %vm38, %v251, 0
    %258 = vmatprep.subr.mxu0 0.0
    %259 = vmatpush1.xpose.msra.mxu0 0.0
    %260 = vmatprep.subr.mxu0 0.0
    %261 = vmatpush1.xpose.msra.mxu0 0.0
    %262 = vmatprep.subr.mxu0 0.0
    %263 = vmatpush1.xpose.msra.mxu0 0.0
    %264 = vmatprep.subr.mxu0 0.0
    %265 = vmatpush1.xpose.msra.mxu0 0.0
    %266 = vmatprep.subr.mxu0 0.0
    %267 = vmatpush1.xpose.msra.mxu0 0.0
    %268 = vmatprep.subr.mxu0 0.0
    %269 = vmatpush1.xpose.msra.mxu0 0.0
    %270 = vmatprep.subr.mxu0 0.0
    %271 = vmatpush1.xpose.msra.mxu0 0.0
    %272 = vmatprep.subr.mxu0 0.0
    %273 = vmatpush1.xpose.msra.mxu0 0.0
    %274 = vmatprep.subr.mxu0 0.0
    %275 = vmatpush1.xpose.msra.mxu0 0.0
    %276 = vmatprep.subr.mxu0 0.0
    %277 = vmatpush1.xpose.msra.mxu0 0.0
    %278 = vmatprep.subr.mxu0 0.0
    %279 = vmatpush1.xpose.msra.mxu0 0.0
    %280 = vmatprep.subr.mxu0 0.0
    %281 = vmatpush1.xpose.msra.mxu0 0.0
    %282 = vmatprep.subr.mxu0 0.0
    %283 = vmatpush1.xpose.msra.mxu0 0.0
    %284 = vmatprep.subr.mxu0 0.0
    %285 = vmatpush1.xpose.msra.mxu0 0.0
    %286 = vmatprep.subr.mxu0 0.0
    %287 = vmatpush1.xpose.msra.mxu0 %v140
    %288 = vmatprep.subr.mxu0 0.0
    %289 = vmatpush1.xpose.msra.mxu0 %v138
    %290 = vmatprep.subr.mxu0 0.0
    %291 = vmatpush2.xpose.msra.mxu0 0.0
    %292 = vmatprep.subr.mxu0 0.0
    %293 = vmatpush2.xpose.msra.mxu0 0.0
    %294 = vmatprep.subr.mxu0 0.0
    %295 = vmatpush2.xpose.msra.mxu0 0.0
    %296 = vmatprep.subr.mxu0 0.0
    %297 = vmatpush2.xpose.msra.mxu0 0.0
    %298 = vmatprep.subr.mxu0 0.0
    %299 = vmatpush2.xpose.msra.mxu0 0.0
    %300 = vmatprep.subr.mxu0 0.0
    %301 = vmatpush2.xpose.msra.mxu0 0.0
    %302 = vmatprep.subr.mxu0 0.0
    %303 = vmatpush2.xpose.msra.mxu0 0.0
    %304 = vmatprep.subr.mxu0 0.0
    %305 = vmatpush2.xpose.msra.mxu0 0.0
    %306 = vmatprep.subr.mxu0 0.0
    %307 = vmatpush2.xpose.msra.mxu0 0.0
    %308 = vmatprep.subr.mxu0 0.0
    %309 = vmatpush2.xpose.msra.mxu0 0.0
    %310 = vmatprep.subr.mxu0 0.0
    %311 = vmatpush2.xpose.msra.mxu0 0.0
    %312 = vmatprep.subr.mxu0 0.0
    %313 = vmatpush2.xpose.msra.mxu0 0.0
    %314 = vmatprep.subr.mxu0 0.0
    %315 = vmatpush2.xpose.msra.mxu0 0.0
    %316 = vmatprep.subr.mxu0 0.0
    %317 = vmatpush2.xpose.msra.mxu0 0.0
    %318 = vmatprep.subr.mxu0 0.0
    %319 = vmatpush2.xpose.msra.mxu0 0.0
    %320 = vmatprep.subr.mxu0 0.0
    %321 = vmatpush2.xpose.msra.mxu0 0.0
    %322 = vmatprep.mubr.f32.mxu0 0.0
    %323 = vmatmul.mubr.f32.gmra.mxu0 %v253
    %v324 = vpop.f32.mrf.mxu0
    %v325 = vadd.f32 %v26, %v324
    %v326 = vpop.f32.mrf.mxu0
    %327 = vmatprep.mubr.f32.mxu0 0.0
    %328 = vmatmul.mubr.f32.gmra.mxu0 %v256
    %v329 = vpop.f32.mrf.mxu0
    %v330 = vadd.f32 %v27, %v329
    %v331 = vpop.f32.mrf.mxu0
    %332 = vdwg.mxu0
    %v333 = vsel %vm217, %v325, -inf
    %334 = vmax.xlane.f32.xlu0 %v333
    %v335 = vpop.xlane.xlu0 %334
    %v336 = vsel %vm217, %v330, -inf
    %337 = vmax.xlane.f32.xlu0 %v336
    %v338 = vpop.xlane.xlu0 %337
    %v339 = vsub.f32 %v325, %v335
    %v340 = vsub.f32 %v330, %v338
    %v341 = vmul.f32 %v339, 1.442695
    %v342 = vpow.pop %v341
    %v343 = vmul.f32 %v340, 1.442695
    %v344 = vpow.pop %v343
    %v345 = vsel %vm217, %v342, 0.0
    %346 = vadd.xlane.f32.xlu0 %v345
    %v347 = vpop.xlane.xlu0 %346
    %v348 = vsel %vm217, %v344, 0.0
    %349 = vadd.xlane.f32.xlu0 %v348
    %v350 = vpop.xlane.xlu0 %349
    %v351 = vrcp.pop %v347
    %v352 = vrcp.pop %v350
    %v353 = vmul.f32 %v342, %v351
    %v354 = vmul.f32 %v344, %v352
    %356 = vrot.lane.b32.xlu0 %v249, 64
    %v357 = vpop.permute.xlu0 %356
    %v359 = vmul.f32 %v112, %v357
    %v360 = vmul.f32 %v117, %v357
    %363 = vrot.lane.b32.xlu0 %v359, 64
    %v364 = vpop.permute.xlu0 %363
    %365 = vrot.lane.b32.xlu0 %v360, 64
    %v366 = vpop.permute.xlu0 %365
    %v370 = vsel %vm217, %v353, 0
    %v373 = vsel %vm217, %v354, 0
    %375 = vmatprep.subr.mxu0 0.0
    %376 = vmatpush1.msra.mxu0 0.0
    %377 = vmatprep.subr.mxu0 0.0
    %378 = vmatpush1.msra.mxu0 0.0
    %379 = vmatprep.subr.mxu0 0.0
    %380 = vmatpush1.msra.mxu0 0.0
    %381 = vmatprep.subr.mxu0 0.0
    %382 = vmatpush1.msra.mxu0 0.0
    %383 = vmatprep.subr.mxu0 0.0
    %384 = vmatpush1.msra.mxu0 0.0
    %385 = vmatprep.subr.mxu0 0.0
    %386 = vmatpush1.msra.mxu0 0.0
    %387 = vmatprep.subr.mxu0 0.0
    %388 = vmatpush1.msra.mxu0 0.0
    %389 = vmatprep.subr.mxu0 0.0
    %390 = vmatpush1.msra.mxu0 0.0
    %391 = vmatprep.subr.mxu0 0.0
    %392 = vmatpush1.msra.mxu0 0.0
    %393 = vmatprep.subr.mxu0 0.0
    %394 = vmatpush1.msra.mxu0 0.0
    %395 = vmatprep.subr.mxu0 0.0
    %396 = vmatpush1.msra.mxu0 0.0
    %397 = vmatprep.subr.mxu0 0.0
    %398 = vmatpush1.msra.mxu0 0.0
    %399 = vmatprep.subr.mxu0 0.0
    %400 = vmatpush1.msra.mxu0 0.0
    %401 = vmatprep.subr.mxu0 0.0
    %402 = vmatpush1.msra.mxu0 0.0
    %403 = vmatprep.subr.mxu0 0.0
    %404 = vmatpush1.msra.mxu0 %v366
    %405 = vmatprep.subr.mxu0 0.0
    %406 = vmatpush1.msra.mxu0 %v364
    %407 = vmatprep.subr.mxu0 0.0
    %408 = vmatpush2.msra.mxu0 0.0
    %409 = vmatprep.subr.mxu0 0.0
    %410 = vmatpush2.msra.mxu0 0.0
    %411 = vmatprep.subr.mxu0 0.0
    %412 = vmatpush2.msra.mxu0 0.0
    %413 = vmatprep.subr.mxu0 0.0
    %414 = vmatpush2.msra.mxu0 0.0
    %415 = vmatprep.subr.mxu0 0.0
    %416 = vmatpush2.msra.mxu0 0.0
    %417 = vmatprep.subr.mxu0 0.0
    %418 = vmatpush2.msra.mxu0 0.0
    %419 = vmatprep.subr.mxu0 0.0
    %420 = vmatpush2.msra.mxu0 0.0
    %421 = vmatprep.subr.mxu0 0.0
    %422 = vmatpush2.msra.mxu0 0.0
    %423 = vmatprep.subr.mxu0 0.0
    %424 = vmatpush2.msra.mxu0 0.0
    %425 = vmatprep.subr.mxu0 0.0
    %426 = vmatpush2.msra.mxu0 0.0
    %427 = vmatprep.subr.mxu0 0.0
    %428 = vmatpush2.msra.mxu0 0.0
    %429 = vmatprep.subr.mxu0 0.0
    %430 = vmatpush2.msra.mxu0 0.0
    %431 = vmatprep.subr.mxu0 0.0
    %432 = vmatpush2.msra.mxu0 0.0
    %433 = vmatprep.subr.mxu0 0.0
    %434 = vmatpush2.msra.mxu0 0.0
    %435 = vmatprep.subr.mxu0 0.0
    %436 = vmatpush2.msra.mxu0 0.0
    %437 = vmatprep.subr.mxu0 0.0
    %438 = vmatpush2.msra.mxu0 0.0
    %439 = vmatprep.mubr.f32.mxu0 0.0
    %440 = vmatmul.mubr.f32.gmra.mxu0 %v370
    %v441 = vpop.f32.mrf.mxu0
    %v442 = vadd.f32 0.0, %v441
    %v443 = vpop.f32.mrf.mxu0
    %444 = vmatprep.mubr.f32.mxu0 0.0
    %445 = vmatmul.mubr.f32.gmra.mxu0 %v373
    %v446 = vpop.f32.mrf.mxu0
    %v447 = vadd.f32 0.0, %v446
    %v448 = vpop.f32.mrf.mxu0
    %449 = vdwg.mxu0
    %452 = vrot.lane.b32.xlu0 %v244, 64
    %v453 = vpop.permute.xlu0 %452
    %454 = vrot.lane.b32.xlu0 %v245, 64
    %v455 = vpop.permute.xlu0 %454
    %v459 = vsel %vm217, %v238, 0
    %v462 = vsel %vm217, %v239, 0
    %464 = vmatprep.subr.mxu0 0.0
    %465 = vmatpush1.msra.mxu0 0.0
    %466 = vmatprep.subr.mxu0 0.0
    %467 = vmatpush1.msra.mxu0 0.0
    %468 = vmatprep.subr.mxu0 0.0
    %469 = vmatpush1.msra.mxu0 0.0
    %470 = vmatprep.subr.mxu0 0.0
    %471 = vmatpush1.msra.mxu0 0.0
    %472 = vmatprep.subr.mxu0 0.0
    %473 = vmatpush1.msra.mxu0 0.0
    %474 = vmatprep.subr.mxu0 0.0
    %475 = vmatpush1.msra.mxu0 0.0
    %476 = vmatprep.subr.mxu0 0.0
    %477 = vmatpush1.msra.mxu0 0.0
    %478 = vmatprep.subr.mxu0 0.0
    %479 = vmatpush1.msra.mxu0 0.0
    %480 = vmatprep.subr.mxu0 0.0
    %481 = vmatpush1.msra.mxu0 0.0
    %482 = vmatprep.subr.mxu0 0.0
    %483 = vmatpush1.msra.mxu0 0.0
    %484 = vmatprep.subr.mxu0 0.0
    %485 = vmatpush1.msra.mxu0 0.0
    %486 = vmatprep.subr.mxu0 0.0
    %487 = vmatpush1.msra.mxu0 0.0
    %488 = vmatprep.subr.mxu0 0.0
    %489 = vmatpush1.msra.mxu0 0.0
    %490 = vmatprep.subr.mxu0 0.0
    %491 = vmatpush1.msra.mxu0 0.0
    %492 = vmatprep.subr.mxu0 0.0
    %493 = vmatpush1.msra.mxu0 %v455
    %494 = vmatprep.subr.mxu0 0.0
    %495 = vmatpush1.msra.mxu0 %v453
    %496 = vmatprep.subr.mxu0 0.0
    %497 = vmatpush2.msra.mxu0 0.0
    %498 = vmatprep.subr.mxu0 0.0
    %499 = vmatpush2.msra.mxu0 0.0
    %500 = vmatprep.subr.mxu0 0.0
    %501 = vmatpush2.msra.mxu0 0.0
    %502 = vmatprep.subr.mxu0 0.0
    %503 = vmatpush2.msra.mxu0 0.0
    %504 = vmatprep.subr.mxu0 0.0
    %505 = vmatpush2.msra.mxu0 0.0
    %506 = vmatprep.subr.mxu0 0.0
    %507 = vmatpush2.msra.mxu0 0.0
    %508 = vmatprep.subr.mxu0 0.0
    %509 = vmatpush2.msra.mxu0 0.0
    %510 = vmatprep.subr.mxu0 0.0
    %511 = vmatpush2.msra.mxu0 0.0
    %512 = vmatprep.subr.mxu0 0.0
    %513 = vmatpush2.msra.mxu0 0.0
    %514 = vmatprep.subr.mxu0 0.0
    %515 = vmatpush2.msra.mxu0 0.0
    %516 = vmatprep.subr.mxu0 0.0
    %517 = vmatpush2.msra.mxu0 0.0
    %518 = vmatprep.subr.mxu0 0.0
    %519 = vmatpush2.msra.mxu0 0.0
    %520 = vmatprep.subr.mxu0 0.0
    %521 = vmatpush2.msra.mxu0 0.0
    %522 = vmatprep.subr.mxu0 0.0
    %523 = vmatpush2.msra.mxu0 0.0
    %524 = vmatprep.subr.mxu0 0.0
    %525 = vmatpush2.msra.mxu0 0.0
    %526 = vmatprep.subr.mxu0 0.0
    %527 = vmatpush2.msra.mxu0 0.0
    %528 = vmatprep.mubr.f32.mxu0 0.0
    %529 = vmatmul.mubr.f32.gmra.mxu0 %v459
    %v530 = vpop.f32.mrf.mxu0
    %v531 = vadd.f32 %v442, %v530
    %v532 = vpop.f32.mrf.mxu0
    %533 = vmatprep.mubr.f32.mxu0 0.0
    %534 = vmatmul.mubr.f32.gmra.mxu0 %v462
    %v535 = vpop.f32.mrf.mxu0
    %v536 = vadd.f32 %v447, %v535
    %v537 = vpop.f32.mrf.mxu0
    %538 = vdwg.mxu0
    %v539 = vlaneseq
    %v540 = vshrl.u32 %v539, 7
    %v541 = vsub.s32 2, %v540
    %v542 = vrot.slane %v28, %v541
    %v543 = vmul.f32 %v112, %v542
    %v544 = vmul.f32 %v117, %v542
    %v546 = vsel %vm38, %v543, 0
    %v549 = vsel %vm38, %v544, 0
    %551 = vmatprep.subr.mxu0 0.0
    %552 = vmatpush1.xpose.msra.mxu0 0.0
    %553 = vmatprep.subr.mxu0 0.0
    %554 = vmatpush1.xpose.msra.mxu0 0.0
    %555 = vmatprep.subr.mxu0 0.0
    %556 = vmatpush1.xpose.msra.mxu0 0.0
    %557 = vmatprep.subr.mxu0 0.0
    %558 = vmatpush1.xpose.msra.mxu0 0.0
    %559 = vmatprep.subr.mxu0 0.0
    %560 = vmatpush1.xpose.msra.mxu0 0.0
    %561 = vmatprep.subr.mxu0 0.0
    %562 = vmatpush1.xpose.msra.mxu0 0.0
    %563 = vmatprep.subr.mxu0 0.0
    %564 = vmatpush1.xpose.msra.mxu0 0.0
    %565 = vmatprep.subr.mxu0 0.0
    %566 = vmatpush1.xpose.msra.mxu0 0.0
    %567 = vmatprep.subr.mxu0 0.0
    %568 = vmatpush1.xpose.msra.mxu0 0.0
    %569 = vmatprep.subr.mxu0 0.0
    %570 = vmatpush1.xpose.msra.mxu0 0.0
    %571 = vmatprep.subr.mxu0 0.0
    %572 = vmatpush1.xpose.msra.mxu0 0.0
    %573 = vmatprep.subr.mxu0 0.0
    %574 = vmatpush1.xpose.msra.mxu0 0.0
    %575 = vmatprep.subr.mxu0 0.0
    %576 = vmatpush1.xpose.msra.mxu0 0.0
    %577 = vmatprep.subr.mxu0 0.0
    %578 = vmatpush1.xpose.msra.mxu0 0.0
    %579 = vmatprep.subr.mxu0 0.0
    %580 = vmatpush1.xpose.msra.mxu0 %v140
    %581 = vmatprep.subr.mxu0 0.0
    %582 = vmatpush1.xpose.msra.mxu0 %v138
    %583 = vmatprep.subr.mxu0 0.0
    %584 = vmatpush2.xpose.msra.mxu0 0.0
    %585 = vmatprep.subr.mxu0 0.0
    %586 = vmatpush2.xpose.msra.mxu0 0.0
    %587 = vmatprep.subr.mxu0 0.0
    %588 = vmatpush2.xpose.msra.mxu0 0.0
    %589 = vmatprep.subr.mxu0 0.0
    %590 = vmatpush2.xpose.msra.mxu0 0.0
    %591 = vmatprep.subr.mxu0 0.0
    %592 = vmatpush2.xpose.msra.mxu0 0.0
    %593 = vmatprep.subr.mxu0 0.0
    %594 = vmatpush2.xpose.msra.mxu0 0.0
    %595 = vmatprep.subr.mxu0 0.0
    %596 = vmatpush2.xpose.msra.mxu0 0.0
    %597 = vmatprep.subr.mxu0 0.0
    %598 = vmatpush2.xpose.msra.mxu0 0.0
    %599 = vmatprep.subr.mxu0 0.0
    %600 = vmatpush2.xpose.msra.mxu0 0.0
    %601 = vmatprep.subr.mxu0 0.0
    %602 = vmatpush2.xpose.msra.mxu0 0.0
    %603 = vmatprep.subr.mxu0 0.0
    %604 = vmatpush2.xpose.msra.mxu0 0.0
    %605 = vmatprep.subr.mxu0 0.0
    %606 = vmatpush2.xpose.msra.mxu0 0.0
    %607 = vmatprep.subr.mxu0 0.0
    %608 = vmatpush2.xpose.msra.mxu0 0.0
    %609 = vmatprep.subr.mxu0 0.0
    %610 = vmatpush2.xpose.msra.mxu0 0.0
    %611 = vmatprep.subr.mxu0 0.0
    %612 = vmatpush2.xpose.msra.mxu0 0.0
    %613 = vmatprep.subr.mxu0 0.0
    %614 = vmatpush2.xpose.msra.mxu0 0.0
    %615 = vmatprep.mubr.f32.mxu0 0.0
    %616 = vmatmul.mubr.f32.gmra.mxu0 %v546
    %v617 = vpop.f32.mrf.mxu0
    %v618 = vadd.f32 %v26, %v617
    %v619 = vpop.f32.mrf.mxu0
    %620 = vmatprep.mubr.f32.mxu0 0.0
    %621 = vmatmul.mubr.f32.gmra.mxu0 %v549
    %v622 = vpop.f32.mrf.mxu0
    %v623 = vadd.f32 %v27, %v622
    %v624 = vpop.f32.mrf.mxu0
    %625 = vdwg.mxu0
    %v626 = vsel %vm217, %v618, -inf
    %627 = vmax.xlane.f32.xlu0 %v626
    %v628 = vpop.xlane.xlu0 %627
    %v629 = vsel %vm217, %v623, -inf
    %630 = vmax.xlane.f32.xlu0 %v629
    %v631 = vpop.xlane.xlu0 %630
    %v632 = vsub.f32 %v618, %v628
    %v633 = vsub.f32 %v623, %v631
    %v634 = vmul.f32 %v632, 1.442695
    %v635 = vpow.pop %v634
    %v636 = vmul.f32 %v633, 1.442695
    %v637 = vpow.pop %v636
    %v638 = vsel %vm217, %v635, 0.0
    %639 = vadd.xlane.f32.xlu0 %v638
    %v640 = vpop.xlane.xlu0 %639
    %v641 = vsel %vm217, %v637, 0.0
    %642 = vadd.xlane.f32.xlu0 %v641
    %v643 = vpop.xlane.xlu0 %642
    %v644 = vrcp.pop %v640
    %v645 = vrcp.pop %v643
    %v646 = vmul.f32 %v635, %v644
    %v647 = vmul.f32 %v637, %v645
    %649 = vrot.lane.b32.xlu0 %v542, 64
    %v650 = vpop.permute.xlu0 %649
    %v652 = vmul.f32 %v112, %v650
    %v653 = vmul.f32 %v117, %v650
    %656 = vrot.lane.b32.xlu0 %v652, 64
    %v657 = vpop.permute.xlu0 %656
    %658 = vrot.lane.b32.xlu0 %v653, 64
    %v659 = vpop.permute.xlu0 %658
    %v663 = vsel %vm217, %v646, 0
    %v666 = vsel %vm217, %v647, 0
    %668 = vmatprep.subr.mxu0 0.0
    %669 = vmatpush1.msra.mxu0 0.0
    %670 = vmatprep.subr.mxu0 0.0
    %671 = vmatpush1.msra.mxu0 0.0
    %672 = vmatprep.subr.mxu0 0.0
    %673 = vmatpush1.msra.mxu0 0.0
    %674 = vmatprep.subr.mxu0 0.0
    %675 = vmatpush1.msra.mxu0 0.0
    %676 = vmatprep.subr.mxu0 0.0
    %677 = vmatpush1.msra.mxu0 0.0
    %678 = vmatprep.subr.mxu0 0.0
    %679 = vmatpush1.msra.mxu0 0.0
    %680 = vmatprep.subr.mxu0 0.0
    %681 = vmatpush1.msra.mxu0 0.0
    %682 = vmatprep.subr.mxu0 0.0
    %683 = vmatpush1.msra.mxu0 0.0
    %684 = vmatprep.subr.mxu0 0.0
    %685 = vmatpush1.msra.mxu0 0.0
    %686 = vmatprep.subr.mxu0 0.0
    %687 = vmatpush1.msra.mxu0 0.0
    %688 = vmatprep.subr.mxu0 0.0
    %689 = vmatpush1.msra.mxu0 0.0
    %690 = vmatprep.subr.mxu0 0.0
    %691 = vmatpush1.msra.mxu0 0.0
    %692 = vmatprep.subr.mxu0 0.0
    %693 = vmatpush1.msra.mxu0 0.0
    %694 = vmatprep.subr.mxu0 0.0
    %695 = vmatpush1.msra.mxu0 0.0
    %696 = vmatprep.subr.mxu0 0.0
    %697 = vmatpush1.msra.mxu0 %v659
    %698 = vmatprep.subr.mxu0 0.0
    %699 = vmatpush1.msra.mxu0 %v657
    %700 = vmatprep.subr.mxu0 0.0
    %701 = vmatpush2.msra.mxu0 0.0
    %702 = vmatprep.subr.mxu0 0.0
    %703 = vmatpush2.msra.mxu0 0.0
    %704 = vmatprep.subr.mxu0 0.0
    %705 = vmatpush2.msra.mxu0 0.0
    %706 = vmatprep.subr.mxu0 0.0
    %707 = vmatpush2.msra.mxu0 0.0
    %708 = vmatprep.subr.mxu0 0.0
    %709 = vmatpush2.msra.mxu0 0.0
    %710 = vmatprep.subr.mxu0 0.0
    %711 = vmatpush2.msra.mxu0 0.0
    %712 = vmatprep.subr.mxu0 0.0
    %713 = vmatpush2.msra.mxu0 0.0
    %714 = vmatprep.subr.mxu0 0.0
    %715 = vmatpush2.msra.mxu0 0.0
    %716 = vmatprep.subr.mxu0 0.0
    %717 = vmatpush2.msra.mxu0 0.0
    %718 = vmatprep.subr.mxu0 0.0
    %719 = vmatpush2.msra.mxu0 0.0
    %720 = vmatprep.subr.mxu0 0.0
    %721 = vmatpush2.msra.mxu0 0.0
    %722 = vmatprep.subr.mxu0 0.0
    %723 = vmatpush2.msra.mxu0 0.0
    %724 = vmatprep.subr.mxu0 0.0
    %725 = vmatpush2.msra.mxu0 0.0
    %726 = vmatprep.subr.mxu0 0.0
    %727 = vmatpush2.msra.mxu0 0.0
    %728 = vmatprep.subr.mxu0 0.0
    %729 = vmatpush2.msra.mxu0 0.0
    %730 = vmatprep.subr.mxu0 0.0
    %731 = vmatpush2.msra.mxu0 0.0
    %732 = vmatprep.mubr.f32.mxu0 0.0
    %733 = vmatmul.mubr.f32.gmra.mxu0 %v663
    %v734 = vpop.f32.mrf.mxu0
    %v735 = vadd.f32 0.0, %v734
    %v736 = vpop.f32.mrf.mxu0
    %737 = vmatprep.mubr.f32.mxu0 0.0
    %738 = vmatmul.mubr.f32.gmra.mxu0 %v666
    %v739 = vpop.f32.mrf.mxu0
    %v740 = vadd.f32 0.0, %v739
    %v741 = vpop.f32.mrf.mxu0
    %742 = vdwg.mxu0
    %v743 = vadd.f32 %v531, %v735
    %v744 = vadd.f32 %v536, %v740
    %v745 = vlaneseq
    %v746 = vshrl.u32 %v745, 7
    %v747 = vsub.s32 3, %v746
    %v748 = vrot.slane %v28, %v747
    %v749 = vmul.f32 %v112, %v748
    %v750 = vmul.f32 %v117, %v748
    %v752 = vsel %vm38, %v749, 0
    %v755 = vsel %vm38, %v750, 0
    %757 = vmatprep.subr.mxu0 0.0
    %758 = vmatpush1.xpose.msra.mxu0 0.0
    %759 = vmatprep.subr.mxu0 0.0
    %760 = vmatpush1.xpose.msra.mxu0 0.0
    %761 = vmatprep.subr.mxu0 0.0
    %762 = vmatpush1.xpose.msra.mxu0 0.0
    %763 = vmatprep.subr.mxu0 0.0
    %764 = vmatpush1.xpose.msra.mxu0 0.0
    %765 = vmatprep.subr.mxu0 0.0
    %766 = vmatpush1.xpose.msra.mxu0 0.0
    %767 = vmatprep.subr.mxu0 0.0
    %768 = vmatpush1.xpose.msra.mxu0 0.0
    %769 = vmatprep.subr.mxu0 0.0
    %770 = vmatpush1.xpose.msra.mxu0 0.0
    %771 = vmatprep.subr.mxu0 0.0
    %772 = vmatpush1.xpose.msra.mxu0 0.0
    %773 = vmatprep.subr.mxu0 0.0
    %774 = vmatpush1.xpose.msra.mxu0 0.0
    %775 = vmatprep.subr.mxu0 0.0
    %776 = vmatpush1.xpose.msra.mxu0 0.0
    %777 = vmatprep.subr.mxu0 0.0
    %778 = vmatpush1.xpose.msra.mxu0 0.0
    %779 = vmatprep.subr.mxu0 0.0
    %780 = vmatpush1.xpose.msra.mxu0 0.0
    %781 = vmatprep.subr.mxu0 0.0
    %782 = vmatpush1.xpose.msra.mxu0 0.0
    %783 = vmatprep.subr.mxu0 0.0
    %784 = vmatpush1.xpose.msra.mxu0 0.0
    %785 = vmatprep.subr.mxu0 0.0
    %786 = vmatpush1.xpose.msra.mxu0 %v140
    %787 = vmatprep.subr.mxu0 0.0
    %788 = vmatpush1.xpose.msra.mxu0 %v138
    %789 = vmatprep.subr.mxu0 0.0
    %790 = vmatpush2.xpose.msra.mxu0 0.0
    %791 = vmatprep.subr.mxu0 0.0
    %792 = vmatpush2.xpose.msra.mxu0 0.0
    %793 = vmatprep.subr.mxu0 0.0
    %794 = vmatpush2.xpose.msra.mxu0 0.0
    %795 = vmatprep.subr.mxu0 0.0
    %796 = vmatpush2.xpose.msra.mxu0 0.0
    %797 = vmatprep.subr.mxu0 0.0
    %798 = vmatpush2.xpose.msra.mxu0 0.0
    %799 = vmatprep.subr.mxu0 0.0
    %800 = vmatpush2.xpose.msra.mxu0 0.0
    %801 = vmatprep.subr.mxu0 0.0
    %802 = vmatpush2.xpose.msra.mxu0 0.0
    %803 = vmatprep.subr.mxu0 0.0
    %804 = vmatpush2.xpose.msra.mxu0 0.0
    %805 = vmatprep.subr.mxu0 0.0
    %806 = vmatpush2.xpose.msra.mxu0 0.0
    %807 = vmatprep.subr.mxu0 0.0
    %808 = vmatpush2.xpose.msra.mxu0 0.0
    %809 = vmatprep.subr.mxu0 0.0
    %810 = vmatpush2.xpose.msra.mxu0 0.0
    %811 = vmatprep.subr.mxu0 0.0
    %812 = vmatpush2.xpose.msra.mxu0 0.0
    %813 = vmatprep.subr.mxu0 0.0
    %814 = vmatpush2.xpose.msra.mxu0 0.0
    %815 = vmatprep.subr.mxu0 0.0
    %816 = vmatpush2.xpose.msra.mxu0 0.0
    %817 = vmatprep.subr.mxu0 0.0
    %818 = vmatpush2.xpose.msra.mxu0 0.0
    %819 = vmatprep.subr.mxu0 0.0
    %820 = vmatpush2.xpose.msra.mxu0 0.0
    %821 = vmatprep.mubr.f32.mxu0 0.0
    %822 = vmatmul.mubr.f32.gmra.mxu0 %v752
    %v823 = vpop.f32.mrf.mxu0
    %v824 = vadd.f32 %v26, %v823
    %v825 = vpop.f32.mrf.mxu0
    %826 = vmatprep.mubr.f32.mxu0 0.0
    %827 = vmatmul.mubr.f32.gmra.mxu0 %v755
    %v828 = vpop.f32.mrf.mxu0
    %v829 = vadd.f32 %v27, %v828
    %v830 = vpop.f32.mrf.mxu0
    %831 = vdwg.mxu0
    %v832 = vsel %vm217, %v824, -inf
    %833 = vmax.xlane.f32.xlu0 %v832
    %v834 = vpop.xlane.xlu0 %833
    %v835 = vsel %vm217, %v829, -inf
    %836 = vmax.xlane.f32.xlu0 %v835
    %v837 = vpop.xlane.xlu0 %836
    %v838 = vsub.f32 %v824, %v834
    %v839 = vsub.f32 %v829, %v837
    %v840 = vmul.f32 %v838, 1.442695
    %v841 = vpow.pop %v840
    %v842 = vmul.f32 %v839, 1.442695
    %v843 = vpow.pop %v842
    %v844 = vsel %vm217, %v841, 0.0
    %845 = vadd.xlane.f32.xlu0 %v844
    %v846 = vpop.xlane.xlu0 %845
    %v847 = vsel %vm217, %v843, 0.0
    %848 = vadd.xlane.f32.xlu0 %v847
    %v849 = vpop.xlane.xlu0 %848
    %v850 = vrcp.pop %v846
    %v851 = vrcp.pop %v849
    %v852 = vmul.f32 %v841, %v850
    %v853 = vmul.f32 %v843, %v851
    %855 = vrot.lane.b32.xlu0 %v748, 64
    %v856 = vpop.permute.xlu0 %855
    %v858 = vmul.f32 %v112, %v856
    %v859 = vmul.f32 %v117, %v856
    %862 = vrot.lane.b32.xlu0 %v858, 64
    %v863 = vpop.permute.xlu0 %862
    %864 = vrot.lane.b32.xlu0 %v859, 64
    %v865 = vpop.permute.xlu0 %864
    %v869 = vsel %vm217, %v852, 0
    %v872 = vsel %vm217, %v853, 0
    %874 = vmatprep.subr.mxu0 0.0
    %875 = vmatpush1.msra.mxu0 0.0
    %876 = vmatprep.subr.mxu0 0.0
    %877 = vmatpush1.msra.mxu0 0.0
    %878 = vmatprep.subr.mxu0 0.0
    %879 = vmatpush1.msra.mxu0 0.0
    %880 = vmatprep.subr.mxu0 0.0
    %881 = vmatpush1.msra.mxu0 0.0
    %882 = vmatprep.subr.mxu0 0.0
    %883 = vmatpush1.msra.mxu0 0.0
    %884 = vmatprep.subr.mxu0 0.0
    %885 = vmatpush1.msra.mxu0 0.0
    %886 = vmatprep.subr.mxu0 0.0
    %887 = vmatpush1.msra.mxu0 0.0
    %888 = vmatprep.subr.mxu0 0.0
    %889 = vmatpush1.msra.mxu0 0.0
    %890 = vmatprep.subr.mxu0 0.0
    %891 = vmatpush1.msra.mxu0 0.0
    %892 = vmatprep.subr.mxu0 0.0
    %893 = vmatpush1.msra.mxu0 0.0
    %894 = vmatprep.subr.mxu0 0.0
    %895 = vmatpush1.msra.mxu0 0.0
    %896 = vmatprep.subr.mxu0 0.0
    %897 = vmatpush1.msra.mxu0 0.0
    %898 = vmatprep.subr.mxu0 0.0
    %899 = vmatpush1.msra.mxu0 0.0
    %900 = vmatprep.subr.mxu0 0.0
    %901 = vmatpush1.msra.mxu0 0.0
    %902 = vmatprep.subr.mxu0 0.0
    %903 = vmatpush1.msra.mxu0 %v865
    %904 = vmatprep.subr.mxu0 0.0
    %905 = vmatpush1.msra.mxu0 %v863
    %906 = vmatprep.subr.mxu0 0.0
    %907 = vmatpush2.msra.mxu0 0.0
    %908 = vmatprep.subr.mxu0 0.0
    %909 = vmatpush2.msra.mxu0 0.0
    %910 = vmatprep.subr.mxu0 0.0
    %911 = vmatpush2.msra.mxu0 0.0
    %912 = vmatprep.subr.mxu0 0.0
    %913 = vmatpush2.msra.mxu0 0.0
    %914 = vmatprep.subr.mxu0 0.0
    %915 = vmatpush2.msra.mxu0 0.0
    %916 = vmatprep.subr.mxu0 0.0
    %917 = vmatpush2.msra.mxu0 0.0
    %918 = vmatprep.subr.mxu0 0.0
    %919 = vmatpush2.msra.mxu0 0.0
    %920 = vmatprep.subr.mxu0 0.0
    %921 = vmatpush2.msra.mxu0 0.0
    %922 = vmatprep.subr.mxu0 0.0
    %923 = vmatpush2.msra.mxu0 0.0
    %924 = vmatprep.subr.mxu0 0.0
    %925 = vmatpush2.msra.mxu0 0.0
    %926 = vmatprep.subr.mxu0 0.0
    %927 = vmatpush2.msra.mxu0 0.0
    %928 = vmatprep.subr.mxu0 0.0
    %929 = vmatpush2.msra.mxu0 0.0
    %930 = vmatprep.subr.mxu0 0.0
    %931 = vmatpush2.msra.mxu0 0.0
    %932 = vmatprep.subr.mxu0 0.0
    %933 = vmatpush2.msra.mxu0 0.0
    %934 = vmatprep.subr.mxu0 0.0
    %935 = vmatpush2.msra.mxu0 0.0
    %936 = vmatprep.subr.mxu0 0.0
    %937 = vmatpush2.msra.mxu0 0.0
    %938 = vmatprep.mubr.f32.mxu0 0.0
    %939 = vmatmul.mubr.f32.gmra.mxu0 %v869
    %v940 = vpop.f32.mrf.mxu0
    %v941 = vadd.f32 0.0, %v940
    %v942 = vpop.f32.mrf.mxu0
    %943 = vmatprep.mubr.f32.mxu0 0.0
    %944 = vmatmul.mubr.f32.gmra.mxu0 %v872
    %v945 = vpop.f32.mrf.mxu0
    %v946 = vadd.f32 0.0, %v945
    %v947 = vpop.f32.mrf.mxu0
    %948 = vdwg.mxu0
    %v949 = vadd.f32 %v743, %v941
    %v950 = vadd.f32 %v744, %v946
    %955 = vrot.lane.b32.xlu0 %v29, 32
    %v956 = vpop.permute.xlu0 %955
    %957 = vrot.lane.b32.xlu0 %v30, 32
    %v958 = vpop.permute.xlu0 %957
    %959 = vrot.lane.b32.xlu0 %v31, 32
    %v960 = vpop.permute.xlu0 %959
    %961 = vrot.lane.b32.xlu0 %v32, 32
    %v962 = vpop.permute.xlu0 %961
    %968 = vrot.lane.b32.xlu0 %v37, 32
    %v969 = vpop.permute.xlu0 %968
    %v972 = vsel %vm38, %v949, 0
    %v975 = vsel %vm38, %v950, 0
    %977 = vmatprep.subr.mxu0 0.0
    %978 = vmatpush1.msra.mxu0 0.0
    %979 = vmatprep.subr.mxu0 0.0
    %980 = vmatpush1.msra.mxu0 0.0
    %981 = vmatprep.subr.mxu0 0.0
    %982 = vmatpush1.msra.mxu0 0.0
    %983 = vmatprep.subr.mxu0 0.0
    %984 = vmatpush1.msra.mxu0 0.0
    %985 = vmatprep.subr.mxu0 0.0
    %986 = vmatpush1.msra.mxu0 0.0
    %987 = vmatprep.subr.mxu0 0.0
    %988 = vmatpush1.msra.mxu0 0.0
    %989 = vmatprep.subr.mxu0 0.0
    %990 = vmatpush1.msra.mxu0 0.0
    %991 = vmatprep.subr.mxu0 0.0
    %992 = vmatpush1.msra.mxu0 0.0
    %993 = vmatprep.subr.mxu0 0.0
    %994 = vmatpush1.msra.mxu0 0.0
    %995 = vmatprep.subr.mxu0 0.0
    %996 = vmatpush1.msra.mxu0 0.0
    %997 = vmatprep.subr.mxu0 0.0
    %998 = vmatpush1.msra.mxu0 0.0
    %999 = vmatprep.subr.mxu0 0.0
    %1000 = vmatpush1.msra.mxu0 0.0
    %1001 = vmatprep.subr.mxu0 0.0
    %1002 = vmatpush1.msra.mxu0 %v962
    %1003 = vmatprep.subr.mxu0 0.0
    %1004 = vmatpush1.msra.mxu0 %v960
    %1005 = vmatprep.subr.mxu0 0.0
    %1006 = vmatpush1.msra.mxu0 %v958
    %1007 = vmatprep.subr.mxu0 0.0
    %1008 = vmatpush1.msra.mxu0 %v956
    %1009 = vmatprep.subr.mxu0 0.0
    %1010 = vmatpush2.msra.mxu0 0.0
    %1011 = vmatprep.subr.mxu0 0.0
    %1012 = vmatpush2.msra.mxu0 0.0
    %1013 = vmatprep.subr.mxu0 0.0
    %1014 = vmatpush2.msra.mxu0 0.0
    %1015 = vmatprep.subr.mxu0 0.0
    %1016 = vmatpush2.msra.mxu0 0.0
    %1017 = vmatprep.subr.mxu0 0.0
    %1018 = vmatpush2.msra.mxu0 0.0
    %1019 = vmatprep.subr.mxu0 0.0
    %1020 = vmatpush2.msra.mxu0 0.0
    %1021 = vmatprep.subr.mxu0 0.0
    %1022 = vmatpush2.msra.mxu0 0.0
    %1023 = vmatprep.subr.mxu0 0.0
    %1024 = vmatpush2.msra.mxu0 0.0
    %1025 = vmatprep.subr.mxu0 0.0
    %1026 = vmatpush2.msra.mxu0 0.0
    %1027 = vmatprep.subr.mxu0 0.0
    %1028 = vmatpush2.msra.mxu0 0.0
    %1029 = vmatprep.subr.mxu0 0.0
    %1030 = vmatpush2.msra.mxu0 0.0
    %1031 = vmatprep.subr.mxu0 0.0
    %1032 = vmatpush2.msra.mxu0 0.0
    %1033 = vmatprep.subr.mxu0 0.0
    %1034 = vmatpush2.msra.mxu0 0.0
    %1035 = vmatprep.subr.mxu0 0.0
    %1036 = vmatpush2.msra.mxu0 0.0
    %1037 = vmatprep.subr.mxu0 0.0
    %1038 = vmatpush2.msra.mxu0 0.0
    %1039 = vmatprep.subr.mxu0 0.0
    %1040 = vmatpush2.msra.mxu0 0.0
    %1041 = vmatprep.mubr.f32.mxu0 0.0
    %1042 = vmatmul.mubr.f32.gmra.mxu0 %v972
    %v1043 = vpop.f32.mrf.mxu0
    %v1044 = vadd.f32 %v969, %v1043
    %v1045 = vpop.f32.mrf.mxu0
    %1046 = vmatprep.mubr.f32.mxu0 0.0
    %1047 = vmatmul.mubr.f32.gmra.mxu0 %v975
    %v1048 = vpop.f32.mrf.mxu0
    %v1049 = vadd.f32 %v969, %v1048
    %v1050 = vpop.f32.mrf.mxu0
    %1051 = vdwg.mxu0
    %v1052 = vadd.f32 %v1044, %v24
    %v1053 = vadd.f32 %v1049, %v25
    %v1054 = vsel %vm38, %v1052, 0.0
    %1055 = vadd.xlane.f32.xlu0 %v1054
    %v1056 = vpop.xlane.xlu0 %1055
    %v1057 = vsel %vm38, %v1053, 0.0
    %1058 = vadd.xlane.f32.xlu0 %v1057
    %v1059 = vpop.xlane.xlu0 %1058
    %v1060 = vrcp.pop 32.0
    %v1061 = vmul.f32 %v1056, %v1060
    %v1062 = vmul.f32 %v1059, %v1060
    %v1063 = vsub.f32 %v1052, %v1061
    %v1064 = vsub.f32 %v1053, %v1062
    %v1065 = vmul.f32 %v1063, %v1063
    %v1066 = vmul.f32 %v1064, %v1064
    %v1067 = vsel %vm38, %v1065, 0.0
    %1068 = vadd.xlane.f32.xlu0 %v1067
    %v1069 = vpop.xlane.xlu0 %1068
    %v1070 = vsel %vm38, %v1066, 0.0
    %1071 = vadd.xlane.f32.xlu0 %v1070
    %v1072 = vpop.xlane.xlu0 %1071
    %v1073 = vmul.f32 %v1069, %v1060
    %v1074 = vmul.f32 %v1072, %v1060
    %v1075 = vadd.f32 %v1073, 1e-12
    %v1076 = vadd.f32 %v1074, 1e-12
    %v1077 = vrsqrt.pop %v1075
    %v1078 = vrsqrt.pop %v1076
    %v1079 = vmul.f32 %v1063, %v1077
    %v1080 = vmul.f32 %v1064, %v1078
    %v1081 = vlaneseq
    %v1082 = vshrl.u32 %v1081, 7
    %v1083 = vsub.s32 1, %v1082
    %v1084 = vrot.slane %v33, %v1083
    %v1085 = vmul.f32 %v1079, %v1084
    %v1086 = vmul.f32 %v1080, %v1084
    %v1087 = vlaneseq
    %v1088 = vshrl.u32 %v1087, 7
    %v1089 = vsub.s32 2, %v1088
    %v1090 = vrot.slane %v33, %v1089
    %v1091 = vadd.f32 %v1085, %v1090
    %v1092 = vadd.f32 %v1086, %v1090
    %v1093 = vld [vmem:[%s5] sm:$0xff]
    %v1094 = vld [vmem:[%s5 + $0x8] sm:$0xff]
    %v1095 = vld [vmem:[%s5 + $0x10] sm:$0xff]
    %v1096 = vld [vmem:[%s5 + $0x18] sm:$0xff]
    %v1097 = vld [vmem:[%s5 + $0x20] sm:$0xff]
    %v1098 = vld [vmem:[%s5 + $0x28] sm:$0xff]
    %v1099 = vld [vmem:[%s5 + $0x30] sm:$0xff]
    %v1100 = vld [vmem:[%s5 + $0x38] sm:$0xff]
    %v1101 = vld [vmem:[%s5 + $0x40] sm:$0xff]
    %v1102 = vld [vmem:[%s5 + $0x48] sm:$0xff]
    %v1103 = vld [vmem:[%s5 + $0x50] sm:$0xff]
    %v1104 = vld [vmem:[%s5 + $0x58] sm:$0xff]
    %v1105 = vlaneseq
    %v1106 = vshrl.u32 %v1105, 7
    %v1107 = vsub.s32 3, %v1106
    %v1108 = vrot.slane %v33, %v1107
    %v1110 = vsel %vm38, %v1091, 0
    %v1113 = vsel %vm38, %v1092, 0
    %1115 = vmatprep.subr.mxu0 0.0
    %1116 = vmatpush1.msra.mxu0 0.0
    %1117 = vmatprep.subr.mxu0 0.0
    %1118 = vmatpush1.msra.mxu0 0.0
    %1119 = vmatprep.subr.mxu0 0.0
    %1120 = vmatpush1.msra.mxu0 0.0
    %1121 = vmatprep.subr.mxu0 0.0
    %1122 = vmatpush1.msra.mxu0 0.0
    %1123 = vmatprep.subr.mxu0 0.0
    %1124 = vmatpush1.msra.mxu0 0.0
    %1125 = vmatprep.subr.mxu0 0.0
    %1126 = vmatpush1.msra.mxu0 0.0
    %1127 = vmatprep.subr.mxu0 0.0
    %1128 = vmatpush1.msra.mxu0 0.0
    %1129 = vmatprep.subr.mxu0 0.0
    %1130 = vmatpush1.msra.mxu0 0.0
    %1131 = vmatprep.subr.mxu0 0.0
    %1132 = vmatpush1.msra.mxu0 0.0
    %1133 = vmatprep.subr.mxu0 0.0
    %1134 = vmatpush1.msra.mxu0 0.0
    %1135 = vmatprep.subr.mxu0 0.0
    %1136 = vmatpush1.msra.mxu0 0.0
    %1137 = vmatprep.subr.mxu0 0.0
    %1138 = vmatpush1.msra.mxu0 0.0
    %1139 = vmatprep.subr.mxu0 0.0
    %1140 = vmatpush1.msra.mxu0 %v1096
    %1141 = vmatprep.subr.mxu0 0.0
    %1142 = vmatpush1.msra.mxu0 %v1095
    %1143 = vmatprep.subr.mxu0 0.0
    %1144 = vmatpush1.msra.mxu0 %v1094
    %1145 = vmatprep.subr.mxu0 0.0
    %1146 = vmatpush1.msra.mxu0 %v1093
    %1147 = vmatprep.subr.mxu0 0.0
    %1148 = vmatpush2.msra.mxu0 0.0
    %1149 = vmatprep.subr.mxu0 0.0
    %1150 = vmatpush2.msra.mxu0 0.0
    %1151 = vmatprep.subr.mxu0 0.0
    %1152 = vmatpush2.msra.mxu0 0.0
    %1153 = vmatprep.subr.mxu0 0.0
    %1154 = vmatpush2.msra.mxu0 0.0
    %1155 = vmatprep.subr.mxu0 0.0
    %1156 = vmatpush2.msra.mxu0 0.0
    %1157 = vmatprep.subr.mxu0 0.0
    %1158 = vmatpush2.msra.mxu0 0.0
    %1159 = vmatprep.subr.mxu0 0.0
    %1160 = vmatpush2.msra.mxu0 0.0
    %1161 = vmatprep.subr.mxu0 0.0
    %1162 = vmatpush2.msra.mxu0 0.0
    %1163 = vmatprep.subr.mxu0 0.0
    %1164 = vmatpush2.msra.mxu0 0.0
    %1165 = vmatprep.subr.mxu0 0.0
    %1166 = vmatpush2.msra.mxu0 0.0
    %1167 = vmatprep.subr.mxu0 0.0
    %1168 = vmatpush2.msra.mxu0 0.0
    %1169 = vmatprep.subr.mxu0 0.0
    %1170 = vmatpush2.msra.mxu0 0.0
    %1171 = vmatprep.subr.mxu0 0.0
    %1172 = vmatpush2.msra.mxu0 0.0
    %1173 = vmatprep.subr.mxu0 0.0
    %1174 = vmatpush2.msra.mxu0 0.0
    %1175 = vmatprep.subr.mxu0 0.0
    %1176 = vmatpush2.msra.mxu0 0.0
    %1177 = vmatprep.subr.mxu0 0.0
    %1178 = vmatpush2.msra.mxu0 0.0
    %1179 = vmatprep.mubr.f32.mxu0 0.0
    %1180 = vmatmul.mubr.f32.gmra.mxu0 %v1110
    %v1181 = vpop.f32.mrf.mxu0
    %v1182 = vadd.f32 %v1108, %v1181
    %v1183 = vpop.f32.mrf.mxu0
    %1184 = vmatprep.mubr.f32.mxu0 0.0
    %1185 = vmatmul.mubr.f32.gmra.mxu0 %v1113
    %v1186 = vpop.f32.mrf.mxu0
    %v1187 = vadd.f32 %v1108, %v1186
    %v1188 = vpop.f32.mrf.mxu0
    %1189 = vdwg.mxu0
    %v1190 = vmul.f32 %v1182, 0.5
    %v1191 = vmul.f32 %v1187, 0.5
    %v1192 = vmul.f32 %v1182, 0.044715
    %v1193 = vmul.f32 %v1187, 0.044715
    %v1194 = vmul.f32 %v1192, %v1182
    %v1195 = vmul.f32 %v1193, %v1187
    %v1196 = vmul.f32 %v1194, %v1182
    %v1197 = vmul.f32 %v1195, %v1187
    %v1198 = vadd.f32 %v1182, %v1196
    %v1199 = vadd.f32 %v1187, %v1197
    %v1200 = vmul.f32 %v1198, 0.7978846
    %v1201 = vmul.f32 %v1199, 0.7978846
    %v1202 = vtanh.pop %v1200
    %v1203 = vtanh.pop %v1201
    %v1204 = vadd.f32 %v1202, 1.0
    %v1205 = vadd.f32 %v1203, 1.0
    %v1206 = vmul.f32 %v1190, %v1204
    %v1207 = vmul.f32 %v1191, %v1205
    %v1208 = vlaneseq
    %v1209 = vshrl.u32 %v1208, 7
    %v1210 = vsub.s32 4, %v1209
    %v1211 = vrot.slane %v33, %v1210
    %vm1212 = vcmask 523264
    %v1214 = vsel %vm1212, %v1206, 0
    %v1217 = vsel %vm1212, %v1207, 0
    %1219 = vmatprep.subr.mxu0 0.0
    %1220 = vmatpush1.msra.mxu0 0.0
    %1221 = vmatprep.subr.mxu0 0.0
    %1222 = vmatpush1.msra.mxu0 0.0
    %1223 = vmatprep.subr.mxu0 0.0
    %1224 = vmatpush1.msra.mxu0 0.0
    %1225 = vmatprep.subr.mxu0 0.0
    %1226 = vmatpush1.msra.mxu0 0.0
    %1227 = vmatprep.subr.mxu0 0.0
    %1228 = vmatpush1.msra.mxu0 0.0
    %1229 = vmatprep.subr.mxu0 0.0
    %1230 = vmatpush1.msra.mxu0 0.0
    %1231 = vmatprep.subr.mxu0 0.0
    %1232 = vmatpush1.msra.mxu0 0.0
    %1233 = vmatprep.subr.mxu0 0.0
    %1234 = vmatpush1.msra.mxu0 0.0
    %1235 = vmatprep.subr.mxu0 0.0
    %1236 = vmatpush1.msra.mxu0 %v1104
    %1237 = vmatprep.subr.mxu0 0.0
    %1238 = vmatpush1.msra.mxu0 %v1103
    %1239 = vmatprep.subr.mxu0 0.0
    %1240 = vmatpush1.msra.mxu0 %v1102
    %1241 = vmatprep.subr.mxu0 0.0
    %1242 = vmatpush1.msra.mxu0 %v1101
    %1243 = vmatprep.subr.mxu0 0.0
    %1244 = vmatpush1.msra.mxu0 %v1100
    %1245 = vmatprep.subr.mxu0 0.0
    %1246 = vmatpush1.msra.mxu0 %v1099
    %1247 = vmatprep.subr.mxu0 0.0
    %1248 = vmatpush1.msra.mxu0 %v1098
    %1249 = vmatprep.subr.mxu0 0.0
    %1250 = vmatpush1.msra.mxu0 %v1097
    %1251 = vmatprep.subr.mxu0 0.0
    %1252 = vmatpush2.msra.mxu0 0.0
    %1253 = vmatprep.subr.mxu0 0.0
    %1254 = vmatpush2.msra.mxu0 0.0
    %1255 = vmatprep.subr.mxu0 0.0
    %1256 = vmatpush2.msra.mxu0 0.0
    %1257 = vmatprep.subr.mxu0 0.0
    %1258 = vmatpush2.msra.mxu0 0.0
    %1259 = vmatprep.subr.mxu0 0.0
    %1260 = vmatpush2.msra.mxu0 0.0
    %1261 = vmatprep.subr.mxu0 0.0
    %1262 = vmatpush2.msra.mxu0 0.0
    %1263 = vmatprep.subr.mxu0 0.0
    %1264 = vmatpush2.msra.mxu0 0.0
    %1265 = vmatprep.subr.mxu0 0.0
    %1266 = vmatpush2.msra.mxu0 0.0
    %1267 = vmatprep.subr.mxu0 0.0
    %1268 = vmatpush2.msra.mxu0 0.0
    %1269 = vmatprep.subr.mxu0 0.0
    %1270 = vmatpush2.msra.mxu0 0.0
    %1271 = vmatprep.subr.mxu0 0.0
    %1272 = vmatpush2.msra.mxu0 0.0
    %1273 = vmatprep.subr.mxu0 0.0
    %1274 = vmatpush2.msra.mxu0 0.0
    %1275 = vmatprep.subr.mxu0 0.0
    %1276 = vmatpush2.msra.mxu0 0.0
    %1277 = vmatprep.subr.mxu0 0.0
    %1278 = vmatpush2.msra.mxu0 0.0
    %1279 = vmatprep.subr.mxu0 0.0
    %1280 = vmatpush2.msra.mxu0 0.0
    %1281 = vmatprep.subr.mxu0 0.0
    %1282 = vmatpush2.msra.mxu0 0.0
    %1283 = vmatprep.mubr.f32.mxu0 0.0
    %1284 = vmatmul.mubr.f32.gmra.mxu0 %v1214
    %v1285 = vpop.f32.mrf.mxu0
    %v1286 = vadd.f32 %v1211, %v1285
    %v1287 = vpop.f32.mrf.mxu0
    %1288 = vmatprep.mubr.f32.mxu0 0.0
    %1289 = vmatmul.mubr.f32.gmra.mxu0 %v1217
    %v1290 = vpop.f32.mrf.mxu0
    %v1291 = vadd.f32 %v1211, %v1290
    %v1292 = vpop.f32.mrf.mxu0
    %1293 = vdwg.mxu0
    %v1294 = vadd.f32 %v1286, %v1091
    %v1295 = vadd.f32 %v1291, %v1092
    %v1296 = vsel %vm38, %v1294, 0.0
    %1297 = vadd.xlane.f32.xlu0 %v1296
    %v1298 = vpop.xlane.xlu0 %1297
    %v1299 = vsel %vm38, %v1295, 0.0
    %1300 = vadd.xlane.f32.xlu0 %v1299
    %v1301 = vpop.xlane.xlu0 %1300
    %v1302 = vmul.f32 %v1298, %v1060
    %v1303 = vmul.f32 %v1301, %v1060
    %v1304 = vsub.f32 %v1294, %v1302
    %v1305 = vsub.f32 %v1295, %v1303
    %v1306 = vmul.f32 %v1304, %v1304
    %v1307 = vmul.f32 %v1305, %v1305
    %v1308 = vsel %vm38, %v1306, 0.0
    %1309 = vadd.xlane.f32.xlu0 %v1308
    %v1310 = vpop.xlane.xlu0 %1309
    %v1311 = vsel %vm38, %v1307, 0.0
    %1312 = vadd.xlane.f32.xlu0 %v1311
    %v1313 = vpop.xlane.xlu0 %1312
    %v1314 = vmul.f32 %v1310, %v1060
    %v1315 = vmul.f32 %v1313, %v1060
    %v1316 = vadd.f32 %v1314, 1e-12
    %v1317 = vadd.f32 %v1315, 1e-12
    %v1318 = vrsqrt.pop %v1316
    %v1319 = vrsqrt.pop %v1317
    %v1320 = vmul.f32 %v1304, %v1318
    %v1321 = vmul.f32 %v1305, %v1319
    %v1322 = vlaneseq
    %v1323 = vshrl.u32 %v1322, 7
    %v1324 = vsub.s32 5, %v1323
    %v1325 = vrot.slane %v33, %v1324
    %v1326 = vmul.f32 %v1320, %v1325
    %v1327 = vmul.f32 %v1321, %v1325
    %v1328 = vlaneseq
    %v1329 = vshrl.u32 %v1328, 7
    %v1330 = vsub.s32 6, %v1329
    %v1331 = vrot.slane %v33, %v1330
    %v1332 = vadd.f32 %v1326, %v1331
    %v1333 = vadd.f32 %v1327, %v1331
    %s1334 = scalar_lea.vmem %s3, 32
    %v1335 = vld [vmem:[%s1334] sm:$0xff]
    %v1336 = vld [vmem:[%s1334 + $0x8] sm:$0xff]
    %v1337 = vld [vmem:[%s1334 + $0x10] sm:$0xff]
    %v1338 = vld [vmem:[%s1334 + $0x18] sm:$0xff]
    %s1339 = scalar_lea.vmem %s4, 8
    %v1340 = vld [vmem:[%s1339] sm:$0xff]
    %v1341 = vlaneseq
    %v1342 = vshrl.u32 %v1341, 7
    %v1343 = vsub.s32 0, %v1342
    %v1344 = vrot.slane %v1340, %v1343
    %v1346 = vsel %vm38, %v1332, 0
    %v1349 = vsel %vm38, %v1333, 0
    %1351 = vmatprep.subr.mxu0 0.0
    %1352 = vmatpush1.msra.mxu0 0.0
    %1353 = vmatprep.subr.mxu0 0.0
    %1354 = vmatpush1.msra.mxu0 0.0
    %1355 = vmatprep.subr.mxu0 0.0
    %1356 = vmatpush1.msra.mxu0 0.0
    %1357 = vmatprep.subr.mxu0 0.0
    %1358 = vmatpush1.msra.mxu0 0.0
    %1359 = vmatprep.subr.mxu0 0.0
    %1360 = vmatpush1.msra.mxu0 0.0
    %1361 = vmatprep.subr.mxu0 0.0
    %1362 = vmatpush1.msra.mxu0 0.0
    %1363 = vmatprep.subr.mxu0 0.0
    %1364 = vmatpush1.msra.mxu0 0.0
    %1365 = vmatprep.subr.mxu0 0.0
    %1366 = vmatpush1.msra.mxu0 0.0
    %1367 = vmatprep.subr.mxu0 0.0
    %1368 = vmatpush1.msra.mxu0 0.0
    %1369 = vmatprep.subr.mxu0 0.0
    %1370 = vmatpush1.msra.mxu0 0.0
    %1371 = vmatprep.subr.mxu0 0.0
    %1372 = vmatpush1.msra.mxu0 0.0
    %1373 = vmatprep.subr.mxu0 0.0
    %1374 = vmatpush1.msra.mxu0 0.0
    %1375 = vmatprep.subr.mxu0 0.0
    %1376 = vmatpush1.msra.mxu0 %v1338
    %1377 = vmatprep.subr.mxu0 0.0
    %1378 = vmatpush1.msra.mxu0 %v1337
    %1379 = vmatprep.subr.mxu0 0.0
    %1380 = vmatpush1.msra.mxu0 %v1336
    %1381 = vmatprep.subr.mxu0 0.0
    %1382 = vmatpush1.msra.mxu0 %v1335
    %1383 = vmatprep.subr.mxu0 0.0
    %1384 = vmatpush2.msra.mxu0 0.0
    %1385 = vmatprep.subr.mxu0 0.0
    %1386 = vmatpush2.msra.mxu0 0.0
    %1387 = vmatprep.subr.mxu0 0.0
    %1388 = vmatpush2.msra.mxu0 0.0
    %1389 = vmatprep.subr.mxu0 0.0
    %1390 = vmatpush2.msra.mxu0 0.0
    %1391 = vmatprep.subr.mxu0 0.0
    %1392 = vmatpush2.msra.mxu0 0.0
    %1393 = vmatprep.subr.mxu0 0.0
    %1394 = vmatpush2.msra.mxu0 0.0
    %1395 = vmatprep.subr.mxu0 0.0
    %1396 = vmatpush2.msra.mxu0 0.0
    %1397 = vmatprep.subr.mxu0 0.0
    %1398 = vmatpush2.msra.mxu0 0.0
    %1399 = vmatprep.subr.mxu0 0.0
    %1400 = vmatpush2.msra.mxu0 0.0
    %1401 = vmatprep.subr.mxu0 0.0
    %1402 = vmatpush2.msra.mxu0 0.0
    %1403 = vmatprep.subr.mxu0 0.0
    %1404 = vmatpush2.msra.mxu0 0.0
    %1405 = vmatprep.subr.mxu0 0.0
    %1406 = vmatpush2.msra.mxu0 0.0
    %1407 = vmatprep.subr.mxu0 0.0
    %1408 = vmatpush2.msra.mxu0 0.0
    %1409 = vmatprep.subr.mxu0 0.0
    %1410 = vmatpush2.msra.mxu0 0.0
    %1411 = vmatprep.subr.mxu0 0.0
    %1412 = vmatpush2.msra.mxu0 0.0
    %1413 = vmatprep.subr.mxu0 0.0
    %1414 = vmatpush2.msra.mxu0 0.0
    %1415 = vmatprep.mubr.f32.mxu0 0.0
    %1416 = vmatmul.mubr.f32.gmra.mxu0 %v1346
    %v1417 = vpop.f32.mrf.mxu0
    %v1418 = vadd.f32 %v1344, %v1417
    %v1419 = vpop.f32.mrf.mxu0
    %1420 = vmatprep.mubr.f32.mxu0 0.0
    %1421 = vmatmul.mubr.f32.gmra.mxu0 %v1349
    %v1422 = vpop.f32.mrf.mxu0
    %v1423 = vadd.f32 %v1344, %v1422
    %v1424 = vpop.f32.mrf.mxu0
    %1425 = vdwg.mxu0
    %v1426 = vmul.f32 %v1418, %v123
    %v1427 = vmul.f32 %v1423, %v123
    %1430 = vrot.lane.b32.xlu0 %v1418, 96
    %v1431 = vpop.permute.xlu0 %1430
    %1432 = vrot.lane.b32.xlu0 %v1423, 96
    %v1433 = vpop.permute.xlu0 %1432
    %v1435 = vsel %vm38, %v1426, 0
    %v1438 = vsel %vm38, %v1427, 0
    %v1440 = vsel %vm38, %v1431, 0
    %v1442 = vsel %vm38, %v1433, 0
    %1444 = vmatprep.subr.mxu0 0.0
    %1445 = vmatpush1.xpose.msra.mxu0 0.0
    %1446 = vmatprep.subr.mxu0 0.0
    %1447 = vmatpush1.xpose.msra.mxu0 0.0
    %1448 = vmatprep.subr.mxu0 0.0
    %1449 = vmatpush1.xpose.msra.mxu0 0.0
    %1450 = vmatprep.subr.mxu0 0.0
    %1451 = vmatpush1.xpose.msra.mxu0 0.0
    %1452 = vmatprep.subr.mxu0 0.0
    %1453 = vmatpush1.xpose.msra.mxu0 0.0
    %1454 = vmatprep.subr.mxu0 0.0
    %1455 = vmatpush1.xpose.msra.mxu0 0.0
    %1456 = vmatprep.subr.mxu0 0.0
    %1457 = vmatpush1.xpose.msra.mxu0 0.0
    %1458 = vmatprep.subr.mxu0 0.0
    %1459 = vmatpush1.xpose.msra.mxu0 0.0
    %1460 = vmatprep.subr.mxu0 0.0
    %1461 = vmatpush1.xpose.msra.mxu0 0.0
    %1462 = vmatprep.subr.mxu0 0.0
    %1463 = vmatpush1.xpose.msra.mxu0 0.0
    %1464 = vmatprep.subr.mxu0 0.0
    %1465 = vmatpush1.xpose.msra.mxu0 0.0
    %1466 = vmatprep.subr.mxu0 0.0
    %1467 = vmatpush1.xpose.msra.mxu0 0.0
    %1468 = vmatprep.subr.mxu0 0.0
    %1469 = vmatpush1.xpose.msra.mxu0 0.0
    %1470 = vmatprep.subr.mxu0 0.0
    %1471 = vmatpush1.xpose.msra.mxu0 0.0
    %1472 = vmatprep.subr.mxu0 0.0
    %1473 = vmatpush1.xpose.msra.mxu0 %v1442
    %1474 = vmatprep.subr.mxu0 0.0
    %1475 = vmatpush1.xpose.msra.mxu0 %v1440
    %1476 = vmatprep.subr.mxu0 0.0
    %1477 = vmatpush2.xpose.msra.mxu0 0.0
    %1478 = vmatprep.subr.mxu0 0.0
    %1479 = vmatpush2.xpose.msra.mxu0 0.0
    %1480 = vmatprep.subr.mxu0 0.0
    %1481 = vmatpush2.xpose.msra.mxu0 0.0
    %1482 = vmatprep.subr.mxu0 0.0
    %1483 = vmatpush2.xpose.msra.mxu0 0.0
    %1484 = vmatprep.subr.mxu0 0.0
    %1485 = vmatpush2.xpose.msra.mxu0 0.0
    %1486 = vmatprep.subr.mxu0 0.0
    %1487 = vmatpush2.xpose.msra.mxu0 0.0
    %1488 = vmatprep.subr.mxu0 0.0
    %1489 = vmatpush2.xpose.msra.mxu0 0.0
    %1490 = vmatprep.subr.mxu0 0.0
    %1491 = vmatpush2.xpose.msra.mxu0 0.0
    %1492 = vmatprep.subr.mxu0 0.0
    %1493 = vmatpush2.xpose.msra.mxu0 0.0
    %1494 = vmatprep.subr.mxu0 0.0
    %1495 = vmatpush2.xpose.msra.mxu0 0.0
    %1496 = vmatprep.subr.mxu0 0.0
    %1497 = vmatpush2.xpose.msra.mxu0 0.0
    %1498 = vmatprep.subr.mxu0 0.0
    %1499 = vmatpush2.xpose.msra.mxu0 0.0
    %1500 = vmatprep.subr.mxu0 0.0
    %1501 = vmatpush2.xpose.msra.mxu0 0.0
    %1502 = vmatprep.subr.mxu0 0.0
    %1503 = vmatpush2.xpose.msra.mxu0 0.0
    %1504 = vmatprep.subr.mxu0 0.0
    %1505 = vmatpush2.xpose.msra.mxu0 0.0
    %1506 = vmatprep.subr.mxu0 0.0
    %1507 = vmatpush2.xpose.msra.mxu0 0.0
    %1508 = vmatprep.mubr.f32.mxu0 0.0
    %1509 = vmatmul.mubr.f32.gmra.mxu0 %v1435
    %v1510 = vpop.f32.mrf.mxu0
    %v1511 = vadd.f32 %v26, %v1510
    %v1512 = vpop.f32.mrf.mxu0
    %1513 = vmatprep.mubr.f32.mxu0 0.0
    %1514 = vmatmul.mubr.f32.gmra.mxu0 %v1438
    %v1515 = vpop.f32.mrf.mxu0
    %v1516 = vadd.f32 %v27, %v1515
    %v1517 = vpop.f32.mrf.mxu0
    %1518 = vdwg.mxu0
    %v1519 = vsel %vm217, %v1511, -inf
    %1520 = vmax.xlane.f32.xlu0 %v1519
    %v1521 = vpop.xlane.xlu0 %1520
    %v1522 = vsel %vm217, %v1516, -inf
    %1523 = vmax.xlane.f32.xlu0 %v1522
    %v1524 = vpop.xlane.xlu0 %1523
    %v1525 = vsub.f32 %v1511, %v1521
    %v1526 = vsub.f32 %v1516, %v1524
    %v1527 = vmul.f32 %v1525, 1.442695
    %v1528 = vpow.pop %v1527
    %v1529 = vmul.f32 %v1526, 1.442695
    %v1530 = vpow.pop %v1529
    %v1531 = vsel %vm217, %v1528, 0.0
    %1532 = vadd.xlane.f32.xlu0 %v1531
    %v1533 = vpop.xlane.xlu0 %1532
    %v1534 = vsel %vm217, %v1530, 0.0
    %1535 = vadd.xlane.f32.xlu0 %v1534
    %v1536 = vpop.xlane.xlu0 %1535
    %v1537 = vrcp.pop %v1533
    %v1538 = vrcp.pop %v1536
    %v1539 = vmul.f32 %v1528, %v1537
    %v1540 = vmul.f32 %v1530, %v1538
    %v1541 = vmul.f32 %v1418, %v242
    %v1542 = vmul.f32 %v1423, %v242
    %v1543 = vmul.f32 %v1418, %v249
    %v1544 = vmul.f32 %v1423, %v249
    %v1546 = vsel %vm38, %v1543, 0
    %v1549 = vsel %vm38, %v1544, 0
    %1551 = vmatprep.subr.mxu0 0.0
    %1552 = vmatpush1.xpose.msra.mxu0 0.0
    %1553 = vmatprep.subr.mxu0 0.0
    %1554 = vmatpush1.xpose.msra.mxu0 0.0
    %1555 = vmatprep.subr.mxu0 0.0
    %1556 = vmatpush1.xpose.msra.mxu0 0.0
    %1557 = vmatprep.subr.mxu0 0.0
    %1558 = vmatpush1.xpose.msra.mxu0 0.0
    %1559 = vmatprep.subr.mxu0 0.0
    %1560 = vmatpush1.xpose.msra.mxu0 0.0
    %1561 = vmatprep.subr.mxu0 0.0
    %1562 = vmatpush1.xpose.msra.mxu0 0.0
    %1563 = vmatprep.subr.mxu0 0.0
    %1564 = vmatpush1.xpose.msra.mxu0 0.0
    %1565 = vmatprep.subr.mxu0 0.0
    %1566 = vmatpush1.xpose.msra.mxu0 0.0
    %1567 = vmatprep.subr.mxu0 0.0
    %1568 = vmatpush1.xpose.msra.mxu0 0.0
    %1569 = vmatprep.subr.mxu0 0.0
    %1570 = vmatpush1.xpose.msra.mxu0 0.0
    %1571 = vmatprep.subr.mxu0 0.0
    %1572 = vmatpush1.xpose.msra.mxu0 0.0
    %1573 = vmatprep.subr.mxu0 0.0
    %1574 = vmatpush1.xpose.msra.mxu0 0.0
    %1575 = vmatprep.subr.mxu0 0.0
    %1576 = vmatpush1.xpose.msra.mxu0 0.0
    %1577 = vmatprep.subr.mxu0 0.0
    %1578 = vmatpush1.xpose.msra.mxu0 0.0
    %1579 = vmatprep.subr.mxu0 0.0
    %1580 = vmatpush1.xpose.msra.mxu0 %v1442
    %1581 = vmatprep.subr.mxu0 0.0
    %1582 = vmatpush1.xpose.msra.mxu0 %v1440
    %1583 = vmatprep.subr.mxu0 0.0
    %1584 = vmatpush2.xpose.msra.mxu0 0.0
    %1585 = vmatprep.subr.mxu0 0.0
    %1586 = vmatpush2.xpose.msra.mxu0 0.0
    %1587 = vmatprep.subr.mxu0 0.0
    %1588 = vmatpush2.xpose.msra.mxu0 0.0
    %1589 = vmatprep.subr.mxu0 0.0
    %1590 = vmatpush2.xpose.msra.mxu0 0.0
    %1591 = vmatprep.subr.mxu0 0.0
    %1592 = vmatpush2.xpose.msra.mxu0 0.0
    %1593 = vmatprep.subr.mxu0 0.0
    %1594 = vmatpush2.xpose.msra.mxu0 0.0
    %1595 = vmatprep.subr.mxu0 0.0
    %1596 = vmatpush2.xpose.msra.mxu0 0.0
    %1597 = vmatprep.subr.mxu0 0.0
    %1598 = vmatpush2.xpose.msra.mxu0 0.0
    %1599 = vmatprep.subr.mxu0 0.0
    %1600 = vmatpush2.xpose.msra.mxu0 0.0
    %1601 = vmatprep.subr.mxu0 0.0
    %1602 = vmatpush2.xpose.msra.mxu0 0.0
    %1603 = vmatprep.subr.mxu0 0.0
    %1604 = vmatpush2.xpose.msra.mxu0 0.0
    %1605 = vmatprep.subr.mxu0 0.0
    %1606 = vmatpush2.xpose.msra.mxu0 0.0
    %1607 = vmatprep.subr.mxu0 0.0
    %1608 = vmatpush2.xpose.msra.mxu0 0.0
    %1609 = vmatprep.subr.mxu0 0.0
    %1610 = vmatpush2.xpose.msra.mxu0 0.0
    %1611 = vmatprep.subr.mxu0 0.0
    %1612 = vmatpush2.xpose.msra.mxu0 0.0
    %1613 = vmatprep.subr.mxu0 0.0
    %1614 = vmatpush2.xpose.msra.mxu0 0.0
    %1615 = vmatprep.mubr.f32.mxu0 0.0
    %1616 = vmatmul.mubr.f32.gmra.mxu0 %v1546
    %v1617 = vpop.f32.mrf.mxu0
    %v1618 = vadd.f32 %v26, %v1617
    %v1619 = vpop.f32.mrf.mxu0
    %1620 = vmatprep.mubr.f32.mxu0 0.0
    %1621 = vmatmul.mubr.f32.gmra.mxu0 %v1549
    %v1622 = vpop.f32.mrf.mxu0
    %v1623 = vadd.f32 %v27, %v1622
    %v1624 = vpop.f32.mrf.mxu0
    %1625 = vdwg.mxu0
    %v1626 = vsel %vm217, %v1618, -inf
    %1627 = vmax.xlane.f32.xlu0 %v1626
    %v1628 = vpop.xlane.xlu0 %1627
    %v1629 = vsel %vm217, %v1623, -inf
    %1630 = vmax.xlane.f32.xlu0 %v1629
    %v1631 = vpop.xlane.xlu0 %1630
    %v1632 = vsub.f32 %v1618, %v1628
    %v1633 = vsub.f32 %v1623, %v1631
    %v1634 = vmul.f32 %v1632, 1.442695
    %v1635 = vpow.pop %v1634
    %v1636 = vmul.f32 %v1633, 1.442695
    %v1637 = vpow.pop %v1636
    %v1638 = vsel %vm217, %v1635, 0.0
    %1639 = vadd.xlane.f32.xlu0 %v1638
    %v1640 = vpop.xlane.xlu0 %1639
    %v1641 = vsel %vm217, %v1637, 0.0
    %1642 = vadd.xlane.f32.xlu0 %v1641
    %v1643 = vpop.xlane.xlu0 %1642
    %v1644 = vrcp.pop %v1640
    %v1645 = vrcp.pop %v1643
    %v1646 = vmul.f32 %v1635, %v1644
    %v1647 = vmul.f32 %v1637, %v1645
    %v1648 = vmul.f32 %v1418, %v357
    %v1649 = vmul.f32 %v1423, %v357
    %1652 = vrot.lane.b32.xlu0 %v1648, 64
    %v1653 = vpop.permute.xlu0 %1652
    %1654 = vrot.lane.b32.xlu0 %v1649, 64
    %v1655 = vpop.permute.xlu0 %1654
    %v1659 = vsel %vm217, %v1646, 0
    %v1662 = vsel %vm217, %v1647, 0
    %1664 = vmatprep.subr.mxu0 0.0
    %1665 = vmatpush1.msra.mxu0 0.0
    %1666 = vmatprep.subr.mxu0 0.0
    %1667 = vmatpush1.msra.mxu0 0.0
    %1668 = vmatprep.subr.mxu0 0.0
    %1669 = vmatpush1.msra.mxu0 0.0
    %1670 = vmatprep.subr.mxu0 0.0
    %1671 = vmatpush1.msra.mxu0 0.0
    %1672 = vmatprep.subr.mxu0 0.0
    %1673 = vmatpush1.msra.mxu0 0.0
    %1674 = vmatprep.subr.mxu0 0.0
    %1675 = vmatpush1.msra.mxu0 0.0
    %1676 = vmatprep.subr.mxu0 0.0
    %1677 = vmatpush1.msra.mxu0 0.0
    %1678 = vmatprep.subr.mxu0 0.0
    %1679 = vmatpush1.msra.mxu0 0.0
    %1680 = vmatprep.subr.mxu0 0.0
    %1681 = vmatpush1.msra.mxu0 0.0
    %1682 = vmatprep.subr.mxu0 0.0
    %1683 = vmatpush1.msra.mxu0 0.0
    %1684 = vmatprep.subr.mxu0 0.0
    %1685 = vmatpush1.msra.mxu0 0.0
    %1686 = vmatprep.subr.mxu0 0.0
    %1687 = vmatpush1.msra.mxu0 0.0
    %1688 = vmatprep.subr.mxu0 0.0
    %1689 = vmatpush1.msra.mxu0 0.0
    %1690 = vmatprep.subr.mxu0 0.0
    %1691 = vmatpush1.msra.mxu0 0.0
    %1692 = vmatprep.subr.mxu0 0.0
    %1693 = vmatpush1.msra.mxu0 %v1655
    %1694 = vmatprep.subr.mxu0 0.0
    %1695 = vmatpush1.msra.mxu0 %v1653
    %1696 = vmatprep.subr.mxu0 0.0
    %1697 = vmatpush2.msra.mxu0 0.0
    %1698 = vmatprep.subr.mxu0 0.0
    %1699 = vmatpush2.msra.mxu0 0.0
    %1700 = vmatprep.subr.mxu0 0.0
    %1701 = vmatpush2.msra.mxu0 0.0
    %1702 = vmatprep.subr.mxu0 0.0
    %1703 = vmatpush2.msra.mxu0 0.0
    %1704 = vmatprep.subr.mxu0 0.0
    %1705 = vmatpush2.msra.mxu0 0.0
    %1706 = vmatprep.subr.mxu0 0.0
    %1707 = vmatpush2.msra.mxu0 0.0
    %1708 = vmatprep.subr.mxu0 0.0
    %1709 = vmatpush2.msra.mxu0 0.0
    %1710 = vmatprep.subr.mxu0 0.0
    %1711 = vmatpush2.msra.mxu0 0.0
    %1712 = vmatprep.subr.mxu0 0.0
    %1713 = vmatpush2.msra.mxu0 0.0
    %1714 = vmatprep.subr.mxu0 0.0
    %1715 = vmatpush2.msra.mxu0 0.0
    %1716 = vmatprep.subr.mxu0 0.0
    %1717 = vmatpush2.msra.mxu0 0.0
    %1718 = vmatprep.subr.mxu0 0.0
    %1719 = vmatpush2.msra.mxu0 0.0
    %1720 = vmatprep.subr.mxu0 0.0
    %1721 = vmatpush2.msra.mxu0 0.0
    %1722 = vmatprep.subr.mxu0 0.0
    %1723 = vmatpush2.msra.mxu0 0.0
    %1724 = vmatprep.subr.mxu0 0.0
    %1725 = vmatpush2.msra.mxu0 0.0
    %1726 = vmatprep.subr.mxu0 0.0
    %1727 = vmatpush2.msra.mxu0 0.0
    %1728 = vmatprep.mubr.f32.mxu0 0.0
    %1729 = vmatmul.mubr.f32.gmra.mxu0 %v1659
    %v1730 = vpop.f32.mrf.mxu0
    %v1731 = vadd.f32 0.0, %v1730
    %v1732 = vpop.f32.mrf.mxu0
    %1733 = vmatprep.mubr.f32.mxu0 0.0
    %1734 = vmatmul.mubr.f32.gmra.mxu0 %v1662
    %v1735 = vpop.f32.mrf.mxu0
    %v1736 = vadd.f32 0.0, %v1735
    %v1737 = vpop.f32.mrf.mxu0
    %1738 = vdwg.mxu0
    %1741 = vrot.lane.b32.xlu0 %v1541, 64
    %v1742 = vpop.permute.xlu0 %1741
    %1743 = vrot.lane.b32.xlu0 %v1542, 64
    %v1744 = vpop.permute.xlu0 %1743
    %v1748 = vsel %vm217, %v1539, 0
    %v1751 = vsel %vm217, %v1540, 0
    %1753 = vmatprep.subr.mxu0 0.0
    %1754 = vmatpush1.msra.mxu0 0.0
    %1755 = vmatprep.subr.mxu0 0.0
    %1756 = vmatpush1.msra.mxu0 0.0
    %1757 = vmatprep.subr.mxu0 0.0
    %1758 = vmatpush1.msra.mxu0 0.0
    %1759 = vmatprep.subr.mxu0 0.0
    %1760 = vmatpush1.msra.mxu0 0.0
    %1761 = vmatprep.subr.mxu0 0.0
    %1762 = vmatpush1.msra.mxu0 0.0
    %1763 = vmatprep.subr.mxu0 0.0
    %1764 = vmatpush1.msra.mxu0 0.0
    %1765 = vmatprep.subr.mxu0 0.0
    %1766 = vmatpush1.msra.mxu0 0.0
    %1767 = vmatprep.subr.mxu0 0.0
    %1768 = vmatpush1.msra.mxu0 0.0
    %1769 = vmatprep.subr.mxu0 0.0
    %1770 = vmatpush1.msra.mxu0 0.0
    %1771 = vmatprep.subr.mxu0 0.0
    %1772 = vmatpush1.msra.mxu0 0.0
    %1773 = vmatprep.subr.mxu0 0.0
    %1774 = vmatpush1.msra.mxu0 0.0
    %1775 = vmatprep.subr.mxu0 0.0
    %1776 = vmatpush1.msra.mxu0 0.0
    %1777 = vmatprep.subr.mxu0 0.0
    %1778 = vmatpush1.msra.mxu0 0.0
    %1779 = vmatprep.subr.mxu0 0.0
    %1780 = vmatpush1.msra.mxu0 0.0
    %1781 = vmatprep.subr.mxu0 0.0
    %1782 = vmatpush1.msra.mxu0 %v1744
    %1783 = vmatprep.subr.mxu0 0.0
    %1784 = vmatpush1.msra.mxu0 %v1742
    %1785 = vmatprep.subr.mxu0 0.0
    %1786 = vmatpush2.msra.mxu0 0.0
    %1787 = vmatprep.subr.mxu0 0.0
    %1788 = vmatpush2.msra.mxu0 0.0
    %1789 = vmatprep.subr.mxu0 0.0
    %1790 = vmatpush2.msra.mxu0 0.0
    %1791 = vmatprep.subr.mxu0 0.0
    %1792 = vmatpush2.msra.mxu0 0.0
    %1793 = vmatprep.subr.mxu0 0.0
    %1794 = vmatpush2.msra.mxu0 0.0
    %1795 = vmatprep.subr.mxu0 0.0
    %1796 = vmatpush2.msra.mxu0 0.0
    %1797 = vmatprep.subr.mxu0 0.0
    %1798 = vmatpush2.msra.mxu0 0.0
    %1799 = vmatprep.subr.mxu0 0.0
    %1800 = vmatpush2.msra.mxu0 0.0
    %1801 = vmatprep.subr.mxu0 0.0
    %1802 = vmatpush2.msra.mxu0 0.0
    %1803 = vmatprep.subr.mxu0 0.0
    %1804 = vmatpush2.msra.mxu0 0.0
    %1805 = vmatprep.subr.mxu0 0.0
    %1806 = vmatpush2.msra.mxu0 0.0
    %1807 = vmatprep.subr.mxu0 0.0
    %1808 = vmatpush2.msra.mxu0 0.0
    %1809 = vmatprep.subr.mxu0 0.0
    %1810 = vmatpush2.msra.mxu0 0.0
    %1811 = vmatprep.subr.mxu0 0.0
    %1812 = vmatpush2.msra.mxu0 0.0
    %1813 = vmatprep.subr.mxu0 0.0
    %1814 = vmatpush2.msra.mxu0 0.0
    %1815 = vmatprep.subr.mxu0 0.0
    %1816 = vmatpush2.msra.mxu0 0.0
    %1817 = vmatprep.mubr.f32.mxu0 0.0
    %1818 = vmatmul.mubr.f32.gmra.mxu0 %v1748
    %v1819 = vpop.f32.mrf.mxu0
    %v1820 = vadd.f32 %v1731, %v1819
    %v1821 = vpop.f32.mrf.mxu0
    %1822 = vmatprep.mubr.f32.mxu0 0.0
    %1823 = vmatmul.mubr.f32.gmra.mxu0 %v1751
    %v1824 = vpop.f32.mrf.mxu0
    %v1825 = vadd.f32 %v1736, %v1824
    %v1826 = vpop.f32.mrf.mxu0
    %1827 = vdwg.mxu0
    %v1828 = vmul.f32 %v1418, %v542
    %v1829 = vmul.f32 %v1423, %v542
    %v1831 = vsel %vm38, %v1828, 0
    %v1834 = vsel %vm38, %v1829, 0
    %1836 = vmatprep.subr.mxu0 0.0
    %1837 = vmatpush1.xpose.msra.mxu0 0.0
    %1838 = vmatprep.subr.mxu0 0.0
    %1839 = vmatpush1.xpose.msra.mxu0 0.0
    %1840 = vmatprep.subr.mxu0 0.0
    %1841 = vmatpush1.xpose.msra.mxu0 0.0
    %1842 = vmatprep.subr.mxu0 0.0
    %1843 = vmatpush1.xpose.msra.mxu0 0.0
    %1844 = vmatprep.subr.mxu0 0.0
    %1845 = vmatpush1.xpose.msra.mxu0 0.0
    %1846 = vmatprep.subr.mxu0 0.0
    %1847 = vmatpush1.xpose.msra.mxu0 0.0
    %1848 = vmatprep.subr.mxu0 0.0
    %1849 = vmatpush1.xpose.msra.mxu0 0.0
    %1850 = vmatprep.subr.mxu0 0.0
    %1851 = vmatpush1.xpose.msra.mxu0 0.0
    %1852 = vmatprep.subr.mxu0 0.0
    %1853 = vmatpush1.xpose.msra.mxu0 0.0
    %1854 = vmatprep.subr.mxu0 0.0
    %1855 = vmatpush1.xpose.msra.mxu0 0.0
    %1856 = vmatprep.subr.mxu0 0.0
    %1857 = vmatpush1.xpose.msra.mxu0 0.0
    %1858 = vmatprep.subr.mxu0 0.0
    %1859 = vmatpush1.xpose.msra.mxu0 0.0
    %1860 = vmatprep.subr.mxu0 0.0
    %1861 = vmatpush1.xpose.msra.mxu0 0.0
    %1862 = vmatprep.subr.mxu0 0.0
    %1863 = vmatpush1.xpose.msra.mxu0 0.0
    %1864 = vmatprep.subr.mxu0 0.0
    %1865 = vmatpush1.xpose.msra.mxu0 %v1442
    %1866 = vmatprep.subr.mxu0 0.0
    %1867 = vmatpush1.xpose.msra.mxu0 %v1440
    %1868 = vmatprep.subr.mxu0 0.0
    %1869 = vmatpush2.xpose.msra.mxu0 0.0
    %1870 = vmatprep.subr.mxu0 0.0
    %1871 = vmatpush2.xpose.msra.mxu0 0.0
    %1872 = vmatprep.subr.mxu0 0.0
    %1873 = vmatpush2.xpose.msra.mxu0 0.0
    %1874 = vmatprep.subr.mxu0 0.0
    %1875 = vmatpush2.xpose.msra.mxu0 0.0
    %1876 = vmatprep.subr.mxu0 0.0
    %1877 = vmatpush2.xpose.msra.mxu0 0.0
    %1878 = vmatprep.subr.mxu0 0.0
    %1879 = vmatpush2.xpose.msra.mxu0 0.0
    %1880 = vmatprep.subr.mxu0 0.0
    %1881 = vmatpush2.xpose.msra.mxu0 0.0
    %1882 = vmatprep.subr.mxu0 0.0
    %1883 = vmatpush2.xpose.msra.mxu0 0.0
    %1884 = vmatprep.subr.mxu0 0.0
    %1885 = vmatpush2.xpose.msra.mxu0 0.0
    %1886 = vmatprep.subr.mxu0 0.0
    %1887 = vmatpush2.xpose.msra.mxu0 0.0
    %1888 = vmatprep.subr.mxu0 0.0
    %1889 = vmatpush2.xpose.msra.mxu0 0.0
    %1890 = vmatprep.subr.mxu0 0.0
    %1891 = vmatpush2.xpose.msra.mxu0 0.0
    %1892 = vmatprep.subr.mxu0 0.0
    %1893 = vmatpush2.xpose.msra.mxu0 0.0
    %1894 = vmatprep.subr.mxu0 0.0
    %1895 = vmatpush2.xpose.msra.mxu0 0.0
    %1896 = vmatprep.subr.mxu0 0.0
    %1897 = vmatpush2.xpose.msra.mxu0 0.0
    %1898 = vmatprep.subr.mxu0 0.0
    %1899 = vmatpush2.xpose.msra.mxu0 0.0
    %1900 = vmatprep.mubr.f32.mxu0 0.0
    %1901 = vmatmul.mubr.f32.gmra.mxu0 %v1831
    %v1902 = vpop.f32.mrf.mxu0
    %v1903 = vadd.f32 %v26, %v1902
    %v1904 = vpop.f32.mrf.mxu0
    %1905 = vmatprep.mubr.f32.mxu0 0.0
    %1906 = vmatmul.mubr.f32.gmra.mxu0 %v1834
    %v1907 = vpop.f32.mrf.mxu0
    %v1908 = vadd.f32 %v27, %v1907
    %v1909 = vpop.f32.mrf.mxu0
    %1910 = vdwg.mxu0
    %v1911 = vsel %vm217, %v1903, -inf
    %1912 = vmax.xlane.f32.xlu0 %v1911
    %v1913 = vpop.xlane.xlu0 %1912
    %v1914 = vsel %vm217, %v1908, -inf
    %1915 = vmax.xlane.f32.xlu0 %v1914
    %v1916 = vpop.xlane.xlu0 %1915
    %v1917 = vsub.f32 %v1903, %v1913
    %v1918 = vsub.f32 %v1908, %v1916
    %v1919 = vmul.f32 %v1917, 1.442695
    %v1920 = vpow.pop %v1919
    %v1921 = vmul.f32 %v1918, 1.442695
    %v1922 = vpow.pop %v1921
    %v1923 = vsel %vm217, %v1920, 0.0
    %1924 = vadd.xlane.f32.xlu0 %v1923
    %v1925 = vpop.xlane.xlu0 %1924
    %v1926 = vsel %vm217, %v1922, 0.0
    %1927 = vadd.xlane.f32.xlu0 %v1926
    %v1928 = vpop.xlane.xlu0 %1927
    %v1929 = vrcp.pop %v1925
    %v1930 = vrcp.pop %v1928
    %v1931 = vmul.f32 %v1920, %v1929
    %v1932 = vmul.f32 %v1922, %v1930
    %v1933 = vmul.f32 %v1418, %v650
    %v1934 = vmul.f32 %v1423, %v650
    %1937 = vrot.lane.b32.xlu0 %v1933, 64
    %v1938 = vpop.permute.xlu0 %1937
    %1939 = vrot.lane.b32.xlu0 %v1934, 64
    %v1940 = vpop.permute.xlu0 %1939
    %v1944 = vsel %vm217, %v1931, 0
    %v1947 = vsel %vm217, %v1932, 0
    %1949 = vmatprep.subr.mxu0 0.0
    %1950 = vmatpush1.msra.mxu0 0.0
    %1951 = vmatprep.subr.mxu0 0.0
    %1952 = vmatpush1.msra.mxu0 0.0
    %1953 = vmatprep.subr.mxu0 0.0
    %1954 = vmatpush1.msra.mxu0 0.0
    %1955 = vmatprep.subr.mxu0 0.0
    %1956 = vmatpush1.msra.mxu0 0.0
    %1957 = vmatprep.subr.mxu0 0.0
    %1958 = vmatpush1.msra.mxu0 0.0
    %1959 = vmatprep.subr.mxu0 0.0
    %1960 = vmatpush1.msra.mxu0 0.0
    %1961 = vmatprep.subr.mxu0 0.0
    %1962 = vmatpush1.msra.mxu0 0.0
    %1963 = vmatprep.subr.mxu0 0.0
    %1964 = vmatpush1.msra.mxu0 0.0
    %1965 = vmatprep.subr.mxu0 0.0
    %1966 = vmatpush1.msra.mxu0 0.0
    %1967 = vmatprep.subr.mxu0 0.0
    %1968 = vmatpush1.msra.mxu0 0.0
    %1969 = vmatprep.subr.mxu0 0.0
    %1970 = vmatpush1.msra.mxu0 0.0
    %1971 = vmatprep.subr.mxu0 0.0
    %1972 = vmatpush1.msra.mxu0 0.0
    %1973 = vmatprep.subr.mxu0 0.0
    %1974 = vmatpush1.msra.mxu0 0.0
    %1975 = vmatprep.subr.mxu0 0.0
    %1976 = vmatpush1.msra.mxu0 0.0
    %1977 = vmatprep.subr.mxu0 0.0
    %1978 = vmatpush1.msra.mxu0 %v1940
    %1979 = vmatprep.subr.mxu0 0.0
    %1980 = vmatpush1.msra.mxu0 %v1938
    %1981 = vmatprep.subr.mxu0 0.0
    %1982 = vmatpush2.msra.mxu0 0.0
    %1983 = vmatprep.subr.mxu0 0.0
    %1984 = vmatpush2.msra.mxu0 0.0
    %1985 = vmatprep.subr.mxu0 0.0
    %1986 = vmatpush2.msra.mxu0 0.0
    %1987 = vmatprep.subr.mxu0 0.0
    %1988 = vmatpush2.msra.mxu0 0.0
    %1989 = vmatprep.subr.mxu0 0.0
    %1990 = vmatpush2.msra.mxu0 0.0
    %1991 = vmatprep.subr.mxu0 0.0
    %1992 = vmatpush2.msra.mxu0 0.0
    %1993 = vmatprep.subr.mxu0 0.0
    %1994 = vmatpush2.msra.mxu0 0.0
    %1995 = vmatprep.subr.mxu0 0.0
    %1996 = vmatpush2.msra.mxu0 0.0
    %1997 = vmatprep.subr.mxu0 0.0
    %1998 = vmatpush2.msra.mxu0 0.0
    %1999 = vmatprep.subr.mxu0 0.0
    %2000 = vmatpush2.msra.mxu0 0.0
    %2001 = vmatprep.subr.mxu0 0.0
    %2002 = vmatpush2.msra.mxu0 0.0
    %2003 = vmatprep.subr.mxu0 0.0
    %2004 = vmatpush2.msra.mxu0 0.0
    %2005 = vmatprep.subr.mxu0 0.0
    %2006 = vmatpush2.msra.mxu0 0.0
    %2007 = vmatprep.subr.mxu0 0.0
    %2008 = vmatpush2.msra.mxu0 0.0
    %2009 = vmatprep.subr.mxu0 0.0
    %2010 = vmatpush2.msra.mxu0 0.0
    %2011 = vmatprep.subr.mxu0 0.0
    %2012 = vmatpush2.msra.mxu0 0.0
    %2013 = vmatprep.mubr.f32.mxu0 0.0
    %2014 = vmatmul.mubr.f32.gmra.mxu0 %v1944
    %v2015 = vpop.f32.mrf.mxu0
    %v2016 = vadd.f32 0.0, %v2015
    %v2017 = vpop.f32.mrf.mxu0
    %2018 = vmatprep.mubr.f32.mxu0 0.0
    %2019 = vmatmul.mubr.f32.gmra.mxu0 %v1947
    %v2020 = vpop.f32.mrf.mxu0
    %v2021 = vadd.f32 0.0, %v2020
    %v2022 = vpop.f32.mrf.mxu0
    %2023 = vdwg.mxu0
    %v2024 = vadd.f32 %v1820, %v2016
    %v2025 = vadd.f32 %v1825, %v2021
    %v2026 = vmul.f32 %v1418, %v748
    %v2027 = vmul.f32 %v1423, %v748
    %v2029 = vsel %vm38, %v2026, 0
    %v2032 = vsel %vm38, %v2027, 0
    %2034 = vmatprep.subr.mxu0 0.0
    %2035 = vmatpush1.xpose.msra.mxu0 0.0
    %2036 = vmatprep.subr.mxu0 0.0
    %2037 = vmatpush1.xpose.msra.mxu0 0.0
    %2038 = vmatprep.subr.mxu0 0.0
    %2039 = vmatpush1.xpose.msra.mxu0 0.0
    %2040 = vmatprep.subr.mxu0 0.0
    %2041 = vmatpush1.xpose.msra.mxu0 0.0
    %2042 = vmatprep.subr.mxu0 0.0
    %2043 = vmatpush1.xpose.msra.mxu0 0.0
    %2044 = vmatprep.subr.mxu0 0.0
    %2045 = vmatpush1.xpose.msra.mxu0 0.0
    %2046 = vmatprep.subr.mxu0 0.0
    %2047 = vmatpush1.xpose.msra.mxu0 0.0
    %2048 = vmatprep.subr.mxu0 0.0
    %2049 = vmatpush1.xpose.msra.mxu0 0.0
    %2050 = vmatprep.subr.mxu0 0.0
    %2051 = vmatpush1.xpose.msra.mxu0 0.0
    %2052 = vmatprep.subr.mxu0 0.0
    %2053 = vmatpush1.xpose.msra.mxu0 0.0
    %2054 = vmatprep.subr.mxu0 0.0
    %2055 = vmatpush1.xpose.msra.mxu0 0.0
    %2056 = vmatprep.subr.mxu0 0.0
    %2057 = vmatpush1.xpose.msra.mxu0 0.0
    %2058 = vmatprep.subr.mxu0 0.0
    %2059 = vmatpush1.xpose.msra.mxu0 0.0
    %2060 = vmatprep.subr.mxu0 0.0
    %2061 = vmatpush1.xpose.msra.mxu0 0.0
    %2062 = vmatprep.subr.mxu0 0.0
    %2063 = vmatpush1.xpose.msra.mxu0 %v1442
    %2064 = vmatprep.subr.mxu0 0.0
    %2065 = vmatpush1.xpose.msra.mxu0 %v1440
    %2066 = vmatprep.subr.mxu0 0.0
    %2067 = vmatpush2.xpose.msra.mxu0 0.0
    %2068 = vmatprep.subr.mxu0 0.0
    %2069 = vmatpush2.xpose.msra.mxu0 0.0
    %2070 = vmatprep.subr.mxu0 0.0
    %2071 = vmatpush2.xpose.msra.mxu0 0.0
    %2072 = vmatprep.subr.mxu0 0.0
    %2073 = vmatpush2.xpose.msra.mxu0 0.0
    %2074 = vmatprep.subr.mxu0 0.0
    %2075 = vmatpush2.xpose.msra.mxu0 0.0
    %2076 = vmatprep.subr.mxu0 0.0
    %2077 = vmatpush2.xpose.msra.mxu0 0.0
    %2078 = vmatprep.subr.mxu0 0.0
    %2079 = vmatpush2.xpose.msra.mxu0 0.0
    %2080 = vmatprep.subr.mxu0 0.0
    %2081 = vmatpush2.xpose.msra.mxu0 0.0
    %2082 = vmatprep.subr.mxu0 0.0
    %2083 = vmatpush2.xpose.msra.mxu0 0.0
    %2084 = vmatprep.subr.mxu0 0.0
    %2085 = vmatpush2.xpose.msra.mxu0 0.0
    %2086 = vmatprep.subr.mxu0 0.0
    %2087 = vmatpush2.xpose.msra.mxu0 0.0
    %2088 = vmatprep.subr.mxu0 0.0
    %2089 = vmatpush2.xpose.msra.mxu0 0.0
    %2090 = vmatprep.subr.mxu0 0.0
    %2091 = vmatpush2.xpose.msra.mxu0 0.0
    %2092 = vmatprep.subr.mxu0 0.0
    %2093 = vmatpush2.xpose.msra.mxu0 0.0
    %2094 = vmatprep.subr.mxu0 0.0
    %2095 = vmatpush2.xpose.msra.mxu0 0.0
    %2096 = vmatprep.subr.mxu0 0.0
    %2097 = vmatpush2.xpose.msra.mxu0 0.0
    %2098 = vmatprep.mubr.f32.mxu0 0.0
    %2099 = vmatmul.mubr.f32.gmra.mxu0 %v2029
    %v2100 = vpop.f32.mrf.mxu0
    %v2101 = vadd.f32 %v26, %v2100
    %v2102 = vpop.f32.mrf.mxu0
    %2103 = vmatprep.mubr.f32.mxu0 0.0
    %2104 = vmatmul.mubr.f32.gmra.mxu0 %v2032
    %v2105 = vpop.f32.mrf.mxu0
    %v2106 = vadd.f32 %v27, %v2105
    %v2107 = vpop.f32.mrf.mxu0
    %2108 = vdwg.mxu0
    %v2109 = vsel %vm217, %v2101, -inf
    %2110 = vmax.xlane.f32.xlu0 %v2109
    %v2111 = vpop.xlane.xlu0 %2110
    %v2112 = vsel %vm217, %v2106, -inf
    %2113 = vmax.xlane.f32.xlu0 %v2112
    %v2114 = vpop.xlane.xlu0 %2113
    %v2115 = vsub.f32 %v2101, %v2111
    %v2116 = vsub.f32 %v2106, %v2114
    %v2117 = vmul.f32 %v2115, 1.442695
    %v2118 = vpow.pop %v2117
    %v2119 = vmul.f32 %v2116, 1.442695
    %v2120 = vpow.pop %v2119
    %v2121 = vsel %vm217, %v2118, 0.0
    %2122 = vadd.xlane.f32.xlu0 %v2121
    %v2123 = vpop.xlane.xlu0 %2122
    %v2124 = vsel %vm217, %v2120, 0.0
    %2125 = vadd.xlane.f32.xlu0 %v2124
    %v2126 = vpop.xlane.xlu0 %2125
    %v2127 = vrcp.pop %v2123
    %v2128 = vrcp.pop %v2126
    %v2129 = vmul.f32 %v2118, %v2127
    %v2130 = vmul.f32 %v2120, %v2128
    %v2131 = vmul.f32 %v1418, %v856
    %v2132 = vmul.f32 %v1423, %v856
    %2135 = vrot.lane.b32.xlu0 %v2131, 64
    %v2136 = vpop.permute.xlu0 %2135
    %2137 = vrot.lane.b32.xlu0 %v2132, 64
    %v2138 = vpop.permute.xlu0 %2137
    %v2142 = vsel %vm217, %v2129, 0
    %v2145 = vsel %vm217, %v2130, 0
    %2147 = vmatprep.subr.mxu0 0.0
    %2148 = vmatpush1.msra.mxu0 0.0
    %2149 = vmatprep.subr.mxu0 0.0
    %2150 = vmatpush1.msra.mxu0 0.0
    %2151 = vmatprep.subr.mxu0 0.0
    %2152 = vmatpush1.msra.mxu0 0.0
    %2153 = vmatprep.subr.mxu0 0.0
    %2154 = vmatpush1.msra.mxu0 0.0
    %2155 = vmatprep.subr.mxu0 0.0
    %2156 = vmatpush1.msra.mxu0 0.0
    %2157 = vmatprep.subr.mxu0 0.0
    %2158 = vmatpush1.msra.mxu0 0.0
    %2159 = vmatprep.subr.mxu0 0.0
    %2160 = vmatpush1.msra.mxu0 0.0
    %2161 = vmatprep.subr.mxu0 0.0
    %2162 = vmatpush1.msra.mxu0 0.0
    %2163 = vmatprep.subr.mxu0 0.0
    %2164 = vmatpush1.msra.mxu0 0.0
    %2165 = vmatprep.subr.mxu0 0.0
    %2166 = vmatpush1.msra.mxu0 0.0
    %2167 = vmatprep.subr.mxu0 0.0
    %2168 = vmatpush1.msra.mxu0 0.0
    %2169 = vmatprep.subr.mxu0 0.0
    %2170 = vmatpush1.msra.mxu0 0.0
    %2171 = vmatprep.subr.mxu0 0.0
    %2172 = vmatpush1.msra.mxu0 0.0
    %2173 = vmatprep.subr.mxu0 0.0
    %2174 = vmatpush1.msra.mxu0 0.0
    %2175 = vmatprep.subr.mxu0 0.0
    %2176 = vmatpush1.msra.mxu0 %v2138
    %2177 = vmatprep.subr.mxu0 0.0
    %2178 = vmatpush1.msra.mxu0 %v2136
    %2179 = vmatprep.subr.mxu0 0.0
    %2180 = vmatpush2.msra.mxu0 0.0
    %2181 = vmatprep.subr.mxu0 0.0
    %2182 = vmatpush2.msra.mxu0 0.0
    %2183 = vmatprep.subr.mxu0 0.0
    %2184 = vmatpush2.msra.mxu0 0.0
    %2185 = vmatprep.subr.mxu0 0.0
    %2186 = vmatpush2.msra.mxu0 0.0
    %2187 = vmatprep.subr.mxu0 0.0
    %2188 = vmatpush2.msra.mxu0 0.0
    %2189 = vmatprep.subr.mxu0 0.0
    %2190 = vmatpush2.msra.mxu0 0.0
    %2191 = vmatprep.subr.mxu0 0.0
    %2192 = vmatpush2.msra.mxu0 0.0
    %2193 = vmatprep.subr.mxu0 0.0
    %2194 = vmatpush2.msra.mxu0 0.0
    %2195 = vmatprep.subr.mxu0 0.0
    %2196 = vmatpush2.msra.mxu0 0.0
    %2197 = vmatprep.subr.mxu0 0.0
    %2198 = vmatpush2.msra.mxu0 0.0
    %2199 = vmatprep.subr.mxu0 0.0
    %2200 = vmatpush2.msra.mxu0 0.0
    %2201 = vmatprep.subr.mxu0 0.0
    %2202 = vmatpush2.msra.mxu0 0.0
    %2203 = vmatprep.subr.mxu0 0.0
    %2204 = vmatpush2.msra.mxu0 0.0
    %2205 = vmatprep.subr.mxu0 0.0
    %2206 = vmatpush2.msra.mxu0 0.0
    %2207 = vmatprep.subr.mxu0 0.0
    %2208 = vmatpush2.msra.mxu0 0.0
    %2209 = vmatprep.subr.mxu0 0.0
    %2210 = vmatpush2.msra.mxu0 0.0
    %2211 = vmatprep.mubr.f32.mxu0 0.0
    %2212 = vmatmul.mubr.f32.gmra.mxu0 %v2142
    %v2213 = vpop.f32.mrf.mxu0
    %v2214 = vadd.f32 0.0, %v2213
    %v2215 = vpop.f32.mrf.mxu0
    %2216 = vmatprep.mubr.f32.mxu0 0.0
    %2217 = vmatmul.mubr.f32.gmra.mxu0 %v2145
    %v2218 = vpop.f32.mrf.mxu0
    %v2219 = vadd.f32 0.0, %v2218
    %v2220 = vpop.f32.mrf.mxu0
    %2221 = vdwg.mxu0
    %v2222 = vadd.f32 %v2024, %v2214
    %v2223 = vadd.f32 %v2025, %v2219
    %2228 = vrot.lane.b32.xlu0 %v1335, 32
    %v2229 = vpop.permute.xlu0 %2228
    %2230 = vrot.lane.b32.xlu0 %v1336, 32
    %v2231 = vpop.permute.xlu0 %2230
    %2232 = vrot.lane.b32.xlu0 %v1337, 32
    %v2233 = vpop.permute.xlu0 %2232
    %2234 = vrot.lane.b32.xlu0 %v1338, 32
    %v2235 = vpop.permute.xlu0 %2234
    %2241 = vrot.lane.b32.xlu0 %v1344, 32
    %v2242 = vpop.permute.xlu0 %2241
    %v2245 = vsel %vm38, %v2222, 0
    %v2248 = vsel %vm38, %v2223, 0
    %2250 = vmatprep.subr.mxu0 0.0
    %2251 = vmatpush1.msra.mxu0 0.0
    %2252 = vmatprep.subr.mxu0 0.0
    %2253 = vmatpush1.msra.mxu0 0.0
    %2254 = vmatprep.subr.mxu0 0.0
    %2255 = vmatpush1.msra.mxu0 0.0
    %2256 = vmatprep.subr.mxu0 0.0
    %2257 = vmatpush1.msra.mxu0 0.0
    %2258 = vmatprep.subr.mxu0 0.0
    %2259 = vmatpush1.msra.mxu0 0.0
    %2260 = vmatprep.subr.mxu0 0.0
    %2261 = vmatpush1.msra.mxu0 0.0
    %2262 = vmatprep.subr.mxu0 0.0
    %2263 = vmatpush1.msra.mxu0 0.0
    %2264 = vmatprep.subr.mxu0 0.0
    %2265 = vmatpush1.msra.mxu0 0.0
    %2266 = vmatprep.subr.mxu0 0.0
    %2267 = vmatpush1.msra.mxu0 0.0
    %2268 = vmatprep.subr.mxu0 0.0
    %2269 = vmatpush1.msra.mxu0 0.0
    %2270 = vmatprep.subr.mxu0 0.0
    %2271 = vmatpush1.msra.mxu0 0.0
    %2272 = vmatprep.subr.mxu0 0.0
    %2273 = vmatpush1.msra.mxu0 0.0
    %2274 = vmatprep.subr.mxu0 0.0
    %2275 = vmatpush1.msra.mxu0 %v2235
    %2276 = vmatprep.subr.mxu0 0.0
    %2277 = vmatpush1.msra.mxu0 %v2233
    %2278 = vmatprep.subr.mxu0 0.0
    %2279 = vmatpush1.msra.mxu0 %v2231
    %2280 = vmatprep.subr.mxu0 0.0
    %2281 = vmatpush1.msra.mxu0 %v2229
    %2282 = vmatprep.subr.mxu0 0.0
    %2283 = vmatpush2.msra.mxu0 0.0
    %2284 = vmatprep.subr.mxu0 0.0
    %2285 = vmatpush2.msra.mxu0 0.0
    %2286 = vmatprep.subr.mxu0 0.0
    %2287 = vmatpush2.msra.mxu0 0.0
    %2288 = vmatprep.subr.mxu0 0.0
    %2289 = vmatpush2.msra.mxu0 0.0
    %2290 = vmatprep.subr.mxu0 0.0
    %2291 = vmatpush2.msra.mxu0 0.0
    %2292 = vmatprep.subr.mxu0 0.0
    %2293 = vmatpush2.msra.mxu0 0.0
    %2294 = vmatprep.subr.mxu0 0.0
    %2295 = vmatpush2.msra.mxu0 0.0
    %2296 = vmatprep.subr.mxu0 0.0
    %2297 = vmatpush2.msra.mxu0 0.0
    %2298 = vmatprep.subr.mxu0 0.0
    %2299 = vmatpush2.msra.mxu0 0.0
    %2300 = vmatprep.subr.mxu0 0.0
    %2301 = vmatpush2.msra.mxu0 0.0
    %2302 = vmatprep.subr.mxu0 0.0
    %2303 = vmatpush2.msra.mxu0 0.0
    %2304 = vmatprep.subr.mxu0 0.0
    %2305 = vmatpush2.msra.mxu0 0.0
    %2306 = vmatprep.subr.mxu0 0.0
    %2307 = vmatpush2.msra.mxu0 0.0
    %2308 = vmatprep.subr.mxu0 0.0
    %2309 = vmatpush2.msra.mxu0 0.0
    %2310 = vmatprep.subr.mxu0 0.0
    %2311 = vmatpush2.msra.mxu0 0.0
    %2312 = vmatprep.subr.mxu0 0.0
    %2313 = vmatpush2.msra.mxu0 0.0
    %2314 = vmatprep.mubr.f32.mxu0 0.0
    %2315 = vmatmul.mubr.f32.gmra.mxu0 %v2245
    %v2316 = vpop.f32.mrf.mxu0
    %v2317 = vadd.f32 %v2242, %v2316
    %v2318 = vpop.f32.mrf.mxu0
    %2319 = vmatprep.mubr.f32.mxu0 0.0
    %2320 = vmatmul.mubr.f32.gmra.mxu0 %v2248
    %v2321 = vpop.f32.mrf.mxu0
    %v2322 = vadd.f32 %v2242, %v2321
    %v2323 = vpop.f32.mrf.mxu0
    %2324 = vdwg.mxu0
    %v2325 = vadd.f32 %v2317, %v1332
    %v2326 = vadd.f32 %v2322, %v1333
    %v2327 = vsel %vm38, %v2325, 0.0
    %2328 = vadd.xlane.f32.xlu0 %v2327
    %v2329 = vpop.xlane.xlu0 %2328
    %v2330 = vsel %vm38, %v2326, 0.0
    %2331 = vadd.xlane.f32.xlu0 %v2330
    %v2332 = vpop.xlane.xlu0 %2331
    %v2333 = vmul.f32 %v2329, %v1060
    %v2334 = vmul.f32 %v2332, %v1060
    %v2335 = vsub.f32 %v2325, %v2333
    %v2336 = vsub.f32 %v2326, %v2334
    %v2337 = vmul.f32 %v2335, %v2335
    %v2338 = vmul.f32 %v2336, %v2336
    %v2339 = vsel %vm38, %v2337, 0.0
    %2340 = vadd.xlane.f32.xlu0 %v2339
    %v2341 = vpop.xlane.xlu0 %2340
    %v2342 = vsel %vm38, %v2338, 0.0
    %2343 = vadd.xlane.f32.xlu0 %v2342
    %v2344 = vpop.xlane.xlu0 %2343
    %v2345 = vmul.f32 %v2341, %v1060
    %v2346 = vmul.f32 %v2344, %v1060
    %v2347 = vadd.f32 %v2345, 1e-12
    %v2348 = vadd.f32 %v2346, 1e-12
    %v2349 = vrsqrt.pop %v2347
    %v2350 = vrsqrt.pop %v2348
    %v2351 = vmul.f32 %v2335, %v2349
    %v2352 = vmul.f32 %v2336, %v2350
    %v2353 = vlaneseq
    %v2354 = vshrl.u32 %v2353, 7
    %v2355 = vsub.s32 1, %v2354
    %v2356 = vrot.slane %v1340, %v2355
    %v2357 = vmul.f32 %v2351, %v2356
    %v2358 = vmul.f32 %v2352, %v2356
    %v2359 = vlaneseq
    %v2360 = vshrl.u32 %v2359, 7
    %v2361 = vsub.s32 2, %v2360
    %v2362 = vrot.slane %v1340, %v2361
    %v2363 = vadd.f32 %v2357, %v2362
    %v2364 = vadd.f32 %v2358, %v2362
    %s2365 = scalar_lea.vmem %s5, 96
    %v2366 = vld [vmem:[%s2365] sm:$0xff]
    %v2367 = vld [vmem:[%s2365 + $0x8] sm:$0xff]
    %v2368 = vld [vmem:[%s2365 + $0x10] sm:$0xff]
    %v2369 = vld [vmem:[%s2365 + $0x18] sm:$0xff]
    %v2370 = vld [vmem:[%s2365 + $0x20] sm:$0xff]
    %v2371 = vld [vmem:[%s2365 + $0x28] sm:$0xff]
    %v2372 = vld [vmem:[%s2365 + $0x30] sm:$0xff]
    %v2373 = vld [vmem:[%s2365 + $0x38] sm:$0xff]
    %v2374 = vld [vmem:[%s2365 + $0x40] sm:$0xff]
    %v2375 = vld [vmem:[%s2365 + $0x48] sm:$0xff]
    %v2376 = vld [vmem:[%s2365 + $0x50] sm:$0xff]
    %v2377 = vld [vmem:[%s2365 + $0x58] sm:$0xff]
    %v2378 = vlaneseq
    %v2379 = vshrl.u32 %v2378, 7
    %v2380 = vsub.s32 3, %v2379
    %v2381 = vrot.slane %v1340, %v2380
    %v2383 = vsel %vm38, %v2363, 0
    %v2386 = vsel %vm38, %v2364, 0
    %2388 = vmatprep.subr.mxu0 0.0
    %2389 = vmatpush1.msra.mxu0 0.0
    %2390 = vmatprep.subr.mxu0 0.0
    %2391 = vmatpush1.msra.mxu0 0.0
    %2392 = vmatprep.subr.mxu0 0.0
    %2393 = vmatpush1.msra.mxu0 0.0
    %2394 = vmatprep.subr.mxu0 0.0
    %2395 = vmatpush1.msra.mxu0 0.0
    %2396 = vmatprep.subr.mxu0 0.0
    %2397 = vmatpush1.msra.mxu0 0.0
    %2398 = vmatprep.subr.mxu0 0.0
    %2399 = vmatpush1.msra.mxu0 0.0
    %2400 = vmatprep.subr.mxu0 0.0
    %2401 = vmatpush1.msra.mxu0 0.0
    %2402 = vmatprep.subr.mxu0 0.0
    %2403 = vmatpush1.msra.mxu0 0.0
    %2404 = vmatprep.subr.mxu0 0.0
    %2405 = vmatpush1.msra.mxu0 0.0
    %2406 = vmatprep.subr.mxu0 0.0
    %2407 = vmatpush1.msra.mxu0 0.0
    %2408 = vmatprep.subr.mxu0 0.0
    %2409 = vmatpush1.msra.mxu0 0.0
    %2410 = vmatprep.subr.mxu0 0.0
    %2411 = vmatpush1.msra.mxu0 0.0
    %2412 = vmatprep.subr.mxu0 0.0
    %2413 = vmatpush1.msra.mxu0 %v2369
    %2414 = vmatprep.subr.mxu0 0.0
    %2415 = vmatpush1.msra.mxu0 %v2368
    %2416 = vmatprep.subr.mxu0 0.0
    %2417 = vmatpush1.msra.mxu0 %v2367
    %2418 = vmatprep.subr.mxu0 0.0
    %2419 = vmatpush1.msra.mxu0 %v2366
    %2420 = vmatprep.subr.mxu0 0.0
    %2421 = vmatpush2.msra.mxu0 0.0
    %2422 = vmatprep.subr.mxu0 0.0
    %2423 = vmatpush2.msra.mxu0 0.0
    %2424 = vmatprep.subr.mxu0 0.0
    %2425 = vmatpush2.msra.mxu0 0.0
    %2426 = vmatprep.subr.mxu0 0.0
    %2427 = vmatpush2.msra.mxu0 0.0
    %2428 = vmatprep.subr.mxu0 0.0
    %2429 = vmatpush2.msra.mxu0 0.0
    %2430 = vmatprep.subr.mxu0 0.0
    %2431 = vmatpush2.msra.mxu0 0.0
    %2432 = vmatprep.subr.mxu0 0.0
    %2433 = vmatpush2.msra.mxu0 0.0
    %2434 = vmatprep.subr.mxu0 0.0
    %2435 = vmatpush2.msra.mxu0 0.0
    %2436 = vmatprep.subr.mxu0 0.0
    %2437 = vmatpush2.msra.mxu0 0.0
    %2438 = vmatprep.subr.mxu0 0.0
    %2439 = vmatpush2.msra.mxu0 0.0
    %2440 = vmatprep.subr.mxu0 0.0
    %2441 = vmatpush2.msra.mxu0 0.0
    %2442 = vmatprep.subr.mxu0 0.0
    %2443 = vmatpush2.msra.mxu0 0.0
    %2444 = vmatprep.subr.mxu0 0.0
    %2445 = vmatpush2.msra.mxu0 0.0
    %2446 = vmatprep.subr.mxu0 0.0
    %2447 = vmatpush2.msra.mxu0 0.0
    %2448 = vmatprep.subr.mxu0 0.0
    %2449 = vmatpush2.msra.mxu0 0.0
    %2450 = vmatprep.subr.mxu0 0.0
    %2451 = vmatpush2.msra.mxu0 0.0
    %2452 = vmatprep.mubr.f32.mxu0 0.0
    %2453 = vmatmul.mubr.f32.gmra.mxu0 %v2383
    %v2454 = vpop.f32.mrf.mxu0
    %v2455 = vadd.f32 %v2381, %v2454
    %v2456 = vpop.f32.mrf.mxu0
    %2457 = vmatprep.mubr.f32.mxu0 0.0
    %2458 = vmatmul.mubr.f32.gmra.mxu0 %v2386
    %v2459 = vpop.f32.mrf.mxu0
    %v2460 = vadd.f32 %v2381, %v2459
    %v2461 = vpop.f32.mrf.mxu0
    %2462 = vdwg.mxu0
    %v2463 = vmul.f32 %v2455, 0.5
    %v2464 = vmul.f32 %v2460, 0.5
    %v2465 = vmul.f32 %v2455, 0.044715
    %v2466 = vmul.f32 %v2460, 0.044715
    %v2467 = vmul.f32 %v2465, %v2455
    %v2468 = vmul.f32 %v2466, %v2460
    %v2469 = vmul.f32 %v2467, %v2455
    %v2470 = vmul.f32 %v2468, %v2460
    %v2471 = vadd.f32 %v2455, %v2469
    %v2472 = vadd.f32 %v2460, %v2470
    %v2473 = vmul.f32 %v2471, 0.7978846
    %v2474 = vmul.f32 %v2472, 0.7978846
    %v2475 = vtanh.pop %v2473
    %v2476 = vtanh.pop %v2474
    %v2477 = vadd.f32 %v2475, 1.0
    %v2478 = vadd.f32 %v2476, 1.0
    %v2479 = vmul.f32 %v2463, %v2477
    %v2480 = vmul.f32 %v2464, %v2478
    %v2481 = vlaneseq
    %v2482 = vshrl.u32 %v2481, 7
    %v2483 = vsub.s32 4, %v2482
    %v2484 = vrot.slane %v1340, %v2483
    %v2486 = vsel %vm1212, %v2479, 0
    %v2489 = vsel %vm1212, %v2480, 0
    %2491 = vmatprep.subr.mxu0 0.0
    %2492 = vmatpush1.msra.mxu0 0.0
    %2493 = vmatprep.subr.mxu0 0.0
    %2494 = vmatpush1.msra.mxu0 0.0
    %2495 = vmatprep.subr.mxu0 0.0
    %2496 = vmatpush1.msra.mxu0 0.0
    %2497 = vmatprep.subr.mxu0 0.0
    %2498 = vmatpush1.msra.mxu0 0.0
    %2499 = vmatprep.subr.mxu0 0.0
    %2500 = vmatpush1.msra.mxu0 0.0
    %2501 = vmatprep.subr.mxu0 0.0
    %2502 = vmatpush1.msra.mxu0 0.0
    %2503 = vmatprep.subr.mxu0 0.0
    %2504 = vmatpush1.msra.mxu0 0.0
    %2505 = vmatprep.subr.mxu0 0.0
    %2506 = vmatpush1.msra.mxu0 0.0
    %2507 = vmatprep.subr.mxu0 0.0
    %2508 = vmatpush1.msra.mxu0 %v2377
    %2509 = vmatprep.subr.mxu0 0.0
    %2510 = vmatpush1.msra.mxu0 %v2376
    %2511 = vmatprep.subr.mxu0 0.0
    %2512 = vmatpush1.msra.mxu0 %v2375
    %2513 = vmatprep.subr.mxu0 0.0
    %2514 = vmatpush1.msra.mxu0 %v2374
    %2515 = vmatprep.subr.mxu0 0.0
    %2516 = vmatpush1.msra.mxu0 %v2373
    %2517 = vmatprep.subr.mxu0 0.0
    %2518 = vmatpush1.msra.mxu0 %v2372
    %2519 = vmatprep.subr.mxu0 0.0
    %2520 = vmatpush1.msra.mxu0 %v2371
    %2521 = vmatprep.subr.mxu0 0.0
    %2522 = vmatpush1.msra.mxu0 %v2370
    %2523 = vmatprep.subr.mxu0 0.0
    %2524 = vmatpush2.msra.mxu0 0.0
    %2525 = vmatprep.subr.mxu0 0.0
    %2526 = vmatpush2.msra.mxu0 0.0
    %2527 = vmatprep.subr.mxu0 0.0
    %2528 = vmatpush2.msra.mxu0 0.0
    %2529 = vmatprep.subr.mxu0 0.0
    %2530 = vmatpush2.msra.mxu0 0.0
    %2531 = vmatprep.subr.mxu0 0.0
    %2532 = vmatpush2.msra.mxu0 0.0
    %2533 = vmatprep.subr.mxu0 0.0
    %2534 = vmatpush2.msra.mxu0 0.0
    %2535 = vmatprep.subr.mxu0 0.0
    %2536 = vmatpush2.msra.mxu0 0.0
    %2537 = vmatprep.subr.mxu0 0.0
    %2538 = vmatpush2.msra.mxu0 0.0
    %2539 = vmatprep.subr.mxu0 0.0
    %2540 = vmatpush2.msra.mxu0 0.0
    %2541 = vmatprep.subr.mxu0 0.0
    %2542 = vmatpush2.msra.mxu0 0.0
    %2543 = vmatprep.subr.mxu0 0.0
    %2544 = vmatpush2.msra.mxu0 0.0
    %2545 = vmatprep.subr.mxu0 0.0
    %2546 = vmatpush2.msra.mxu0 0.0
    %2547 = vmatprep.subr.mxu0 0.0
    %2548 = vmatpush2.msra.mxu0 0.0
    %2549 = vmatprep.subr.mxu0 0.0
    %2550 = vmatpush2.msra.mxu0 0.0
    %2551 = vmatprep.subr.mxu0 0.0
    %2552 = vmatpush2.msra.mxu0 0.0
    %2553 = vmatprep.subr.mxu0 0.0
    %2554 = vmatpush2.msra.mxu0 0.0
    %2555 = vmatprep.mubr.f32.mxu0 0.0
    %2556 = vmatmul.mubr.f32.gmra.mxu0 %v2486
    %v2557 = vpop.f32.mrf.mxu0
    %v2558 = vadd.f32 %v2484, %v2557
    %v2559 = vpop.f32.mrf.mxu0
    %2560 = vmatprep.mubr.f32.mxu0 0.0
    %2561 = vmatmul.mubr.f32.gmra.mxu0 %v2489
    %v2562 = vpop.f32.mrf.mxu0
    %v2563 = vadd.f32 %v2484, %v2562
    %v2564 = vpop.f32.mrf.mxu0
    %2565 = vdwg.mxu0
    %v2566 = vadd.f32 %v2558, %v2363
    %v2567 = vadd.f32 %v2563, %v2364
    %v2568 = vsel %vm38, %v2566, 0.0
    %2569 = vadd.xlane.f32.xlu0 %v2568
    %v2570 = vpop.xlane.xlu0 %2569
    %v2571 = vsel %vm38, %v2567, 0.0
    %2572 = vadd.xlane.f32.xlu0 %v2571
    %v2573 = vpop.xlane.xlu0 %2572
    %v2574 = vmul.f32 %v2570, %v1060
    %v2575 = vmul.f32 %v2573, %v1060
    %v2576 = vsub.f32 %v2566, %v2574
    %v2577 = vsub.f32 %v2567, %v2575
    %v2578 = vmul.f32 %v2576, %v2576
    %v2579 = vmul.f32 %v2577, %v2577
    %v2580 = vsel %vm38, %v2578, 0.0
    %2581 = vadd.xlane.f32.xlu0 %v2580
    %v2582 = vpop.xlane.xlu0 %2581
    %v2583 = vsel %vm38, %v2579, 0.0
    %2584 = vadd.xlane.f32.xlu0 %v2583
    %v2585 = vpop.xlane.xlu0 %2584
    %v2586 = vmul.f32 %v2582, %v1060
    %v2587 = vmul.f32 %v2585, %v1060
    %v2588 = vadd.f32 %v2586, 1e-12
    %v2589 = vadd.f32 %v2587, 1e-12
    %v2590 = vrsqrt.pop %v2588
    %v2591 = vrsqrt.pop %v2589
    %v2592 = vmul.f32 %v2576, %v2590
    %v2593 = vmul.f32 %v2577, %v2591
    %v2594 = vlaneseq
    %v2595 = vshrl.u32 %v2594, 7
    %v2596 = vsub.s32 5, %v2595
    %v2597 = vrot.slane %v1340, %v2596
    %v2598 = vmul.f32 %v2592, %v2597
    %v2599 = vmul.f32 %v2593, %v2597
    %v2600 = vlaneseq
    %v2601 = vshrl.u32 %v2600, 7
    %v2602 = vsub.s32 6, %v2601
    %v2603 = vrot.slane %v1340, %v2602
    %v2604 = vadd.f32 %v2598, %v2603
    %v2605 = vadd.f32 %v2599, %v2603
    %s2606 = scalar_lea.vmem %s3, 64
    %v2607 = vld [vmem:[%s2606] sm:$0xff]
    %v2608 = vld [vmem:[%s2606 + $0x8] sm:$0xff]
    %v2609 = vld [vmem:[%s2606 + $0x10] sm:$0xff]
    %v2610 = vld [vmem:[%s2606 + $0x18] sm:$0xff]
    %s2611 = scalar_lea.vmem %s4, 16
    %v2612 = vld [vmem:[%s2611] sm:$0xff]
    %v2613 = vlaneseq
    %v2614 = vshrl.u32 %v2613, 7
    %v2615 = vsub.s32 0, %v2614
    %v2616 = vrot.slane %v2612, %v2615
    %v2618 = vsel %vm38, %v2604, 0
    %v2621 = vsel %vm38, %v2605, 0
    %2623 = vmatprep.subr.mxu0 0.0
    %2624 = vmatpush1.msra.mxu0 0.0
    %2625 = vmatprep.subr.mxu0 0.0
    %2626 = vmatpush1.msra.mxu0 0.0
    %2627 = vmatprep.subr.mxu0 0.0
    %2628 = vmatpush1.msra.mxu0 0.0
    %2629 = vmatprep.subr.mxu0 0.0
    %2630 = vmatpush1.msra.mxu0 0.0
    %2631 = vmatprep.subr.mxu0 0.0
    %2632 = vmatpush1.msra.mxu0 0.0
    %2633 = vmatprep.subr.mxu0 0.0
    %2634 = vmatpush1.msra.mxu0 0.0
    %2635 = vmatprep.subr.mxu0 0.0
    %2636 = vmatpush1.msra.mxu0 0.0
    %2637 = vmatprep.subr.mxu0 0.0
    %2638 = vmatpush1.msra.mxu0 0.0
    %2639 = vmatprep.subr.mxu0 0.0
    %2640 = vmatpush1.msra.mxu0 0.0
    %2641 = vmatprep.subr.mxu0 0.0
    %2642 = vmatpush1.msra.mxu0 0.0
    %2643 = vmatprep.subr.mxu0 0.0
    %2644 = vmatpush1.msra.mxu0 0.0
    %2645 = vmatprep.subr.mxu0 0.0
    %2646 = vmatpush1.msra.mxu0 0.0
    %2647 = vmatprep.subr.mxu0 0.0
    %2648 = vmatpush1.msra.mxu0 %v2610
    %2649 = vmatprep.subr.mxu0 0.0
    %2650 = vmatpush1.msra.mxu0 %v2609
    %2651 = vmatprep.subr.mxu0 0.0
    %2652 = vmatpush1.msra.mxu0 %v2608
    %2653 = vmatprep.subr.mxu0 0.0
    %2654 = vmatpush1.msra.mxu0 %v2607
    %2655 = vmatprep.subr.mxu0 0.0
    %2656 = vmatpush2.msra.mxu0 0.0
    %2657 = vmatprep.subr.mxu0 0.0
    %2658 = vmatpush2.msra.mxu0 0.0
    %2659 = vmatprep.subr.mxu0 0.0
    %2660 = vmatpush2.msra.mxu0 0.0
    %2661 = vmatprep.subr.mxu0 0.0
    %2662 = vmatpush2.msra.mxu0 0.0
    %2663 = vmatprep.subr.mxu0 0.0
    %2664 = vmatpush2.msra.mxu0 0.0
    %2665 = vmatprep.subr.mxu0 0.0
    %2666 = vmatpush2.msra.mxu0 0.0
    %2667 = vmatprep.subr.mxu0 0.0
    %2668 = vmatpush2.msra.mxu0 0.0
    %2669 = vmatprep.subr.mxu0 0.0
    %2670 = vmatpush2.msra.mxu0 0.0
    %2671 = vmatprep.subr.mxu0 0.0
    %2672 = vmatpush2.msra.mxu0 0.0
    %2673 = vmatprep.subr.mxu0 0.0
    %2674 = vmatpush2.msra.mxu0 0.0
    %2675 = vmatprep.subr.mxu0 0.0
    %2676 = vmatpush2.msra.mxu0 0.0
    %2677 = vmatprep.subr.mxu0 0.0
    %2678 = vmatpush2.msra.mxu0 0.0
    %2679 = vmatprep.subr.mxu0 0.0
    %2680 = vmatpush2.msra.mxu0 0.0
    %2681 = vmatprep.subr.mxu0 0.0
    %2682 = vmatpush2.msra.mxu0 0.0
    %2683 = vmatprep.subr.mxu0 0.0
    %2684 = vmatpush2.msra.mxu0 0.0
    %2685 = vmatprep.subr.mxu0 0.0
    %2686 = vmatpush2.msra.mxu0 0.0
    %2687 = vmatprep.mubr.f32.mxu0 0.0
    %2688 = vmatmul.mubr.f32.gmra.mxu0 %v2618
    %v2689 = vpop.f32.mrf.mxu0
    %v2690 = vadd.f32 %v2616, %v2689
    %v2691 = vpop.f32.mrf.mxu0
    %2692 = vmatprep.mubr.f32.mxu0 0.0
    %2693 = vmatmul.mubr.f32.gmra.mxu0 %v2621
    %v2694 = vpop.f32.mrf.mxu0
    %v2695 = vadd.f32 %v2616, %v2694
    %v2696 = vpop.f32.mrf.mxu0
    %2697 = vdwg.mxu0
    %2698 = vst [vmem:[#allocation2] sm:$0xff] %v2690
    %2699 = vst [vmem:[#allocation2 + $0x8] sm:$0xff] %v2695
    // Predicated region
    $region26: #{tpu_custom_call.1} parent=1 // pred_check
      _
    $region27: #{tpu_custom_call.1} parent=1 // pred_check_branch
      %2701 = sbr.rel (0) target = $region29
    $region28: #{tpu_custom_call.1} parent=1 // pred_region
      %s2703 = ssub.s32 256, 256
      %2704 = vsyncadd [#allocation3], %s2703
      %s2705 = sshll.u32 [#allocation2], 4
      %s2706 = int_to_ptr.vmem [resolvable:$true] %s2705
      %2711 = dma.vmem_to_hbm [thread:$0]  %s2706, 256, %s6, [#allocation3], 128, 128, 8
    $region29: #{tpu_custom_call.1} parent=1 // pred_fallthru
      _
    // Predicated region
    $region30: #{tpu_custom_call.1} parent=1 // pred_check
      _
    $region31: #{tpu_custom_call.1} parent=1 // pred_check_branch
      %2713 = sbr.rel (0) target = $region33
    $region32: #{tpu_custom_call.1} parent=1 // pred_region
      %2714 = dma.done [#allocation3], 256
    $region33: #{tpu_custom_call.1} parent=1 // pred_fallthru
      _
    %2715 = vsyncpa [#allocation3], 1

</llo_original>
